<compile_context>
chip_gen: v5e
topology: v5e:2x2
jax: 0.10.0
libtpu: 0.0.40
codegen_flags: <defaults>
</compile_context>

<pallas_src>
import functools

import jax
import jax.numpy as jnp
from jax import lax
from jax.experimental import pallas as pl
from jax.experimental.pallas import tpu as pltpu


# ----------------------------------------------------------------------------
# Kernel body
# ----------------------------------------------------------------------------
def _gen_block_body(x_ref, w1f_ref, b1_ref, w2_ref, b2_ref, o_ref,
                    wrgb_ref=None, brgb_ref=None, rgb_ref=None,
                    *, tl, w_out, w_pad):
    """One (batch, row-slab) grid step of the fully fused Gen_Block.

    x_ref   : (1, h+2, w_pad, cin) bf16  low-res input, W already 2x-upsampled,
                                         1 zero halo row top/bottom, zero cols >= w_out
    w1f_ref : (12, cin, cout) bf16       conv1 weights with the nearest-2x H-upsample
                                         folded in; index = (phase*2 + h_tap)*3 + dx
    b1_ref  : (1, cout) f32
    w2_ref  : (9, cout, cout) bf16       conv2 3x3 weights; index = dy*3 + dx
    b2_ref  : (1, cout) f32
    o_ref   : (1, 2*tl, w_out, cout)     feature output slab (NHWC)
    wrgb_ref/brgb_ref/rgb_ref            optional fused toRGB (1x1 conv)
    """
    s = pl.program_id(1)
    n_s = pl.num_programs(1)
    th = 2 * tl
    cin = x_ref.shape[-1]
    cout = o_ref.shape[-1]

    # low-res rows [s*tl - 1, s*tl + tl]  ==  padded rows [s*tl, s*tl + tl + 2)
    row0 = pl.multiple_of(s * tl, tl)
    xs = x_ref[0, pl.ds(row0, tl + 2), :, :]            # (tl+2, w_pad, cin) bf16

    def act_norm(a):                                    # LeakyReLU(0.2) + PixelNorm, f32
        a = jnp.where(a > 0, a, 0.2 * a)
        return a * lax.rsqrt(jnp.mean(a * a, axis=-1, keepdims=True) + 1e-8)

    # ---- conv1 on the (virtually) 2x-upsampled input -------------------------
    # Even / odd high-res output rows are produced per phase with the H-upsample
    # folded into 2 H-taps.  The 3 W-taps are realigned by rolling the per-tap
    # matmul result along the flattened (rows*w_pad) axis -- exact because every
    # padding column of the input is zero -- so no shifted slice copies are made.
    m1 = (tl + 1) * w_pad
    b1 = jnp.broadcast_to(b1_ref[...], (m1, cout)).astype(jnp.float32)
    phase = []
    for ph in range(2):
        acc = b1                                        # bias as accumulator init
        for hh in range(2):
            slab = xs[hh:hh + tl + 1].reshape(m1, cin)  # leading-dim collapse (free)
            for dx in range(3):
                y = jnp.dot(slab, w1f_ref[(ph * 2 + hh) * 3 + dx],
                            preferred_element_type=jnp.float32)
                if dx != 1:
                    y = pltpu.roll(y, shift=(1 - dx) % m1, axis=0)
                acc = acc + y
        phase.append(act_norm(acc).reshape(tl + 1, w_pad, cout))

    # Interleave phases -> intermediate high-res rows [Y0-1, Y0+th]  (th+2 rows).
    inter = jnp.stack([phase[1], phase[0]], axis=1).reshape(th + 2, w_pad, cout)

    # Zero conv2's padding region: halo rows that fall outside the image, and all
    # columns >= w_out (this also keeps the roll wrap-around trick exact for conv2).
    row_id = lax.broadcasted_iota(jnp.int32, (th + 2, w_pad, 1), 0)
    col_id = lax.broadcasted_iota(jnp.int32, (th + 2, w_pad, 1), 1)
    lo = jnp.where(s == 0, 1, 0)
    hi = jnp.where(s == n_s - 1, th, th + 1)
    inter = jnp.where((row_id >= lo) & (row_id <= hi) & (col_id < w_out),
                      inter, 0.0).astype(jnp.bfloat16)

    # ---- conv2 ----------------------------------------------------------------
    m2 = th * w_pad
    acc2 = jnp.broadcast_to(b2_ref[...], (m2, cout)).astype(jnp.float32)
    for dy in range(3):
        slab = inter[dy:dy + th].reshape(m2, cout)
        for dx in range(3):
            y = jnp.dot(slab, w2_ref[dy * 3 + dx],
                        preferred_element_type=jnp.float32)
            if dx != 1:
                y = pltpu.roll(y, shift=(1 - dx) % m2, axis=0)
            acc2 = acc2 + y
    act2 = act_norm(acc2)                               # (m2, cout) f32

    o_ref[0] = act2.reshape(th, w_pad, cout)[:, :w_out, :].astype(o_ref.dtype)

    # ---- fused toRGB (1x1 conv) -- avoids re-reading the feature map from HBM --
    if rgb_ref is not None:
        rgb = jnp.dot(act2.astype(jnp.bfloat16), wrgb_ref[...],
                      preferred_element_type=jnp.float32)
        rgb = rgb + brgb_ref[...].astype(jnp.float32)
        rgb_ref[0] = rgb.reshape(th, w_pad, -1)[:, :w_out, :].astype(rgb_ref.dtype)


def _make_kernel(tl, w_out, w_pad, with_rgb):
    if with_rgb:
        def kernel(x_ref, w1f_ref, b1_ref, w2_ref, b2_ref, wrgb_ref, brgb_ref,
                   o_ref, rgb_ref):
            _gen_block_body(x_ref, w1f_ref, b1_ref, w2_ref, b2_ref, o_ref,
                            wrgb_ref=wrgb_ref, brgb_ref=brgb_ref, rgb_ref=rgb_ref,
                            tl=tl, w_out=w_out, w_pad=w_pad)
    else:
        def kernel(x_ref, w1f_ref, b1_ref, w2_ref, b2_ref, o_ref):
            _gen_block_body(x_ref, w1f_ref, b1_ref, w2_ref, b2_ref, o_ref,
                            tl=tl, w_out=w_out, w_pad=w_pad)
    return kernel


# ----------------------------------------------------------------------------
# Wrapper
# ----------------------------------------------------------------------------
def _round_up(x, m):
    return (x + m - 1) // m * m


def _pick_row_block(h, w_pad, cin, cout, row_block):
    if row_block is None:
        # Keep the per-slab f32 working set (intermediate + accumulators + output
        # slab) around ~2 MiB: safe on every chip incl. v7x's 64 MiB VMEM.
        per_row = 2 * w_pad * max(cin, cout) * 4 * 3
        row_block = max(1, (2 * 1024 * 1024) // per_row)
    row_block = max(1, min(h, int(row_block)))
    while h % row_block:            # must divide the low-res height
        row_block -= 1
    return row_block


def gen_block_forward_nhwc(params, x, *, last=False, growing=False, row_block=None):
    """Fused Gen_Block forward in NHWC.  x: (N, h, w, cin) -> (N, 2h, 2w, cout)."""
    n, h, w, cin = x.shape
    cout = params["w1"].shape[-1]
    out_dim = params["w_rgb"].shape[-1]
    w_out = 2 * w
    # Pad the width (sublane axis) to a multiple of 16 so all in-kernel row<->flat
    # reshapes stay tile aligned for bf16, with >= 1 zero column for the roll trick.
    w_pad = _round_up(w_out + 1, 16)
    tl = _pick_row_block(h, w_pad, cin, cout, row_block)
    th = 2 * tl
    n_s = h // tl

    # Cheap XLA pre-pass on the *low-res* tensor only: nearest-2x along W, one zero
    # halo row top/bottom (feeds the folded H-upsample at the image border), zero
    # columns on the right, cast to bf16.  The 4x-upsampled tensor, the conv1->conv2
    # intermediate and the toRGB input never touch HBM.
    xp = jnp.repeat(x, 2, axis=2)
    xp = jnp.pad(xp, ((0, 0), (1, 1), (0, w_pad - w_out), (0, 0)))
    xp = xp.astype(jnp.bfloat16)

    # Fold the nearest-2x H-upsample into conv1's weights (per output-row phase):
    #   even rows (phase 0): W[0] on low row a-1,  W[1]+W[2] on low row a
    #   odd  rows (phase 1): W[0]+W[1] on low row a,  W[2] on low row a+1
    w1 = params["w1"].astype(jnp.float32)
    w1f = jnp.stack([w1[0], w1[1] + w1[2],
                     w1[0] + w1[1], w1[2]],
                    axis=0).reshape(12, cin, cout).astype(jnp.bfloat16)
    w2 = params["w2"].reshape(9, cout, cout).astype(jnp.bfloat16)
    b1 = params["b1"].reshape(1, cout).astype(jnp.float32)
    b2 = params["b2"].reshape(1, cout).astype(jnp.float32)

    with_rgb = bool(last)
    inputs = [xp, w1f, b1, w2, b2]
    in_specs = [
        pl.BlockSpec((1, h + 2, w_pad, cin), lambda i, j: (i, 0, 0, 0)),
        pl.BlockSpec((12, cin, cout), lambda i, j: (0, 0, 0)),
        pl.BlockSpec((1, cout), lambda i, j: (0, 0)),
        pl.BlockSpec((9, cout, cout), lambda i, j: (0, 0, 0)),
        pl.BlockSpec((1, cout), lambda i, j: (0, 0)),
    ]
    out_shape = [jax.ShapeDtypeStruct((n, 2 * h, w_out, cout), jnp.float32)]
    out_specs = [pl.BlockSpec((1, th, w_out, cout), lambda i, j: (i, j, 0, 0))]
    if with_rgb:
        inputs += [params["w_rgb"].astype(jnp.bfloat16),
                   params["b_rgb"].reshape(1, out_dim).astype(jnp.float32)]
        in_specs += [pl.BlockSpec((cout, out_dim), lambda i, j: (0, 0)),
                     pl.BlockSpec((1, out_dim), lambda i, j: (0, 0))]
        out_shape += [jax.ShapeDtypeStruct((n, 2 * h, w_out, out_dim), jnp.float32)]
        out_specs += [pl.BlockSpec((1, th, w_out, out_dim), lambda i, j: (i, j, 0, 0))]

    res = pl.pallas_call(
        _make_kernel(tl, w_out, w_pad, with_rgb),
        out_shape=out_shape,
        grid_spec=pltpu.PrefetchScalarGridSpec(
            num_scalar_prefetch=0,
            grid=(n, n_s),                       # batch x row-slabs
            in_specs=in_specs,
            out_specs=out_specs),
        compiler_params=pltpu.CompilerParams(
            dimension_semantics=("parallel", "parallel"),  # both axes megacore-shardable
            vmem_limit_bytes=48 * 1024 * 1024),
    )(*inputs)

    feat = res[0]
    if not last:
        return feat
    rgb = res[1]
    if growing:
        return feat, rgb
    return rgb


@functools.partial(jax.jit, static_argnames=("last", "growing", "row_block"))
def gen_block_forward(params, x_nchw, last=False, growing=False, row_block=None):
    """NCHW (PyTorch) boundary wrapper.  Chain blocks via gen_block_forward_nhwc
    to avoid the boundary transposes entirely."""
    x = jnp.transpose(x_nchw, (0, 2, 3, 1))              # NCHW -> NHWC
    res = gen_block_forward_nhwc(params, x, last=last, growing=growing,
                                 row_block=row_block)
    to_nchw = lambda t: jnp.transpose(t, (0, 3, 1, 2))
    if last and growing:
        return to_nchw(res[0]), to_nchw(res[1])
    return to_nchw(res)


# ----------------------------------------------------------------------------
# Params
# ----------------------------------------------------------------------------
def init_gen_block_params(key, fmaps_in, fmaps_out, out_dim=3):
    k1, k2, k3 = jax.random.split(key, 3)
    return {
        # HWIO layout
        "w1": 0.1 * jax.random.normal(k1, (3, 3, fmaps_in, fmaps_out), jnp.float32),
        "b1": jnp.zeros((fmaps_out,), jnp.float32),
        "w2": 0.1 * jax.random.normal(k2, (3, 3, fmaps_out, fmaps_out), jnp.float32),
        "b2": jnp.zeros((fmaps_out,), jnp.float32),
        "w_rgb": 0.1 * jax.random.normal(k3, (fmaps_out, out_dim), jnp.float32),
        "b_rgb": jnp.zeros((out_dim,), jnp.float32),
    }


# ----------------------------------------------------------------------------
# Pure-JAX reference (f32) for correctness check
# ----------------------------------------------------------------------------
def _ref_fused(x_nhwc, w, b):
    y = lax.conv_general_dilated(
        x_nhwc, w, window_strides=(1, 1), padding="SAME",
        dimension_numbers=("NHWC", "HWIO", "NHWC"))
    y = y + b[None, None, None, :]
    y = jnp.where(y > 0, y, 0.2 * y)
    return y * lax.rsqrt(jnp.mean(y * y, axis=-1, keepdims=True) + 1e-8)


def _ref_forward(params, x_nchw):
    x = jnp.transpose(x_nchw, (0, 2, 3, 1))
    x = jnp.repeat(jnp.repeat(x, 2, axis=1), 2, axis=2)
    x = _ref_fused(x, params["w1"], params["b1"])
    x = _ref_fused(x, params["w2"], params["b2"])
    rgb = jnp.einsum("nhwc,co->nhwo", x, params["w_rgb"]) + params["b_rgb"]
    return jnp.transpose(x, (0, 3, 1, 2)), jnp.transpose(rgb, (0, 3, 1, 2))


if __name__ == "__main__":
    key = jax.random.PRNGKey(0)
    k_param, k_x = jax.random.split(key)

    batch, fmaps_in, fmaps_out, out_dim = 2, 8, 16, 3
    H = W = 8  # low-res input; the block outputs 16x16

    params = init_gen_block_params(k_param, fmaps_in, fmaps_out, out_dim)
    x = jax.random.normal(k_x, (batch, fmaps_in, H, W), jnp.float32)

    # last=True, growing=True exercises both fused convs + fused toRGB.
    # row_block=4 forces 2 row slabs per image so the halo path is exercised.
    x_feat, x_rgb = gen_block_forward(params, x, last=True, growing=True, row_block=4)
    jax.block_until_ready((x_feat, x_rgb))
    assert x_feat.shape == (batch, fmaps_out, 2 * H, 2 * W)
    assert x_rgb.shape == (batch, out_dim, 2 * H, 2 * W)

    # last=False path (single output, default row block -> single slab).
    x_only = gen_block_forward(params, x, last=False)
    jax.block_until_ready(x_only)
    assert x_only.shape == (batch, fmaps_out, 2 * H, 2 * W)

    ref_feat, ref_rgb = _ref_forward(params, x)
    # Matmul inputs are bf16 (f32 accumulation) while the reference is pure f32,
    # so use a tolerance appropriate for bf16; post-PixelNorm values are O(1).
    tol = dict(atol=3e-2, rtol=3e-2)
    assert jnp.allclose(x_feat, ref_feat, **tol)
    assert jnp.allclose(x_rgb, ref_rgb, **tol)
    assert jnp.allclose(x_only, ref_feat, **tol)

    print("KERNEL_OK")
</pallas_src>

<mosaic_0001>
module attributes {stable_mosaic.version = 11 : i64} {
  func.func @kernel(%arg0: i32, %arg1: i32, %arg2: memref<1x10x32x8xbf16, #tpu.memory_space<vmem>>, %arg3: memref<12x8x16xbf16, #tpu.memory_space<vmem>>, %arg4: memref<1x16xf32, #tpu.memory_space<vmem>>, %arg5: memref<9x16x16xbf16, #tpu.memory_space<vmem>>, %arg6: memref<1x16xf32, #tpu.memory_space<vmem>>, %arg7: memref<16x3xbf16, #tpu.memory_space<vmem>>, %arg8: memref<1x3xf32, #tpu.memory_space<vmem>>, %arg9: memref<1x8x16x16xf32, #tpu.memory_space<vmem>>, %arg10: memref<1x8x16x3xf32, #tpu.memory_space<vmem>>) attributes {dimension_semantics = [#tpu.dimension_semantics<parallel>, #tpu.dimension_semantics<parallel>], iteration_bounds = array<i64: 2, 2>, scalar_prefetch = 0 : i64, scratch_operands = 0 : i64, tpu.core_type = #tpu.core_type<tc>, window_params = [{transform_indices = @transform_0, window_bounds = array<i64: 1, 10, 32, 8>}, {pipeline_mode = #tpu.pipeline_mode<synchronous>, transform_indices = @transform_1, window_bounds = array<i64: 12, 8, 16>}, {pipeline_mode = #tpu.pipeline_mode<synchronous>, transform_indices = @transform_2, window_bounds = array<i64: 1, 16>}, {pipeline_mode = #tpu.pipeline_mode<synchronous>, transform_indices = @transform_3, window_bounds = array<i64: 9, 16, 16>}, {pipeline_mode = #tpu.pipeline_mode<synchronous>, transform_indices = @transform_4, window_bounds = array<i64: 1, 16>}, {pipeline_mode = #tpu.pipeline_mode<synchronous>, transform_indices = @transform_5, window_bounds = array<i64: 16, 3>}, {pipeline_mode = #tpu.pipeline_mode<synchronous>, transform_indices = @transform_6, window_bounds = array<i64: 1, 3>}, {transform_indices = @transform_7, window_bounds = array<i64: 1, 8, 16, 16>}, {transform_indices = @transform_8, window_bounds = array<i64: 1, 8, 16, 3>}]} {
    %c4_i32 = arith.constant 4 : i32
    %0 = arith.muli %arg1, %c4_i32 : i32
    %1 = tpu.assume_multiple %0, 4 : i32
    %c0 = arith.constant 0 : index
    %2 = arith.index_cast %1 : i32 to index
    %c0_0 = arith.constant 0 : index
    %c0_1 = arith.constant 0 : index
    %3 = vector.load %arg2[%c0, %2, %c0_0, %c0_1] : memref<1x10x32x8xbf16, #tpu.memory_space<vmem>>, vector<1x6x32x8xbf16>
    %4 = vector.shape_cast %3 : vector<1x6x32x8xbf16> to vector<6x32x8xbf16>
    %c0_2 = arith.constant 0 : index
    %c0_3 = arith.constant 0 : index
    %5 = vector.load %arg4[%c0_2, %c0_3] : memref<1x16xf32, #tpu.memory_space<vmem>>, vector<1x16xf32>
    %6 = vector.shape_cast %5 : vector<1x16xf32> to vector<1x16xf32>
    %7 = vector.broadcast %6 : vector<1x16xf32> to vector<160x16xf32>
    %8 = vector.extract_strided_slice %4 {offsets = [0, 0, 0], sizes = [5, 32, 8], strides = [1, 1, 1]} : vector<6x32x8xbf16> to vector<5x32x8xbf16>
    %9 = vector.shape_cast %8 : vector<5x32x8xbf16> to vector<160x8xbf16>
    %c0_4 = arith.constant 0 : index
    %c0_5 = arith.constant 0 : index
    %c0_6 = arith.constant 0 : index
    %10 = vector.load %arg3[%c0_4, %c0_5, %c0_6] : memref<12x8x16xbf16, #tpu.memory_space<vmem>>, vector<1x8x16xbf16>
    %11 = vector.shape_cast %10 : vector<1x8x16xbf16> to vector<8x16xbf16>
    %cst = arith.constant dense<0.000000e+00> : vector<160x16xf32>
    %12 = tpu.matmul %9, %11, %cst {dimension_numbers = #tpu.dot_dimension_numbers<[1], [0], [0], [1], [0, 0, 1, 1], [], []>} : vector<160x8xbf16>, vector<8x16xbf16>, vector<160x16xf32> -> vector<160x16xf32>
    %c1_i32 = arith.constant 1 : i32
    %13 = tpu.dynamic_rotate %12 by %c1_i32 dim 0 : vector<160x16xf32>, i32 -> vector<160x16xf32>
    %14 = arith.addf %7, %13 : vector<160x16xf32>
    %c1 = arith.constant 1 : index
    %c0_7 = arith.constant 0 : index
    %c0_8 = arith.constant 0 : index
    %15 = vector.load %arg3[%c1, %c0_7, %c0_8] : memref<12x8x16xbf16, #tpu.memory_space<vmem>>, vector<1x8x16xbf16>
    %16 = vector.shape_cast %15 : vector<1x8x16xbf16> to vector<8x16xbf16>
    %cst_9 = arith.constant dense<0.000000e+00> : vector<160x16xf32>
    %17 = tpu.matmul %9, %16, %cst_9 {dimension_numbers = #tpu.dot_dimension_numbers<[1], [0], [0], [1], [0, 0, 1, 1], [], []>} : vector<160x8xbf16>, vector<8x16xbf16>, vector<160x16xf32> -> vector<160x16xf32>
    %18 = arith.addf %14, %17 : vector<160x16xf32>
    %c2 = arith.constant 2 : index
    %c0_10 = arith.constant 0 : index
    %c0_11 = arith.constant 0 : index
    %19 = vector.load %arg3[%c2, %c0_10, %c0_11] : memref<12x8x16xbf16, #tpu.memory_space<vmem>>, vector<1x8x16xbf16>
    %20 = vector.shape_cast %19 : vector<1x8x16xbf16> to vector<8x16xbf16>
    %cst_12 = arith.constant dense<0.000000e+00> : vector<160x16xf32>
    %21 = tpu.matmul %9, %20, %cst_12 {dimension_numbers = #tpu.dot_dimension_numbers<[1], [0], [0], [1], [0, 0, 1, 1], [], []>} : vector<160x8xbf16>, vector<8x16xbf16>, vector<160x16xf32> -> vector<160x16xf32>
    %c159_i32 = arith.constant 159 : i32
    %22 = tpu.dynamic_rotate %21 by %c159_i32 dim 0 : vector<160x16xf32>, i32 -> vector<160x16xf32>
    %23 = arith.addf %18, %22 : vector<160x16xf32>
    %24 = vector.extract_strided_slice %4 {offsets = [1, 0, 0], sizes = [5, 32, 8], strides = [1, 1, 1]} : vector<6x32x8xbf16> to vector<5x32x8xbf16>
    %25 = vector.shape_cast %24 : vector<5x32x8xbf16> to vector<160x8xbf16>
    %c3 = arith.constant 3 : index
    %c0_13 = arith.constant 0 : index
    %c0_14 = arith.constant 0 : index
    %26 = vector.load %arg3[%c3, %c0_13, %c0_14] : memref<12x8x16xbf16, #tpu.memory_space<vmem>>, vector<1x8x16xbf16>
    %27 = vector.shape_cast %26 : vector<1x8x16xbf16> to vector<8x16xbf16>
    %cst_15 = arith.constant dense<0.000000e+00> : vector<160x16xf32>
    %28 = tpu.matmul %25, %27, %cst_15 {dimension_numbers = #tpu.dot_dimension_numbers<[1], [0], [0], [1], [0, 0, 1, 1], [], []>} : vector<160x8xbf16>, vector<8x16xbf16>, vector<160x16xf32> -> vector<160x16xf32>
    %c1_i32_16 = arith.constant 1 : i32
    %29 = tpu.dynamic_rotate %28 by %c1_i32_16 dim 0 : vector<160x16xf32>, i32 -> vector<160x16xf32>
    %30 = arith.addf %23, %29 : vector<160x16xf32>
    %c4 = arith.constant 4 : index
    %c0_17 = arith.constant 0 : index
    %c0_18 = arith.constant 0 : index
    %31 = vector.load %arg3[%c4, %c0_17, %c0_18] : memref<12x8x16xbf16, #tpu.memory_space<vmem>>, vector<1x8x16xbf16>
    %32 = vector.shape_cast %31 : vector<1x8x16xbf16> to vector<8x16xbf16>
    %cst_19 = arith.constant dense<0.000000e+00> : vector<160x16xf32>
    %33 = tpu.matmul %25, %32, %cst_19 {dimension_numbers = #tpu.dot_dimension_numbers<[1], [0], [0], [1], [0, 0, 1, 1], [], []>} : vector<160x8xbf16>, vector<8x16xbf16>, vector<160x16xf32> -> vector<160x16xf32>
    %34 = arith.addf %30, %33 : vector<160x16xf32>
    %c5 = arith.constant 5 : index
    %c0_20 = arith.constant 0 : index
    %c0_21 = arith.constant 0 : index
    %35 = vector.load %arg3[%c5, %c0_20, %c0_21] : memref<12x8x16xbf16, #tpu.memory_space<vmem>>, vector<1x8x16xbf16>
    %36 = vector.shape_cast %35 : vector<1x8x16xbf16> to vector<8x16xbf16>
    %cst_22 = arith.constant dense<0.000000e+00> : vector<160x16xf32>
    %37 = tpu.matmul %25, %36, %cst_22 {dimension_numbers = #tpu.dot_dimension_numbers<[1], [0], [0], [1], [0, 0, 1, 1], [], []>} : vector<160x8xbf16>, vector<8x16xbf16>, vector<160x16xf32> -> vector<160x16xf32>
    %c159_i32_23 = arith.constant 159 : i32
    %38 = tpu.dynamic_rotate %37 by %c159_i32_23 dim 0 : vector<160x16xf32>, i32 -> vector<160x16xf32>
    %39 = arith.addf %34, %38 : vector<160x16xf32>
    %cst_24 = arith.constant 0.000000e+00 : f32
    %40 = vector.broadcast %cst_24 : f32 to vector<160x16xf32>
    %41 = arith.cmpf ogt, %39, %40 : vector<160x16xf32>
    %cst_25 = arith.constant 2.000000e-01 : f32
    %42 = vector.broadcast %cst_25 : f32 to vector<160x16xf32>
    %43 = arith.mulf %42, %39 : vector<160x16xf32>
    %44 = arith.select %41, %39, %43 : vector<160x16xi1>, vector<160x16xf32>
    %45 = arith.mulf %44, %44 : vector<160x16xf32>
    %cst_26 = arith.constant dense<0.000000e+00> : vector<160xf32>
    %46 = vector.multi_reduction <add>, %45, %cst_26 [1] : vector<160x16xf32> to vector<160xf32>
    %47 = vector.shape_cast %46 : vector<160xf32> to vector<160x1xf32>
    %cst_27 = arith.constant 1.600000e+01 : f32
    %48 = vector.broadcast %cst_27 : f32 to vector<160x1xf32>
    %49 = arith.divf %47, %48 : vector<160x1xf32>
    %cst_28 = arith.constant 9.99999993E-9 : f32
    %50 = vector.broadcast %cst_28 : f32 to vector<160x1xf32>
    %51 = arith.addf %49, %50 : vector<160x1xf32>
    %52 = math.rsqrt %51 : vector<160x1xf32>
    %53 = vector.broadcast %52 : vector<160x1xf32> to vector<160x16xf32>
    %54 = arith.mulf %44, %53 : vector<160x16xf32>
    %55 = vector.shape_cast %54 : vector<160x16xf32> to vector<5x32x16xf32>
    %56 = vector.extract_strided_slice %4 {offsets = [0, 0, 0], sizes = [5, 32, 8], strides = [1, 1, 1]} : vector<6x32x8xbf16> to vector<5x32x8xbf16>
    %57 = vector.shape_cast %56 : vector<5x32x8xbf16> to vector<160x8xbf16>
    %c6 = arith.constant 6 : index
    %c0_29 = arith.constant 0 : index
    %c0_30 = arith.constant 0 : index
    %58 = vector.load %arg3[%c6, %c0_29, %c0_30] : memref<12x8x16xbf16, #tpu.memory_space<vmem>>, vector<1x8x16xbf16>
    %59 = vector.shape_cast %58 : vector<1x8x16xbf16> to vector<8x16xbf16>
    %cst_31 = arith.constant dense<0.000000e+00> : vector<160x16xf32>
    %60 = tpu.matmul %57, %59, %cst_31 {dimension_numbers = #tpu.dot_dimension_numbers<[1], [0], [0], [1], [0, 0, 1, 1], [], []>} : vector<160x8xbf16>, vector<8x16xbf16>, vector<160x16xf32> -> vector<160x16xf32>
    %c1_i32_32 = arith.constant 1 : i32
    %61 = tpu.dynamic_rotate %60 by %c1_i32_32 dim 0 : vector<160x16xf32>, i32 -> vector<160x16xf32>
    %62 = arith.addf %7, %61 : vector<160x16xf32>
    %c7 = arith.constant 7 : index
    %c0_33 = arith.constant 0 : index
    %c0_34 = arith.constant 0 : index
    %63 = vector.load %arg3[%c7, %c0_33, %c0_34] : memref<12x8x16xbf16, #tpu.memory_space<vmem>>, vector<1x8x16xbf16>
    %64 = vector.shape_cast %63 : vector<1x8x16xbf16> to vector<8x16xbf16>
    %cst_35 = arith.constant dense<0.000000e+00> : vector<160x16xf32>
    %65 = tpu.matmul %57, %64, %cst_35 {dimension_numbers = #tpu.dot_dimension_numbers<[1], [0], [0], [1], [0, 0, 1, 1], [], []>} : vector<160x8xbf16>, vector<8x16xbf16>, vector<160x16xf32> -> vector<160x16xf32>
    %66 = arith.addf %62, %65 : vector<160x16xf32>
    %c8 = arith.constant 8 : index
    %c0_36 = arith.constant 0 : index
    %c0_37 = arith.constant 0 : index
    %67 = vector.load %arg3[%c8, %c0_36, %c0_37] : memref<12x8x16xbf16, #tpu.memory_space<vmem>>, vector<1x8x16xbf16>
    %68 = vector.shape_cast %67 : vector<1x8x16xbf16> to vector<8x16xbf16>
    %cst_38 = arith.constant dense<0.000000e+00> : vector<160x16xf32>
    %69 = tpu.matmul %57, %68, %cst_38 {dimension_numbers = #tpu.dot_dimension_numbers<[1], [0], [0], [1], [0, 0, 1, 1], [], []>} : vector<160x8xbf16>, vector<8x16xbf16>, vector<160x16xf32> -> vector<160x16xf32>
    %c159_i32_39 = arith.constant 159 : i32
    %70 = tpu.dynamic_rotate %69 by %c159_i32_39 dim 0 : vector<160x16xf32>, i32 -> vector<160x16xf32>
    %71 = arith.addf %66, %70 : vector<160x16xf32>
    %72 = vector.extract_strided_slice %4 {offsets = [1, 0, 0], sizes = [5, 32, 8], strides = [1, 1, 1]} : vector<6x32x8xbf16> to vector<5x32x8xbf16>
    %73 = vector.shape_cast %72 : vector<5x32x8xbf16> to vector<160x8xbf16>
    %c9 = arith.constant 9 : index
    %c0_40 = arith.constant 0 : index
    %c0_41 = arith.constant 0 : index
    %74 = vector.load %arg3[%c9, %c0_40, %c0_41] : memref<12x8x16xbf16, #tpu.memory_space<vmem>>, vector<1x8x16xbf16>
    %75 = vector.shape_cast %74 : vector<1x8x16xbf16> to vector<8x16xbf16>
    %cst_42 = arith.constant dense<0.000000e+00> : vector<160x16xf32>
    %76 = tpu.matmul %73, %75, %cst_42 {dimension_numbers = #tpu.dot_dimension_numbers<[1], [0], [0], [1], [0, 0, 1, 1], [], []>} : vector<160x8xbf16>, vector<8x16xbf16>, vector<160x16xf32> -> vector<160x16xf32>
    %c1_i32_43 = arith.constant 1 : i32
    %77 = tpu.dynamic_rotate %76 by %c1_i32_43 dim 0 : vector<160x16xf32>, i32 -> vector<160x16xf32>
    %78 = arith.addf %71, %77 : vector<160x16xf32>
    %c10 = arith.constant 10 : index
    %c0_44 = arith.constant 0 : index
    %c0_45 = arith.constant 0 : index
    %79 = vector.load %arg3[%c10, %c0_44, %c0_45] : memref<12x8x16xbf16, #tpu.memory_space<vmem>>, vector<1x8x16xbf16>
    %80 = vector.shape_cast %79 : vector<1x8x16xbf16> to vector<8x16xbf16>
    %cst_46 = arith.constant dense<0.000000e+00> : vector<160x16xf32>
    %81 = tpu.matmul %73, %80, %cst_46 {dimension_numbers = #tpu.dot_dimension_numbers<[1], [0], [0], [1], [0, 0, 1, 1], [], []>} : vector<160x8xbf16>, vector<8x16xbf16>, vector<160x16xf32> -> vector<160x16xf32>
    %82 = arith.addf %78, %81 : vector<160x16xf32>
    %c11 = arith.constant 11 : index
    %c0_47 = arith.constant 0 : index
    %c0_48 = arith.constant 0 : index
    %83 = vector.load %arg3[%c11, %c0_47, %c0_48] : memref<12x8x16xbf16, #tpu.memory_space<vmem>>, vector<1x8x16xbf16>
    %84 = vector.shape_cast %83 : vector<1x8x16xbf16> to vector<8x16xbf16>
    %cst_49 = arith.constant dense<0.000000e+00> : vector<160x16xf32>
    %85 = tpu.matmul %73, %84, %cst_49 {dimension_numbers = #tpu.dot_dimension_numbers<[1], [0], [0], [1], [0, 0, 1, 1], [], []>} : vector<160x8xbf16>, vector<8x16xbf16>, vector<160x16xf32> -> vector<160x16xf32>
    %c159_i32_50 = arith.constant 159 : i32
    %86 = tpu.dynamic_rotate %85 by %c159_i32_50 dim 0 : vector<160x16xf32>, i32 -> vector<160x16xf32>
    %87 = arith.addf %82, %86 : vector<160x16xf32>
    %cst_51 = arith.constant 0.000000e+00 : f32
    %88 = vector.broadcast %cst_51 : f32 to vector<160x16xf32>
    %89 = arith.cmpf ogt, %87, %88 : vector<160x16xf32>
    %cst_52 = arith.constant 2.000000e-01 : f32
    %90 = vector.broadcast %cst_52 : f32 to vector<160x16xf32>
    %91 = arith.mulf %90, %87 : vector<160x16xf32>
    %92 = arith.select %89, %87, %91 : vector<160x16xi1>, vector<160x16xf32>
    %93 = arith.mulf %92, %92 : vector<160x16xf32>
    %cst_53 = arith.constant dense<0.000000e+00> : vector<160xf32>
    %94 = vector.multi_reduction <add>, %93, %cst_53 [1] : vector<160x16xf32> to vector<160xf32>
    %95 = vector.shape_cast %94 : vector<160xf32> to vector<160x1xf32>
    %cst_54 = arith.constant 1.600000e+01 : f32
    %96 = vector.broadcast %cst_54 : f32 to vector<160x1xf32>
    %97 = arith.divf %95, %96 : vector<160x1xf32>
    %cst_55 = arith.constant 9.99999993E-9 : f32
    %98 = vector.broadcast %cst_55 : f32 to vector<160x1xf32>
    %99 = arith.addf %97, %98 : vector<160x1xf32>
    %100 = math.rsqrt %99 : vector<160x1xf32>
    %101 = vector.broadcast %100 : vector<160x1xf32> to vector<160x16xf32>
    %102 = arith.mulf %92, %101 : vector<160x16xf32>
    %103 = vector.shape_cast %102 : vector<160x16xf32> to vector<5x32x16xf32>
    %104 = vector.shape_cast %103 : vector<5x32x16xf32> to vector<5x1x32x16xf32>
    %105 = vector.shape_cast %55 : vector<5x32x16xf32> to vector<5x1x32x16xf32>
    %106 = tpu.concatenate %104, %105 in 1 : vector<5x1x32x16xf32>, vector<5x1x32x16xf32> -> vector<5x2x32x16xf32>
    %107 = vector.shape_cast %106 : vector<5x2x32x16xf32> to vector<10x32x16xf32>
    %108 = tpu.iota {dimensions = array<i32: 0>} : vector<10x32x1xi32>
    %109 = tpu.iota {dimensions = array<i32: 1>} : vector<10x32x1xi32>
    %c0_i32 = arith.constant 0 : i32
    %110 = arith.cmpi eq, %arg1, %c0_i32 : i32
    %c1_i32_56 = arith.constant 1 : i32
    %c0_i32_57 = arith.constant 0 : i32
    %111 = arith.select %110, %c1_i32_56, %c0_i32_57 : i32
    %c1_i32_58 = arith.constant 1 : i32
    %112 = arith.cmpi eq, %arg1, %c1_i32_58 : i32
    %c8_i32 = arith.constant 8 : i32
    %c9_i32 = arith.constant 9 : i32
    %113 = arith.select %112, %c8_i32, %c9_i32 : i32
    %114 = vector.broadcast %111 : i32 to vector<10x32x1xi32>
    %115 = arith.cmpi sge, %108, %114 : vector<10x32x1xi32>
    %116 = vector.broadcast %113 : i32 to vector<10x32x1xi32>
    %117 = arith.cmpi sle, %108, %116 : vector<10x32x1xi32>
    %118 = arith.andi %115, %117 : vector<10x32x1xi1>
    %c16_i32 = arith.constant 16 : i32
    %119 = vector.broadcast %c16_i32 : i32 to vector<10x32x1xi32>
    %120 = arith.cmpi slt, %109, %119 : vector<10x32x1xi32>
    %121 = arith.andi %118, %120 : vector<10x32x1xi1>
    %cst_59 = arith.constant 0.000000e+00 : f32
    %122 = vector.shape_cast %121 : vector<10x32x1xi1> to vector<10x32x1xi1>
    %123 = vector.broadcast %122 : vector<10x32x1xi1> to vector<10x32x16xi1>
    %124 = vector.broadcast %cst_59 : f32 to vector<10x32x16xf32>
    %125 = arith.select %123, %107, %124 : vector<10x32x16xi1>, vector<10x32x16xf32>
    %126 = arith.truncf %125 : vector<10x32x16xf32> to vector<10x32x16xbf16>
    %c0_60 = arith.constant 0 : index
    %c0_61 = arith.constant 0 : index
    %127 = vector.load %arg6[%c0_60, %c0_61] : memref<1x16xf32, #tpu.memory_space<vmem>>, vector<1x16xf32>
    %128 = vector.shape_cast %127 : vector<1x16xf32> to vector<1x16xf32>
    %129 = vector.broadcast %128 : vector<1x16xf32> to vector<256x16xf32>
    %130 = vector.extract_strided_slice %126 {offsets = [0, 0, 0], sizes = [8, 32, 16], strides = [1, 1, 1]} : vector<10x32x16xbf16> to vector<8x32x16xbf16>
    %131 = vector.shape_cast %130 : vector<8x32x16xbf16> to vector<256x16xbf16>
    %c0_62 = arith.constant 0 : index
    %c0_63 = arith.constant 0 : index
    %c0_64 = arith.constant 0 : index
    %132 = vector.load %arg5[%c0_62, %c0_63, %c0_64] : memref<9x16x16xbf16, #tpu.memory_space<vmem>>, vector<1x16x16xbf16>
    %133 = vector.shape_cast %132 : vector<1x16x16xbf16> to vector<16x16xbf16>
    %cst_65 = arith.constant dense<0.000000e+00> : vector<256x16xf32>
    %134 = tpu.matmul %131, %133, %cst_65 {dimension_numbers = #tpu.dot_dimension_numbers<[1], [0], [0], [1], [0, 0, 1, 1], [], []>} : vector<256x16xbf16>, vector<16x16xbf16>, vector<256x16xf32> -> vector<256x16xf32>
    %c1_i32_66 = arith.constant 1 : i32
    %135 = tpu.dynamic_rotate %134 by %c1_i32_66 dim 0 : vector<256x16xf32>, i32 -> vector<256x16xf32>
    %136 = arith.addf %129, %135 : vector<256x16xf32>
    %c1_67 = arith.constant 1 : index
    %c0_68 = arith.constant 0 : index
    %c0_69 = arith.constant 0 : index
    %137 = vector.load %arg5[%c1_67, %c0_68, %c0_69] : memref<9x16x16xbf16, #tpu.memory_space<vmem>>, vector<1x16x16xbf16>
    %138 = vector.shape_cast %137 : vector<1x16x16xbf16> to vector<16x16xbf16>
    %cst_70 = arith.constant dense<0.000000e+00> : vector<256x16xf32>
    %139 = tpu.matmul %131, %138, %cst_70 {dimension_numbers = #tpu.dot_dimension_numbers<[1], [0], [0], [1], [0, 0, 1, 1], [], []>} : vector<256x16xbf16>, vector<16x16xbf16>, vector<256x16xf32> -> vector<256x16xf32>
    %140 = arith.addf %136, %139 : vector<256x16xf32>
    %c2_71 = arith.constant 2 : index
    %c0_72 = arith.constant 0 : index
    %c0_73 = arith.constant 0 : index
    %141 = vector.load %arg5[%c2_71, %c0_72, %c0_73] : memref<9x16x16xbf16, #tpu.memory_space<vmem>>, vector<1x16x16xbf16>
    %142 = vector.shape_cast %141 : vector<1x16x16xbf16> to vector<16x16xbf16>
    %cst_74 = arith.constant dense<0.000000e+00> : vector<256x16xf32>
    %143 = tpu.matmul %131, %142, %cst_74 {dimension_numbers = #tpu.dot_dimension_numbers<[1], [0], [0], [1], [0, 0, 1, 1], [], []>} : vector<256x16xbf16>, vector<16x16xbf16>, vector<256x16xf32> -> vector<256x16xf32>
    %c255_i32 = arith.constant 255 : i32
    %144 = tpu.dynamic_rotate %143 by %c255_i32 dim 0 : vector<256x16xf32>, i32 -> vector<256x16xf32>
    %145 = arith.addf %140, %144 : vector<256x16xf32>
    %146 = vector.extract_strided_slice %126 {offsets = [1, 0, 0], sizes = [8, 32, 16], strides = [1, 1, 1]} : vector<10x32x16xbf16> to vector<8x32x16xbf16>
    %147 = vector.shape_cast %146 : vector<8x32x16xbf16> to vector<256x16xbf16>
    %c3_75 = arith.constant 3 : index
    %c0_76 = arith.constant 0 : index
    %c0_77 = arith.constant 0 : index
    %148 = vector.load %arg5[%c3_75, %c0_76, %c0_77] : memref<9x16x16xbf16, #tpu.memory_space<vmem>>, vector<1x16x16xbf16>
    %149 = vector.shape_cast %148 : vector<1x16x16xbf16> to vector<16x16xbf16>
    %cst_78 = arith.constant dense<0.000000e+00> : vector<256x16xf32>
    %150 = tpu.matmul %147, %149, %cst_78 {dimension_numbers = #tpu.dot_dimension_numbers<[1], [0], [0], [1], [0, 0, 1, 1], [], []>} : vector<256x16xbf16>, vector<16x16xbf16>, vector<256x16xf32> -> vector<256x16xf32>
    %c1_i32_79 = arith.constant 1 : i32
    %151 = tpu.dynamic_rotate %150 by %c1_i32_79 dim 0 : vector<256x16xf32>, i32 -> vector<256x16xf32>
    %152 = arith.addf %145, %151 : vector<256x16xf32>
    %c4_80 = arith.constant 4 : index
    %c0_81 = arith.constant 0 : index
    %c0_82 = arith.constant 0 : index
    %153 = vector.load %arg5[%c4_80, %c0_81, %c0_82] : memref<9x16x16xbf16, #tpu.memory_space<vmem>>, vector<1x16x16xbf16>
    %154 = vector.shape_cast %153 : vector<1x16x16xbf16> to vector<16x16xbf16>
    %cst_83 = arith.constant dense<0.000000e+00> : vector<256x16xf32>
    %155 = tpu.matmul %147, %154, %cst_83 {dimension_numbers = #tpu.dot_dimension_numbers<[1], [0], [0], [1], [0, 0, 1, 1], [], []>} : vector<256x16xbf16>, vector<16x16xbf16>, vector<256x16xf32> -> vector<256x16xf32>
    %156 = arith.addf %152, %155 : vector<256x16xf32>
    %c5_84 = arith.constant 5 : index
    %c0_85 = arith.constant 0 : index
    %c0_86 = arith.constant 0 : index
    %157 = vector.load %arg5[%c5_84, %c0_85, %c0_86] : memref<9x16x16xbf16, #tpu.memory_space<vmem>>, vector<1x16x16xbf16>
    %158 = vector.shape_cast %157 : vector<1x16x16xbf16> to vector<16x16xbf16>
    %cst_87 = arith.constant dense<0.000000e+00> : vector<256x16xf32>
    %159 = tpu.matmul %147, %158, %cst_87 {dimension_numbers = #tpu.dot_dimension_numbers<[1], [0], [0], [1], [0, 0, 1, 1], [], []>} : vector<256x16xbf16>, vector<16x16xbf16>, vector<256x16xf32> -> vector<256x16xf32>
    %c255_i32_88 = arith.constant 255 : i32
    %160 = tpu.dynamic_rotate %159 by %c255_i32_88 dim 0 : vector<256x16xf32>, i32 -> vector<256x16xf32>
    %161 = arith.addf %156, %160 : vector<256x16xf32>
    %162 = vector.extract_strided_slice %126 {offsets = [2, 0, 0], sizes = [8, 32, 16], strides = [1, 1, 1]} : vector<10x32x16xbf16> to vector<8x32x16xbf16>
    %163 = vector.shape_cast %162 : vector<8x32x16xbf16> to vector<256x16xbf16>
    %c6_89 = arith.constant 6 : index
    %c0_90 = arith.constant 0 : index
    %c0_91 = arith.constant 0 : index
    %164 = vector.load %arg5[%c6_89, %c0_90, %c0_91] : memref<9x16x16xbf16, #tpu.memory_space<vmem>>, vector<1x16x16xbf16>
    %165 = vector.shape_cast %164 : vector<1x16x16xbf16> to vector<16x16xbf16>
    %cst_92 = arith.constant dense<0.000000e+00> : vector<256x16xf32>
    %166 = tpu.matmul %163, %165, %cst_92 {dimension_numbers = #tpu.dot_dimension_numbers<[1], [0], [0], [1], [0, 0, 1, 1], [], []>} : vector<256x16xbf16>, vector<16x16xbf16>, vector<256x16xf32> -> vector<256x16xf32>
    %c1_i32_93 = arith.constant 1 : i32
    %167 = tpu.dynamic_rotate %166 by %c1_i32_93 dim 0 : vector<256x16xf32>, i32 -> vector<256x16xf32>
    %168 = arith.addf %161, %167 : vector<256x16xf32>
    %c7_94 = arith.constant 7 : index
    %c0_95 = arith.constant 0 : index
    %c0_96 = arith.constant 0 : index
    %169 = vector.load %arg5[%c7_94, %c0_95, %c0_96] : memref<9x16x16xbf16, #tpu.memory_space<vmem>>, vector<1x16x16xbf16>
    %170 = vector.shape_cast %169 : vector<1x16x16xbf16> to vector<16x16xbf16>
    %cst_97 = arith.constant dense<0.000000e+00> : vector<256x16xf32>
    %171 = tpu.matmul %163, %170, %cst_97 {dimension_numbers = #tpu.dot_dimension_numbers<[1], [0], [0], [1], [0, 0, 1, 1], [], []>} : vector<256x16xbf16>, vector<16x16xbf16>, vector<256x16xf32> -> vector<256x16xf32>
    %172 = arith.addf %168, %171 : vector<256x16xf32>
    %c8_98 = arith.constant 8 : index
    %c0_99 = arith.constant 0 : index
    %c0_100 = arith.constant 0 : index
    %173 = vector.load %arg5[%c8_98, %c0_99, %c0_100] : memref<9x16x16xbf16, #tpu.memory_space<vmem>>, vector<1x16x16xbf16>
    %174 = vector.shape_cast %173 : vector<1x16x16xbf16> to vector<16x16xbf16>
    %cst_101 = arith.constant dense<0.000000e+00> : vector<256x16xf32>
    %175 = tpu.matmul %163, %174, %cst_101 {dimension_numbers = #tpu.dot_dimension_numbers<[1], [0], [0], [1], [0, 0, 1, 1], [], []>} : vector<256x16xbf16>, vector<16x16xbf16>, vector<256x16xf32> -> vector<256x16xf32>
    %c255_i32_102 = arith.constant 255 : i32
    %176 = tpu.dynamic_rotate %175 by %c255_i32_102 dim 0 : vector<256x16xf32>, i32 -> vector<256x16xf32>
    %177 = arith.addf %172, %176 : vector<256x16xf32>
    %cst_103 = arith.constant 0.000000e+00 : f32
    %178 = vector.broadcast %cst_103 : f32 to vector<256x16xf32>
    %179 = arith.cmpf ogt, %177, %178 : vector<256x16xf32>
    %cst_104 = arith.constant 2.000000e-01 : f32
    %180 = vector.broadcast %cst_104 : f32 to vector<256x16xf32>
    %181 = arith.mulf %180, %177 : vector<256x16xf32>
    %182 = arith.select %179, %177, %181 : vector<256x16xi1>, vector<256x16xf32>
    %183 = arith.mulf %182, %182 : vector<256x16xf32>
    %cst_105 = arith.constant dense<0.000000e+00> : vector<256xf32>
    %184 = vector.multi_reduction <add>, %183, %cst_105 [1] : vector<256x16xf32> to vector<256xf32>
    %185 = vector.shape_cast %184 : vector<256xf32> to vector<256x1xf32>
    %cst_106 = arith.constant 1.600000e+01 : f32
    %186 = vector.broadcast %cst_106 : f32 to vector<256x1xf32>
    %187 = arith.divf %185, %186 : vector<256x1xf32>
    %cst_107 = arith.constant 9.99999993E-9 : f32
    %188 = vector.broadcast %cst_107 : f32 to vector<256x1xf32>
    %189 = arith.addf %187, %188 : vector<256x1xf32>
    %190 = math.rsqrt %189 : vector<256x1xf32>
    %191 = vector.broadcast %190 : vector<256x1xf32> to vector<256x16xf32>
    %192 = arith.mulf %182, %191 : vector<256x16xf32>
    %193 = vector.shape_cast %192 : vector<256x16xf32> to vector<8x32x16xf32>
    %194 = vector.extract_strided_slice %193 {offsets = [0, 0, 0], sizes = [8, 16, 16], strides = [1, 1, 1]} : vector<8x32x16xf32> to vector<8x16x16xf32>
    %c0_108 = arith.constant 0 : index
    %c0_109 = arith.constant 0 : index
    %c0_110 = arith.constant 0 : index
    %c0_111 = arith.constant 0 : index
    %195 = vector.load %arg9[%c0_108, %c0_109, %c0_110, %c0_111] : memref<1x8x16x16xf32, #tpu.memory_space<vmem>>, vector<1x8x16x16xf32>
    %196 = vector.shape_cast %195 : vector<1x8x16x16xf32> to vector<8x16x16xf32>
    %197 = vector.shape_cast %194 : vector<8x16x16xf32> to vector<1x8x16x16xf32>
    tpu.vector_store %arg9[%c0_108, %c0_109, %c0_110, %c0_111], %197 {strides = array<i32>} : memref<1x8x16x16xf32, #tpu.memory_space<vmem>>, vector<1x8x16x16xf32>,
    %198 = arith.truncf %192 : vector<256x16xf32> to vector<256x16xbf16>
    %c0_112 = arith.constant 0 : index
    %c0_113 = arith.constant 0 : index
    %199 = vector.load %arg7[%c0_112, %c0_113] : memref<16x3xbf16, #tpu.memory_space<vmem>>, vector<16x3xbf16>
    %cst_114 = arith.constant dense<0.000000e+00> : vector<256x3xf32>
    %200 = tpu.matmul %198, %199, %cst_114 {dimension_numbers = #tpu.dot_dimension_numbers<[1], [0], [0], [1], [0, 0, 1, 1], [], []>} : vector<256x16xbf16>, vector<16x3xbf16>, vector<256x3xf32> -> vector<256x3xf32>
    %c0_115 = arith.constant 0 : index
    %c0_116 = arith.constant 0 : index
    %201 = vector.load %arg8[%c0_115, %c0_116] : memref<1x3xf32, #tpu.memory_space<vmem>>, vector<1x3xf32>
    %202 = vector.broadcast %201 : vector<1x3xf32> to vector<256x3xf32>
    %203 = arith.addf %200, %202 : vector<256x3xf32>
    %204 = vector.shape_cast %203 : vector<256x3xf32> to vector<8x32x3xf32>
    %205 = vector.extract_strided_slice %204 {offsets = [0, 0, 0], sizes = [8, 16, 3], strides = [1, 1, 1]} : vector<8x32x3xf32> to vector<8x16x3xf32>
    %c0_117 = arith.constant 0 : index
    %c0_118 = arith.constant 0 : index
    %c0_119 = arith.constant 0 : index
    %c0_120 = arith.constant 0 : index
    %206 = vector.load %arg10[%c0_117, %c0_118, %c0_119, %c0_120] : memref<1x8x16x3xf32, #tpu.memory_space<vmem>>, vector<1x8x16x3xf32>
    %207 = vector.shape_cast %206 : vector<1x8x16x3xf32> to vector<8x16x3xf32>
    %208 = vector.shape_cast %205 : vector<8x16x3xf32> to vector<1x8x16x3xf32>
    tpu.vector_store %arg10[%c0_117, %c0_118, %c0_119, %c0_120], %208 {strides = array<i32>} : memref<1x8x16x3xf32, #tpu.memory_space<vmem>>, vector<1x8x16x3xf32>,
    return
  }
  func.func @transform_0(%arg0: i32, %arg1: i32) -> (i32, i32, i32, i32) {
    %c0_i32 = arith.constant 0 : i32
    %c0_i32_0 = arith.constant 0 : i32
    %c0_i32_1 = arith.constant 0 : i32
    %c0_i32_2 = arith.constant 0 : i32
    return %arg0, %c0_i32, %c0_i32_0, %c0_i32_1 : i32, i32, i32, i32
  }
  func.func @transform_1(%arg0: i32, %arg1: i32) -> (i32, i32, i32) {
    %c0_i32 = arith.constant 0 : i32
    %c0_i32_0 = arith.constant 0 : i32
    %c0_i32_1 = arith.constant 0 : i32
    %c0_i32_2 = arith.constant 0 : i32
    return %c0_i32, %c0_i32_0, %c0_i32_1 : i32, i32, i32
  }
  func.func @transform_2(%arg0: i32, %arg1: i32) -> (i32, i32) {
    %c0_i32 = arith.constant 0 : i32
    %c0_i32_0 = arith.constant 0 : i32
    %c0_i32_1 = arith.constant 0 : i32
    return %c0_i32, %c0_i32_0 : i32, i32
  }
  func.func @transform_3(%arg0: i32, %arg1: i32) -> (i32, i32, i32) {
    %c0_i32 = arith.constant 0 : i32
    %c0_i32_0 = arith.constant 0 : i32
    %c0_i32_1 = arith.constant 0 : i32
    %c0_i32_2 = arith.constant 0 : i32
    return %c0_i32, %c0_i32_0, %c0_i32_1 : i32, i32, i32
  }
  func.func @transform_4(%arg0: i32, %arg1: i32) -> (i32, i32) {
    %c0_i32 = arith.constant 0 : i32
    %c0_i32_0 = arith.constant 0 : i32
    %c0_i32_1 = arith.constant 0 : i32
    return %c0_i32, %c0_i32_0 : i32, i32
  }
  func.func @transform_5(%arg0: i32, %arg1: i32) -> (i32, i32) {
    %c0_i32 = arith.constant 0 : i32
    %c0_i32_0 = arith.constant 0 : i32
    %c0_i32_1 = arith.constant 0 : i32
    return %c0_i32, %c0_i32_0 : i32, i32
  }
  func.func @transform_6(%arg0: i32, %arg1: i32) -> (i32, i32) {
    %c0_i32 = arith.constant 0 : i32
    %c0_i32_0 = arith.constant 0 : i32
    %c0_i32_1 = arith.constant 0 : i32
    return %c0_i32, %c0_i32_0 : i32, i32
  }
  func.func @transform_7(%arg0: i32, %arg1: i32) -> (i32, i32, i32, i32) {
    %c0_i32 = arith.constant 0 : i32
    %c0_i32_0 = arith.constant 0 : i32
    %c0_i32_1 = arith.constant 0 : i32
    return %arg0, %arg1, %c0_i32, %c0_i32_0 : i32, i32, i32, i32
  }
  func.func @transform_8(%arg0: i32, %arg1: i32) -> (i32, i32, i32, i32) {
    %c0_i32 = arith.constant 0 : i32
    %c0_i32_0 = arith.constant 0 : i32
    %c0_i32_1 = arith.constant 0 : i32
    return %arg0, %arg1, %c0_i32, %c0_i32_0 : i32, i32, i32, i32
  }
}

</mosaic_0001>

<llo_original>
// kernel: gen_block_forward.1
$region0: #{gen_block_forward.1}
  #allocation0 [shape = 'u32[]', space=smem, size = 0x4, offset = 0x4, fixed_abs, tag = 'smem constant byte address 0x4 - core index']
  #allocation1 [shape = 'u32[72,128]{1,0:T(1,128)}', space=vmem, size = 0x9000, scoped, tag = 'internal scratch']
  %s0 = inlined_call_operand.vmem [shape: bf16[2,10,32,8], index: 0, kind: input, shape index: {}]
  %s1 = inlined_call_operand.vmem [shape: bf16[12,8,16], index: 1, kind: input, shape index: {}]
  %s2 = inlined_call_operand.vmem [shape: f32[1,16], index: 2, kind: input, shape index: {}]
  %s3 = inlined_call_operand.vmem [shape: bf16[9,16,16], index: 3, kind: input, shape index: {}]
  %s4 = inlined_call_operand.vmem [shape: f32[1,16], index: 4, kind: input, shape index: {}]
  %s5 = inlined_call_operand.vmem [shape: bf16[16,3], index: 5, kind: input, shape index: {}]
  %s6 = inlined_call_operand.vmem [shape: f32[1,3], index: 6, kind: input, shape index: {}]
  %s7 = inlined_call_operand.vmem [shape: f32[2,16,16,16], index: 7, kind: output, shape index: {0}]
  %s8 = inlined_call_operand.vmem [shape: f32[2,16,16,3], index: 8, kind: output, shape index: {1}]
  %9 = xla_tuple %s7, %s8
  %s10 = sld [smem:[#allocation0]]
  $region69: #{gen_block_forward.1} parent=0
    _
  %s12 = ssub.s32 1, %s10
  %s13 = scalar_select 0, %s12, %s10
  loop: start=0, step=1, limit=6
  $region2: #{gen_block_forward.1} parent=0 // loop_pre_header
    _
  $region3: #{gen_block_forward.1} parent=0 // loop_header
    %s15 = sphi 0, %s19
    %p16 = scmp.ge.s32.totalorder %s15, 6
    %s22 = sphi 0, %s34
    %s23 = sphi 0, %s30
    %s24 = sphi 0, %s22
    %s25 = sphi 0, %s23
    %s26 = sphi 0, %s24
    %s27 = sphi 0, %s25
    %s37 = sphi 0, %s39
    %s40 = sphi 0, %s37
    %s41 = sphi 0, %s40
    %s57 = sphi 0, %s41
    %s61 = sphi 0, %s61
    %s63 = sphi 0, %s61
    %s64 = sphi 0, %s63
    %s78 = sphi 0, %s64
    %s82 = sphi 0, %s82
    %s84 = sphi 0, %s82
    %s85 = sphi 0, %s84
    %s99 = sphi 0, %s85
    %s103 = sphi 0, %s103
    %s105 = sphi 0, %s103
    %s106 = sphi 0, %s105
    %s120 = sphi 0, %s106
    %s124 = sphi 0, %s124
    %s126 = sphi 0, %s124
    %s127 = sphi 0, %s126
    %s141 = sphi 0, %s127
    %s145 = sphi 0, %s145
    %s147 = sphi 0, %s145
    %s148 = sphi 0, %s147
    %s162 = sphi 0, %s148
    %s166 = sphi 0, %s166
    %s168 = sphi 0, %s166
    %s169 = sphi 0, %s168
    %s183 = sphi 0, %s169
    %s191 = sphi 0, %s193
    %s194 = sphi 0, %s191
    %s195 = sphi 0, %s194
    %s211 = sphi 0, %s195
    %s219 = sphi 0, %s221
    %s222 = sphi 0, %s219
    %s223 = sphi 0, %s222
    %s239 = sphi 0, %s223
  $region4: #{gen_block_forward.1} parent=0 // loop_header_branch
    %18 = sbr.rel (%p16) target = $region8
  $region5: #{gen_block_forward.1} parent=0 // loop_body
    %s20 = ssub.s32 %s15, 1
    %s21 = ssub.s32 %s15, 2
    %s28 = sadd.s32 1, %s23
    %p29 = scmp.ge.s32.totalorder %s28, 2
    %s30 = scalar_select %p29, 0, %s28
    %s31 = sadd.s32 1, %s22
    %s32 = scalar_select %p29, %s31, %s22
    %p33 = scmp.ge.s32.totalorder %s32, 2
    %s34 = scalar_select %p33, 0, %s32
    %s35 = ssub.s32 %s22, %s34
    %p36 = scmp.eq.s32.totalorder %s35, 0
    %s38 = sadd.s32 %s37, 1
    %s39 = scalar_select %p36, %s37, %s38
    %p42 = pneg %p36
    %p43 = scmp.eq.s32.totalorder %s15, 3
    %p44 = por %p42, %p43
    %p45 = scmp.ne.s32.totalorder %s37, %s40
    %p46 = scmp.eq.s32.totalorder %s15, 0
    %p47 = por %p45, %p46
    %p48 = scmp.ne.s32.totalorder %s37, %s40
    %p49 = scmp.eq.s32.totalorder %s20, 3
    %p50 = por %p48, %p49
    %p51 = scmp.ne.s32.totalorder %s40, %s41
    %p52 = scmp.eq.s32.totalorder %s20, 0
    %p53 = por %p51, %p52
    %p54 = scmp.ne.s32.totalorder %s40, %s41
    %p55 = scmp.eq.s32.totalorder %s21, 3
    %p56 = por %p54, %p55
    %p58 = scmp.ne.s32.totalorder %s41, %s57
    %p59 = scmp.eq.s32.totalorder %s21, 0
    %p60 = por %p58, %p59
    %s62 = sadd.s32 %s61, 1
    %p65 = scmp.eq.s32.totalorder %s15, 3
    %p66 = scmp.ne.s32.totalorder %s61, %s63
    %p67 = scmp.eq.s32.totalorder %s15, 0
    %p68 = por %p66, %p67
    %p69 = scmp.ne.s32.totalorder %s61, %s63
    %p70 = scmp.eq.s32.totalorder %s20, 3
    %p71 = por %p69, %p70
    %p72 = scmp.ne.s32.totalorder %s63, %s64
    %p73 = scmp.eq.s32.totalorder %s20, 0
    %p74 = por %p72, %p73
    %p75 = scmp.ne.s32.totalorder %s63, %s64
    %p76 = scmp.eq.s32.totalorder %s21, 3
    %p77 = por %p75, %p76
    %p79 = scmp.ne.s32.totalorder %s64, %s78
    %p80 = scmp.eq.s32.totalorder %s21, 0
    %p81 = por %p79, %p80
    %s83 = sadd.s32 %s82, 1
    %p86 = scmp.eq.s32.totalorder %s15, 3
    %p87 = scmp.ne.s32.totalorder %s82, %s84
    %p88 = scmp.eq.s32.totalorder %s15, 0
    %p89 = por %p87, %p88
    %p90 = scmp.ne.s32.totalorder %s82, %s84
    %p91 = scmp.eq.s32.totalorder %s20, 3
    %p92 = por %p90, %p91
    %p93 = scmp.ne.s32.totalorder %s84, %s85
    %p94 = scmp.eq.s32.totalorder %s20, 0
    %p95 = por %p93, %p94
    %p96 = scmp.ne.s32.totalorder %s84, %s85
    %p97 = scmp.eq.s32.totalorder %s21, 3
    %p98 = por %p96, %p97
    %p100 = scmp.ne.s32.totalorder %s85, %s99
    %p101 = scmp.eq.s32.totalorder %s21, 0
    %p102 = por %p100, %p101
    %s104 = sadd.s32 %s103, 1
    %p107 = scmp.eq.s32.totalorder %s15, 3
    %p108 = scmp.ne.s32.totalorder %s103, %s105
    %p109 = scmp.eq.s32.totalorder %s15, 0
    %p110 = por %p108, %p109
    %p111 = scmp.ne.s32.totalorder %s103, %s105
    %p112 = scmp.eq.s32.totalorder %s20, 3
    %p113 = por %p111, %p112
    %p114 = scmp.ne.s32.totalorder %s105, %s106
    %p115 = scmp.eq.s32.totalorder %s20, 0
    %p116 = por %p114, %p115
    %p117 = scmp.ne.s32.totalorder %s105, %s106
    %p118 = scmp.eq.s32.totalorder %s21, 3
    %p119 = por %p117, %p118
    %p121 = scmp.ne.s32.totalorder %s106, %s120
    %p122 = scmp.eq.s32.totalorder %s21, 0
    %p123 = por %p121, %p122
    %s125 = sadd.s32 %s124, 1
    %p128 = scmp.eq.s32.totalorder %s15, 3
    %p129 = scmp.ne.s32.totalorder %s124, %s126
    %p130 = scmp.eq.s32.totalorder %s15, 0
    %p131 = por %p129, %p130
    %p132 = scmp.ne.s32.totalorder %s124, %s126
    %p133 = scmp.eq.s32.totalorder %s20, 3
    %p134 = por %p132, %p133
    %p135 = scmp.ne.s32.totalorder %s126, %s127
    %p136 = scmp.eq.s32.totalorder %s20, 0
    %p137 = por %p135, %p136
    %p138 = scmp.ne.s32.totalorder %s126, %s127
    %p139 = scmp.eq.s32.totalorder %s21, 3
    %p140 = por %p138, %p139
    %p142 = scmp.ne.s32.totalorder %s127, %s141
    %p143 = scmp.eq.s32.totalorder %s21, 0
    %p144 = por %p142, %p143
    %s146 = sadd.s32 %s145, 1
    %p149 = scmp.eq.s32.totalorder %s15, 3
    %p150 = scmp.ne.s32.totalorder %s145, %s147
    %p151 = scmp.eq.s32.totalorder %s15, 0
    %p152 = por %p150, %p151
    %p153 = scmp.ne.s32.totalorder %s145, %s147
    %p154 = scmp.eq.s32.totalorder %s20, 3
    %p155 = por %p153, %p154
    %p156 = scmp.ne.s32.totalorder %s147, %s148
    %p157 = scmp.eq.s32.totalorder %s20, 0
    %p158 = por %p156, %p157
    %p159 = scmp.ne.s32.totalorder %s147, %s148
    %p160 = scmp.eq.s32.totalorder %s21, 3
    %p161 = por %p159, %p160
    %p163 = scmp.ne.s32.totalorder %s148, %s162
    %p164 = scmp.eq.s32.totalorder %s21, 0
    %p165 = por %p163, %p164
    %s167 = sadd.s32 %s166, 1
    %p170 = scmp.eq.s32.totalorder %s15, 3
    %p171 = scmp.ne.s32.totalorder %s166, %s168
    %p172 = scmp.eq.s32.totalorder %s15, 0
    %p173 = por %p171, %p172
    %p174 = scmp.ne.s32.totalorder %s166, %s168
    %p175 = scmp.eq.s32.totalorder %s20, 3
    %p176 = por %p174, %p175
    %p177 = scmp.ne.s32.totalorder %s168, %s169
    %p178 = scmp.eq.s32.totalorder %s20, 0
    %p179 = por %p177, %p178
    %p180 = scmp.ne.s32.totalorder %s168, %s169
    %p181 = scmp.eq.s32.totalorder %s21, 3
    %p182 = por %p180, %p181
    %p184 = scmp.ne.s32.totalorder %s169, %s183
    %p185 = scmp.eq.s32.totalorder %s21, 0
    %p186 = por %p184, %p185
    %s187 = ssub.s32 %s22, %s34
    %s188 = ssub.s32 %s23, %s30
    %s189 = sor.u32 %s187, %s188
    %p190 = scmp.eq.s32.totalorder %s189, 0
    %s192 = sadd.s32 %s191, 1
    %s193 = scalar_select %p190, %s191, %s192
    %p196 = pneg %p190
    %p197 = scmp.eq.s32.totalorder %s15, 3
    %p198 = por %p196, %p197
    %p199 = scmp.ne.s32.totalorder %s191, %s194
    %p200 = scmp.eq.s32.totalorder %s15, 0
    %p201 = por %p199, %p200
    %p202 = scmp.ne.s32.totalorder %s191, %s194
    %p203 = scmp.eq.s32.totalorder %s20, 3
    %p204 = por %p202, %p203
    %p205 = scmp.ne.s32.totalorder %s194, %s195
    %p206 = scmp.eq.s32.totalorder %s20, 0
    %p207 = por %p205, %p206
    %p208 = scmp.ne.s32.totalorder %s194, %s195
    %p209 = scmp.eq.s32.totalorder %s21, 3
    %p210 = por %p208, %p209
    %p212 = scmp.ne.s32.totalorder %s195, %s211
    %p213 = scmp.eq.s32.totalorder %s21, 0
    %p214 = por %p212, %p213
    %s215 = ssub.s32 %s22, %s34
    %s216 = ssub.s32 %s23, %s30
    %s217 = sor.u32 %s215, %s216
    %p218 = scmp.eq.s32.totalorder %s217, 0
    %s220 = sadd.s32 %s219, 1
    %s221 = scalar_select %p218, %s219, %s220
    %p224 = pneg %p218
    %p225 = scmp.eq.s32.totalorder %s15, 3
    %p226 = por %p224, %p225
    %p227 = scmp.ne.s32.totalorder %s219, %s222
    %p228 = scmp.eq.s32.totalorder %s15, 0
    %p229 = por %p227, %p228
    %p230 = scmp.ne.s32.totalorder %s219, %s222
    %p231 = scmp.eq.s32.totalorder %s20, 3
    %p232 = por %p230, %p231
    %p233 = scmp.ne.s32.totalorder %s222, %s223
    %p234 = scmp.eq.s32.totalorder %s20, 0
    %p235 = por %p233, %p234
    %p236 = scmp.ne.s32.totalorder %s222, %s223
    %p237 = scmp.eq.s32.totalorder %s21, 3
    %p238 = por %p236, %p237
    %p240 = scmp.ne.s32.totalorder %s223, %s239
    %p241 = scmp.eq.s32.totalorder %s21, 0
    %p242 = por %p240, %p241
    %p243 = scmp.le.s32.totalorder 1, %s15
    %p244 = scmp.lt.s32.totalorder %s15, 5
    %p245 = pnand %p243, %p244
    %p246 = pneg %p245
    // Predicated region
    $region9: #{gen_block_forward.1} parent=5 // pred_check
      _
    $region10: #{gen_block_forward.1} parent=5 // pred_check_branch
      %248 = sbr.rel (%p245) target = $region12
    $region11: #{gen_block_forward.1} parent=5 // pred_region
      %s249 = ssub.s32 %s15, 1
      // Predicated region
      $region13: #{gen_block_forward.1} parent=11 // pred_check
        %p250 = pneg %p74
      $region14: #{gen_block_forward.1} parent=11 // pred_check_branch
        %252 = sbr.rel (%p250) target = $region16
      $region15: #{gen_block_forward.1} parent=11 // pred_region
        _
      $region16: #{gen_block_forward.1} parent=11 // pred_fallthru
        _
      // Predicated region
      $region17: #{gen_block_forward.1} parent=11 // pred_check
        %p253 = pneg %p95
      $region18: #{gen_block_forward.1} parent=11 // pred_check_branch
        %255 = sbr.rel (%p253) target = $region20
      $region19: #{gen_block_forward.1} parent=11 // pred_region
        _
      $region20: #{gen_block_forward.1} parent=11 // pred_fallthru
        _
      // Predicated region
      $region21: #{gen_block_forward.1} parent=11 // pred_check
        %p256 = pneg %p116
      $region22: #{gen_block_forward.1} parent=11 // pred_check_branch
        %258 = sbr.rel (%p256) target = $region24
      $region23: #{gen_block_forward.1} parent=11 // pred_region
        _
      $region24: #{gen_block_forward.1} parent=11 // pred_fallthru
        _
      // Predicated region
      $region25: #{gen_block_forward.1} parent=11 // pred_check
        %p259 = pneg %p137
      $region26: #{gen_block_forward.1} parent=11 // pred_check_branch
        %261 = sbr.rel (%p259) target = $region28
      $region27: #{gen_block_forward.1} parent=11 // pred_region
        _
      $region28: #{gen_block_forward.1} parent=11 // pred_fallthru
        _
      // Predicated region
      $region29: #{gen_block_forward.1} parent=11 // pred_check
        %p262 = pneg %p158
      $region30: #{gen_block_forward.1} parent=11 // pred_check_branch
        %264 = sbr.rel (%p262) target = $region32
      $region31: #{gen_block_forward.1} parent=11 // pred_region
        _
      $region32: #{gen_block_forward.1} parent=11 // pred_fallthru
        _
      // Predicated region
      $region33: #{gen_block_forward.1} parent=11 // pred_check
        %p265 = pneg %p179
      $region34: #{gen_block_forward.1} parent=11 // pred_check_branch
        %267 = sbr.rel (%p265) target = $region36
      $region35: #{gen_block_forward.1} parent=11 // pred_region
        _
      $region36: #{gen_block_forward.1} parent=11 // pred_fallthru
        _
    $region12: #{gen_block_forward.1} parent=5 // pred_fallthru
      _
    %p268 = scmp.lt.s32.totalorder %s15, 4
    // Predicated region
    $region37: #{gen_block_forward.1} parent=5 // pred_check
      %p269 = pneg %p268
    $region38: #{gen_block_forward.1} parent=5 // pred_check_branch
      %271 = sbr.rel (%p269) target = $region40
    $region39: #{gen_block_forward.1} parent=5 // pred_region
      // Predicated region
      $region41: #{gen_block_forward.1} parent=39 // pred_check
        %p272 = pneg %p47
      $region42: #{gen_block_forward.1} parent=39 // pred_check_branch
        %274 = sbr.rel (%p272) target = $region44
      $region43: #{gen_block_forward.1} parent=39 // pred_region
        %p275 = scmp.lt.s32.totalorder %s22, 1
        %s276 = scalar_select %p275, %s22, 1
        %s277 = smul.addr %s276, 40
        %s278 = smul.addr %s277, 4
        %s279 = scalar_lea.vmem %s0, %s278
      $region44: #{gen_block_forward.1} parent=39 // pred_fallthru
        _
    $region40: #{gen_block_forward.1} parent=5 // pred_fallthru
      _
    %p280 = scmp.le.s32.totalorder 1, %s15
    %p281 = scmp.lt.s32.totalorder %s15, 5
    %p282 = pnand %p280, %p281
    %p283 = pneg %p282
    // Predicated region
    $region45: #{gen_block_forward.1} parent=5 // pred_check
      _
    $region46: #{gen_block_forward.1} parent=5 // pred_check_branch
      %285 = sbr.rel (%p282) target = $region48
    $region47: #{gen_block_forward.1} parent=5 // pred_region
      %s286 = ssub.s32 %s15, 1
      %p287 = scmp.lt.s32.totalorder %s24, 1
      %s288 = scalar_select %p287, %s24, 1
      %s289 = smul.addr %s288, 40
      %s290 = smul.addr %s289, 4
      %s291 = scalar_lea.vmem %s0, %s290
      %p292 = pneg %p53
      %p293 = pneg %p50
      %p294 = pneg %p74
      %p295 = pneg %p71
      %p296 = pneg %p95
      %p297 = pneg %p92
      %p298 = pneg %p116
      %p299 = pneg %p113
      %p300 = pneg %p137
      %p301 = pneg %p134
      %p302 = pneg %p158
      %p303 = pneg %p155
      %p304 = pneg %p179
      %p305 = pneg %p176
      %p306 = pneg %p207
      %p307 = pneg %p204
      %s308 = smul.u32 8, %s25
      %p309 = scmp.lt.s32.totalorder %s24, 1
      %s310 = scalar_select %p309, %s24, 1
      %p311 = scmp.lt.s32.totalorder %s308, 15
      %s312 = scalar_select %p311, %s308, 15
      %s313 = smul.addr %s312, 2
      %s314 = smul.addr %s310, 32
      %s315 = sadd.s32 %s313, %s314
      %s316 = smul.addr %s315, 8
      %s317 = scalar_lea.vmem %s7, %s316
      %p318 = pneg %p235
      %p319 = pneg %p232
      %s320 = smul.u32 8, %s25
      %p321 = scmp.lt.s32.totalorder %s24, 1
      %s322 = scalar_select %p321, %s24, 1
      %p323 = scmp.lt.s32.totalorder %s320, 15
      %s324 = scalar_select %p323, %s320, 15
      %s325 = smul.addr %s324, 2
      %s326 = smul.addr %s322, 32
      %s327 = sadd.s32 %s325, %s326
      %s328 = smul.addr %s327, 8
      %s329 = scalar_lea.vmem %s8, %s328
      %p330 = scmp.lt.s32.totalorder %s24, 1
      %s331 = scalar_select %p330, %s24, 1
      %s332 = smul.addr %s331, 40
      %s333 = smul.addr %s332, 4
      %s334 = scalar_lea.vmem %s0, %s333
      %s335 = smul.u32 8, %s25
      %p336 = scmp.lt.s32.totalorder %s24, 1
      %s337 = scalar_select %p336, %s24, 1
      %p338 = scmp.lt.s32.totalorder %s335, 15
      %s339 = scalar_select %p338, %s335, 15
      %s340 = smul.addr %s339, 2
      %s341 = smul.addr %s337, 32
      %s342 = sadd.s32 %s340, %s341
      %s343 = smul.addr %s342, 8
      %s344 = scalar_lea.vmem %s7, %s343
      %s345 = smul.u32 8, %s25
      %s346 = smul.u32 8, %s25
      %p347 = scmp.lt.s32.totalorder %s24, 1
      %s348 = scalar_select %p347, %s24, 1
      %p349 = scmp.lt.s32.totalorder %s346, 15
      %s350 = scalar_select %p349, %s346, 15
      %s351 = smul.addr %s350, 2
      %s352 = smul.addr %s348, 32
      %s353 = sadd.s32 %s351, %s352
      %s354 = smul.addr %s353, 8
      %s355 = scalar_lea.vmem %s8, %s354
      %s356 = smul.u32 8, %s25
      %s358 = smul.u32 %s25, 4
      %s359 = smul.u32 %s358, 4
      %s360 = smul.addr %s359, 4
      %s361 = scalar_lea.vmem %s334, %s360
      %v362 = vld [vmem:[%s361] sm:$0xf]
      %v363 = vld [vmem:[%s361 + $0x4] sm:$0xf]
      %v364 = vld [vmem:[%s361 + $0x8] sm:$0xf]
      %v365 = vld [vmem:[%s361 + $0xc] sm:$0xf]
      %v366 = vld [vmem:[%s361 + $0x10] sm:$0xf]
      %v367 = vld [vmem:[%s361 + $0x14] sm:$0xf]
      %v368 = vld [vmem:[%s361 + $0x18] sm:$0xf]
      %v369 = vld [vmem:[%s361 + $0x1c] sm:$0xf]
      %v370 = vld [vmem:[%s361 + $0x20] sm:$0xf]
      %v371 = vld [vmem:[%s361 + $0x24] sm:$0xf]
      %v372 = vld [vmem:[%s361 + $0x28] sm:$0xf]
      %v373 = vld [vmem:[%s361 + $0x2c] sm:$0xf]
      %v374 = vld [vmem:[%s361 + $0x30] sm:$0xf]
      %v375 = vld [vmem:[%s361 + $0x34] sm:$0xf]
      %v376 = vld [vmem:[%s361 + $0x38] sm:$0xf]
      %v377 = vld [vmem:[%s361 + $0x3c] sm:$0xf]
      %v378 = vld [vmem:[%s361 + $0x40] sm:$0xf]
      %v379 = vld [vmem:[%s361 + $0x44] sm:$0xf]
      %v380 = vld [vmem:[%s361 + $0x48] sm:$0xf]
      %v381 = vld [vmem:[%s361 + $0x4c] sm:$0xf]
      %v382 = vld [vmem:[%s361 + $0x50] sm:$0xf]
      %v383 = vld [vmem:[%s361 + $0x54] sm:$0xf]
      %v384 = vld [vmem:[%s361 + $0x58] sm:$0xf]
      %v385 = vld [vmem:[%s361 + $0x5c] sm:$0xf]
      %v386 = vld [vmem:[%s2] sm:$0x1]
      %v388 = vperm.slane %v386, 0
      %v390 = vld [vmem:[%s1] sm:$0xf]
      %v411 = vunpack.c.l.b16 %v362
      %v412 = vunpack.c.l.b16 %v363
      %v413 = vunpack.c.l.b16 %v364
      %v414 = vunpack.c.l.b16 %v365
      %v415 = vunpack.c.l.b16 %v366
      %v416 = vunpack.c.l.b16 %v367
      %v417 = vunpack.c.l.b16 %v368
      %v418 = vunpack.c.l.b16 %v369
      %v419 = vunpack.c.l.b16 %v370
      %v420 = vunpack.c.l.b16 %v371
      %v421 = vunpack.c.l.b16 %v372
      %v422 = vunpack.c.l.b16 %v373
      %v423 = vunpack.c.l.b16 %v374
      %v424 = vunpack.c.l.b16 %v375
      %v425 = vunpack.c.l.b16 %v376
      %v426 = vunpack.c.l.b16 %v377
      %v427 = vunpack.c.l.b16 %v378
      %v428 = vunpack.c.l.b16 %v379
      %v429 = vunpack.c.l.b16 %v380
      %v430 = vunpack.c.l.b16 %v381
      %v431 = vpack.c.b16 %v412, %v411
      %v432 = vpack.c.b16 %v414, %v413
      %v433 = vpack.c.b16 %v416, %v415
      %v434 = vpack.c.b16 %v418, %v417
      %v435 = vpack.c.b16 %v420, %v419
      %v436 = vpack.c.b16 %v422, %v421
      %v437 = vpack.c.b16 %v424, %v423
      %v438 = vpack.c.b16 %v426, %v425
      %v439 = vpack.c.b16 %v428, %v427
      %v440 = vpack.c.b16 %v430, %v429
      %vm441 = vcmask 64512
      %v443 = vsel %vm441, %v431, 0
      %v446 = vsel %vm441, %v432, 0
      %v449 = vsel %vm441, %v433, 0
      %v452 = vsel %vm441, %v434, 0
      %v455 = vsel %vm441, %v435, 0
      %v458 = vsel %vm441, %v436, 0
      %v461 = vsel %vm441, %v437, 0
      %v464 = vsel %vm441, %v438, 0
      %v467 = vsel %vm441, %v439, 0
      %v470 = vsel %vm441, %v440, 0
      %vm472 = vcmask 1043456
      %v474 = vsel %vm472, %v390, 0
      %476 = vmatpush.bf16.msra.mxu0 0
      %477 = vmatpush.bf16.msra.mxu0 0
      %478 = vmatpush.bf16.msra.mxu0 0
      %479 = vmatpush.bf16.msra.mxu0 0
      %480 = vmatpush.bf16.msra.mxu0 0
      %481 = vmatpush.bf16.msra.mxu0 0
      %482 = vmatpush.bf16.msra.mxu0 0
      %483 = vmatpush.bf16.msra.mxu0 %v474
      %484 = vmatmul.bf16.gmra.mxu0 %v443
      %v485 = vpop.f32.mrf.mxu0
      %v486 = vadd.f32 0.0, %v485
      %v487 = vpop.f32.mrf.mxu0
      %v488 = vadd.f32 0.0, %v487
      %489 = vmatmul.bf16.gmra.mxu0 %v446
      %v490 = vpop.f32.mrf.mxu0
      %v491 = vadd.f32 0.0, %v490
      %v492 = vpop.f32.mrf.mxu0
      %v493 = vadd.f32 0.0, %v492
      %494 = vmatmul.bf16.gmra.mxu0 %v449
      %v495 = vpop.f32.mrf.mxu0
      %v496 = vadd.f32 0.0, %v495
      %v497 = vpop.f32.mrf.mxu0
      %v498 = vadd.f32 0.0, %v497
      %499 = vmatmul.bf16.gmra.mxu0 %v452
      %v500 = vpop.f32.mrf.mxu0
      %v501 = vadd.f32 0.0, %v500
      %v502 = vpop.f32.mrf.mxu0
      %v503 = vadd.f32 0.0, %v502
      %504 = vmatmul.bf16.gmra.mxu0 %v455
      %v505 = vpop.f32.mrf.mxu0
      %v506 = vadd.f32 0.0, %v505
      %v507 = vpop.f32.mrf.mxu0
      %v508 = vadd.f32 0.0, %v507
      %509 = vmatmul.bf16.gmra.mxu0 %v458
      %v510 = vpop.f32.mrf.mxu0
      %v511 = vadd.f32 0.0, %v510
      %v512 = vpop.f32.mrf.mxu0
      %v513 = vadd.f32 0.0, %v512
      %514 = vmatmul.bf16.gmra.mxu0 %v461
      %v515 = vpop.f32.mrf.mxu0
      %v516 = vadd.f32 0.0, %v515
      %v517 = vpop.f32.mrf.mxu0
      %v518 = vadd.f32 0.0, %v517
      %519 = vmatmul.bf16.gmra.mxu0 %v464
      %v520 = vpop.f32.mrf.mxu0
      %v521 = vadd.f32 0.0, %v520
      %v522 = vpop.f32.mrf.mxu0
      %v523 = vadd.f32 0.0, %v522
      %524 = vmatmul.bf16.gmra.mxu0 %v467
      %v525 = vpop.f32.mrf.mxu0
      %v526 = vadd.f32 0.0, %v525
      %v527 = vpop.f32.mrf.mxu0
      %v528 = vadd.f32 0.0, %v527
      %529 = vmatmul.bf16.gmra.mxu0 %v470
      %v530 = vpop.f32.mrf.mxu0
      %v531 = vadd.f32 0.0, %v530
      %v532 = vpop.f32.mrf.mxu0
      %v533 = vadd.f32 0.0, %v532
      %534 = vdwg.mxu0
      %v535 = vrot.slane %v486, 7
      %v536 = vrot.slane %v488, 7
      %v537 = vrot.slane %v491, 7
      %v538 = vrot.slane %v493, 7
      %v539 = vrot.slane %v496, 7
      %v540 = vrot.slane %v498, 7
      %v541 = vrot.slane %v501, 7
      %v542 = vrot.slane %v503, 7
      %v543 = vrot.slane %v506, 7
      %v544 = vrot.slane %v508, 7
      %v545 = vrot.slane %v511, 7
      %v546 = vrot.slane %v513, 7
      %v547 = vrot.slane %v516, 7
      %v548 = vrot.slane %v518, 7
      %v549 = vrot.slane %v521, 7
      %v550 = vrot.slane %v523, 7
      %v551 = vrot.slane %v526, 7
      %v552 = vrot.slane %v528, 7
      %v553 = vrot.slane %v531, 7
      %v554 = vrot.slane %v533, 7
      %v555 = vlaneseq
      %v556 = vshrl.u32 %v555, 7
      %vm557 = vcmp.lt.s32.totalorder %v556, 1
      %v558 = vsel %vm557, %v553, %v554
      %v559 = vsel %vm557, %v552, %v553
      %v560 = vsel %vm557, %v551, %v552
      %v561 = vsel %vm557, %v550, %v551
      %v562 = vsel %vm557, %v549, %v550
      %v563 = vsel %vm557, %v548, %v549
      %v564 = vsel %vm557, %v547, %v548
      %v565 = vsel %vm557, %v546, %v547
      %v566 = vsel %vm557, %v545, %v546
      %v567 = vsel %vm557, %v544, %v545
      %v568 = vsel %vm557, %v543, %v544
      %v569 = vsel %vm557, %v542, %v543
      %v570 = vsel %vm557, %v541, %v542
      %v571 = vsel %vm557, %v540, %v541
      %v572 = vsel %vm557, %v539, %v540
      %v573 = vsel %vm557, %v538, %v539
      %v574 = vsel %vm557, %v537, %v538
      %v575 = vsel %vm557, %v536, %v537
      %v576 = vsel %vm557, %v535, %v536
      %v577 = vsel %vm557, %v554, %v535
      %v578 = vadd.f32 %v388, %v577
      %v579 = vadd.f32 %v388, %v576
      %v580 = vadd.f32 %v388, %v575
      %v581 = vadd.f32 %v388, %v574
      %v582 = vadd.f32 %v388, %v573
      %v583 = vadd.f32 %v388, %v572
      %v584 = vadd.f32 %v388, %v571
      %v585 = vadd.f32 %v388, %v570
      %v586 = vadd.f32 %v388, %v569
      %v587 = vadd.f32 %v388, %v568
      %v588 = vadd.f32 %v388, %v567
      %v589 = vadd.f32 %v388, %v566
      %v590 = vadd.f32 %v388, %v565
      %v591 = vadd.f32 %v388, %v564
      %v592 = vadd.f32 %v388, %v563
      %v593 = vadd.f32 %v388, %v562
      %v594 = vadd.f32 %v388, %v561
      %v595 = vadd.f32 %v388, %v560
      %v596 = vadd.f32 %v388, %v559
      %v597 = vadd.f32 %v388, %v558
      %s598 = scalar_lea.vmem %s1, 4
      %v599 = vld [vmem:[%s598] sm:$0xf]
      %v601 = vsel %vm472, %v599, 0
      %603 = vmatpush.bf16.msra.mxu0 0
      %604 = vmatpush.bf16.msra.mxu0 0
      %605 = vmatpush.bf16.msra.mxu0 0
      %606 = vmatpush.bf16.msra.mxu0 0
      %607 = vmatpush.bf16.msra.mxu0 0
      %608 = vmatpush.bf16.msra.mxu0 0
      %609 = vmatpush.bf16.msra.mxu0 0
      %610 = vmatpush.bf16.msra.mxu0 %v601
      %611 = vmatmul.bf16.gmra.mxu0 %v443
      %v612 = vpop.f32.mrf.mxu0
      %v613 = vadd.f32 0.0, %v612
      %v614 = vpop.f32.mrf.mxu0
      %v615 = vadd.f32 0.0, %v614
      %616 = vmatmul.bf16.gmra.mxu0 %v446
      %v617 = vpop.f32.mrf.mxu0
      %v618 = vadd.f32 0.0, %v617
      %v619 = vpop.f32.mrf.mxu0
      %v620 = vadd.f32 0.0, %v619
      %621 = vmatmul.bf16.gmra.mxu0 %v449
      %v622 = vpop.f32.mrf.mxu0
      %v623 = vadd.f32 0.0, %v622
      %v624 = vpop.f32.mrf.mxu0
      %v625 = vadd.f32 0.0, %v624
      %626 = vmatmul.bf16.gmra.mxu0 %v452
      %v627 = vpop.f32.mrf.mxu0
      %v628 = vadd.f32 0.0, %v627
      %v629 = vpop.f32.mrf.mxu0
      %v630 = vadd.f32 0.0, %v629
      %631 = vmatmul.bf16.gmra.mxu0 %v455
      %v632 = vpop.f32.mrf.mxu0
      %v633 = vadd.f32 0.0, %v632
      %v634 = vpop.f32.mrf.mxu0
      %v635 = vadd.f32 0.0, %v634
      %636 = vmatmul.bf16.gmra.mxu0 %v458
      %v637 = vpop.f32.mrf.mxu0
      %v638 = vadd.f32 0.0, %v637
      %v639 = vpop.f32.mrf.mxu0
      %v640 = vadd.f32 0.0, %v639
      %641 = vmatmul.bf16.gmra.mxu0 %v461
      %v642 = vpop.f32.mrf.mxu0
      %v643 = vadd.f32 0.0, %v642
      %v644 = vpop.f32.mrf.mxu0
      %v645 = vadd.f32 0.0, %v644
      %646 = vmatmul.bf16.gmra.mxu0 %v464
      %v647 = vpop.f32.mrf.mxu0
      %v648 = vadd.f32 0.0, %v647
      %v649 = vpop.f32.mrf.mxu0
      %v650 = vadd.f32 0.0, %v649
      %651 = vmatmul.bf16.gmra.mxu0 %v467
      %v652 = vpop.f32.mrf.mxu0
      %v653 = vadd.f32 0.0, %v652
      %v654 = vpop.f32.mrf.mxu0
      %v655 = vadd.f32 0.0, %v654
      %656 = vmatmul.bf16.gmra.mxu0 %v470
      %v657 = vpop.f32.mrf.mxu0
      %v658 = vadd.f32 0.0, %v657
      %v659 = vpop.f32.mrf.mxu0
      %v660 = vadd.f32 0.0, %v659
      %661 = vdwg.mxu0
      %v662 = vadd.f32 %v578, %v613
      %v663 = vadd.f32 %v579, %v615
      %v664 = vadd.f32 %v580, %v618
      %v665 = vadd.f32 %v581, %v620
      %v666 = vadd.f32 %v582, %v623
      %v667 = vadd.f32 %v583, %v625
      %v668 = vadd.f32 %v584, %v628
      %v669 = vadd.f32 %v585, %v630
      %v670 = vadd.f32 %v586, %v633
      %v671 = vadd.f32 %v587, %v635
      %v672 = vadd.f32 %v588, %v638
      %v673 = vadd.f32 %v589, %v640
      %v674 = vadd.f32 %v590, %v643
      %v675 = vadd.f32 %v591, %v645
      %v676 = vadd.f32 %v592, %v648
      %v677 = vadd.f32 %v593, %v650
      %v678 = vadd.f32 %v594, %v653
      %v679 = vadd.f32 %v595, %v655
      %v680 = vadd.f32 %v596, %v658
      %v681 = vadd.f32 %v597, %v660
      %s682 = scalar_lea.vmem %s1, 8
      %v683 = vld [vmem:[%s682] sm:$0xf]
      %v685 = vsel %vm472, %v683, 0
      %687 = vmatpush.bf16.msra.mxu0 0
      %688 = vmatpush.bf16.msra.mxu0 0
      %689 = vmatpush.bf16.msra.mxu0 0
      %690 = vmatpush.bf16.msra.mxu0 0
      %691 = vmatpush.bf16.msra.mxu0 0
      %692 = vmatpush.bf16.msra.mxu0 0
      %693 = vmatpush.bf16.msra.mxu0 0
      %694 = vmatpush.bf16.msra.mxu0 %v685
      %695 = vmatmul.bf16.gmra.mxu0 %v443
      %v696 = vpop.f32.mrf.mxu0
      %v697 = vadd.f32 0.0, %v696
      %v698 = vpop.f32.mrf.mxu0
      %v699 = vadd.f32 0.0, %v698
      %700 = vmatmul.bf16.gmra.mxu0 %v446
      %v701 = vpop.f32.mrf.mxu0
      %v702 = vadd.f32 0.0, %v701
      %v703 = vpop.f32.mrf.mxu0
      %v704 = vadd.f32 0.0, %v703
      %705 = vmatmul.bf16.gmra.mxu0 %v449
      %v706 = vpop.f32.mrf.mxu0
      %v707 = vadd.f32 0.0, %v706
      %v708 = vpop.f32.mrf.mxu0
      %v709 = vadd.f32 0.0, %v708
      %710 = vmatmul.bf16.gmra.mxu0 %v452
      %v711 = vpop.f32.mrf.mxu0
      %v712 = vadd.f32 0.0, %v711
      %v713 = vpop.f32.mrf.mxu0
      %v714 = vadd.f32 0.0, %v713
      %715 = vmatmul.bf16.gmra.mxu0 %v455
      %v716 = vpop.f32.mrf.mxu0
      %v717 = vadd.f32 0.0, %v716
      %v718 = vpop.f32.mrf.mxu0
      %v719 = vadd.f32 0.0, %v718
      %720 = vmatmul.bf16.gmra.mxu0 %v458
      %v721 = vpop.f32.mrf.mxu0
      %v722 = vadd.f32 0.0, %v721
      %v723 = vpop.f32.mrf.mxu0
      %v724 = vadd.f32 0.0, %v723
      %725 = vmatmul.bf16.gmra.mxu0 %v461
      %v726 = vpop.f32.mrf.mxu0
      %v727 = vadd.f32 0.0, %v726
      %v728 = vpop.f32.mrf.mxu0
      %v729 = vadd.f32 0.0, %v728
      %730 = vmatmul.bf16.gmra.mxu0 %v464
      %v731 = vpop.f32.mrf.mxu0
      %v732 = vadd.f32 0.0, %v731
      %v733 = vpop.f32.mrf.mxu0
      %v734 = vadd.f32 0.0, %v733
      %735 = vmatmul.bf16.gmra.mxu0 %v467
      %v736 = vpop.f32.mrf.mxu0
      %v737 = vadd.f32 0.0, %v736
      %v738 = vpop.f32.mrf.mxu0
      %v739 = vadd.f32 0.0, %v738
      %740 = vmatmul.bf16.gmra.mxu0 %v470
      %v741 = vpop.f32.mrf.mxu0
      %v742 = vadd.f32 0.0, %v741
      %v743 = vpop.f32.mrf.mxu0
      %v744 = vadd.f32 0.0, %v743
      %745 = vdwg.mxu0
      %v746 = vrot.slane %v697, 1
      %v747 = vrot.slane %v699, 1
      %v748 = vrot.slane %v702, 1
      %v749 = vrot.slane %v704, 1
      %v750 = vrot.slane %v707, 1
      %v751 = vrot.slane %v709, 1
      %v752 = vrot.slane %v712, 1
      %v753 = vrot.slane %v714, 1
      %v754 = vrot.slane %v717, 1
      %v755 = vrot.slane %v719, 1
      %v756 = vrot.slane %v722, 1
      %v757 = vrot.slane %v724, 1
      %v758 = vrot.slane %v727, 1
      %v759 = vrot.slane %v729, 1
      %v760 = vrot.slane %v732, 1
      %v761 = vrot.slane %v734, 1
      %v762 = vrot.slane %v737, 1
      %v763 = vrot.slane %v739, 1
      %v764 = vrot.slane %v742, 1
      %v765 = vrot.slane %v744, 1
      %vm766 = vcmp.lt.s32.totalorder %v556, 7
      %v767 = vsel %vm766, %v764, %v765
      %v768 = vsel %vm766, %v763, %v764
      %v769 = vsel %vm766, %v762, %v763
      %v770 = vsel %vm766, %v761, %v762
      %v771 = vsel %vm766, %v760, %v761
      %v772 = vsel %vm766, %v759, %v760
      %v773 = vsel %vm766, %v758, %v759
      %v774 = vsel %vm766, %v757, %v758
      %v775 = vsel %vm766, %v756, %v757
      %v776 = vsel %vm766, %v755, %v756
      %v777 = vsel %vm766, %v754, %v755
      %v778 = vsel %vm766, %v753, %v754
      %v779 = vsel %vm766, %v752, %v753
      %v780 = vsel %vm766, %v751, %v752
      %v781 = vsel %vm766, %v750, %v751
      %v782 = vsel %vm766, %v749, %v750
      %v783 = vsel %vm766, %v748, %v749
      %v784 = vsel %vm766, %v747, %v748
      %v785 = vsel %vm766, %v746, %v747
      %v786 = vsel %vm766, %v765, %v746
      %v787 = vadd.f32 %v662, %v785
      %v788 = vadd.f32 %v663, %v784
      %v789 = vadd.f32 %v664, %v783
      %v790 = vadd.f32 %v665, %v782
      %v791 = vadd.f32 %v666, %v781
      %v792 = vadd.f32 %v667, %v780
      %v793 = vadd.f32 %v668, %v779
      %v794 = vadd.f32 %v669, %v778
      %v795 = vadd.f32 %v670, %v777
      %v796 = vadd.f32 %v671, %v776
      %v797 = vadd.f32 %v672, %v775
      %v798 = vadd.f32 %v673, %v774
      %v799 = vadd.f32 %v674, %v773
      %v800 = vadd.f32 %v675, %v772
      %v801 = vadd.f32 %v676, %v771
      %v802 = vadd.f32 %v677, %v770
      %v803 = vadd.f32 %v678, %v769
      %v804 = vadd.f32 %v679, %v768
      %v805 = vadd.f32 %v680, %v767
      %v806 = vadd.f32 %v681, %v786
      %s807 = scalar_lea.vmem %s1, 12
      %v808 = vld [vmem:[%s807] sm:$0xf]
      %v813 = vunpack.c.l.b16 %v382
      %v814 = vunpack.c.l.b16 %v383
      %v815 = vunpack.c.l.b16 %v384
      %v816 = vunpack.c.l.b16 %v385
      %v817 = vpack.c.b16 %v814, %v813
      %v818 = vpack.c.b16 %v816, %v815
      %v820 = vsel %vm441, %v817, 0
      %v823 = vsel %vm441, %v818, 0
      %v826 = vsel %vm472, %v808, 0
      %828 = vmatpush.bf16.msra.mxu0 0
      %829 = vmatpush.bf16.msra.mxu0 0
      %830 = vmatpush.bf16.msra.mxu0 0
      %831 = vmatpush.bf16.msra.mxu0 0
      %832 = vmatpush.bf16.msra.mxu0 0
      %833 = vmatpush.bf16.msra.mxu0 0
      %834 = vmatpush.bf16.msra.mxu0 0
      %835 = vmatpush.bf16.msra.mxu0 %v826
      %836 = vmatmul.bf16.gmra.mxu0 %v449
      %v837 = vpop.f32.mrf.mxu0
      %v838 = vadd.f32 0.0, %v837
      %v839 = vpop.f32.mrf.mxu0
      %v840 = vadd.f32 0.0, %v839
      %841 = vmatmul.bf16.gmra.mxu0 %v452
      %v842 = vpop.f32.mrf.mxu0
      %v843 = vadd.f32 0.0, %v842
      %v844 = vpop.f32.mrf.mxu0
      %v845 = vadd.f32 0.0, %v844
      %846 = vmatmul.bf16.gmra.mxu0 %v455
      %v847 = vpop.f32.mrf.mxu0
      %v848 = vadd.f32 0.0, %v847
      %v849 = vpop.f32.mrf.mxu0
      %v850 = vadd.f32 0.0, %v849
      %851 = vmatmul.bf16.gmra.mxu0 %v458
      %v852 = vpop.f32.mrf.mxu0
      %v853 = vadd.f32 0.0, %v852
      %v854 = vpop.f32.mrf.mxu0
      %v855 = vadd.f32 0.0, %v854
      %856 = vmatmul.bf16.gmra.mxu0 %v461
      %v857 = vpop.f32.mrf.mxu0
      %v858 = vadd.f32 0.0, %v857
      %v859 = vpop.f32.mrf.mxu0
      %v860 = vadd.f32 0.0, %v859
      %861 = vmatmul.bf16.gmra.mxu0 %v464
      %v862 = vpop.f32.mrf.mxu0
      %v863 = vadd.f32 0.0, %v862
      %v864 = vpop.f32.mrf.mxu0
      %v865 = vadd.f32 0.0, %v864
      %866 = vmatmul.bf16.gmra.mxu0 %v467
      %v867 = vpop.f32.mrf.mxu0
      %v868 = vadd.f32 0.0, %v867
      %v869 = vpop.f32.mrf.mxu0
      %v870 = vadd.f32 0.0, %v869
      %871 = vmatmul.bf16.gmra.mxu0 %v470
      %v872 = vpop.f32.mrf.mxu0
      %v873 = vadd.f32 0.0, %v872
      %v874 = vpop.f32.mrf.mxu0
      %v875 = vadd.f32 0.0, %v874
      %876 = vmatmul.bf16.gmra.mxu0 %v820
      %v877 = vpop.f32.mrf.mxu0
      %v878 = vadd.f32 0.0, %v877
      %v879 = vpop.f32.mrf.mxu0
      %v880 = vadd.f32 0.0, %v879
      %881 = vmatmul.bf16.gmra.mxu0 %v823
      %v882 = vpop.f32.mrf.mxu0
      %v883 = vadd.f32 0.0, %v882
      %v884 = vpop.f32.mrf.mxu0
      %v885 = vadd.f32 0.0, %v884
      %886 = vdwg.mxu0
      %v887 = vrot.slane %v838, 7
      %v888 = vrot.slane %v840, 7
      %v889 = vrot.slane %v843, 7
      %v890 = vrot.slane %v845, 7
      %v891 = vrot.slane %v848, 7
      %v892 = vrot.slane %v850, 7
      %v893 = vrot.slane %v853, 7
      %v894 = vrot.slane %v855, 7
      %v895 = vrot.slane %v858, 7
      %v896 = vrot.slane %v860, 7
      %v897 = vrot.slane %v863, 7
      %v898 = vrot.slane %v865, 7
      %v899 = vrot.slane %v868, 7
      %v900 = vrot.slane %v870, 7
      %v901 = vrot.slane %v873, 7
      %v902 = vrot.slane %v875, 7
      %v903 = vrot.slane %v878, 7
      %v904 = vrot.slane %v880, 7
      %v905 = vrot.slane %v883, 7
      %v906 = vrot.slane %v885, 7
      %v907 = vsel %vm557, %v905, %v906
      %v908 = vsel %vm557, %v904, %v905
      %v909 = vsel %vm557, %v903, %v904
      %v910 = vsel %vm557, %v902, %v903
      %v911 = vsel %vm557, %v901, %v902
      %v912 = vsel %vm557, %v900, %v901
      %v913 = vsel %vm557, %v899, %v900
      %v914 = vsel %vm557, %v898, %v899
      %v915 = vsel %vm557, %v897, %v898
      %v916 = vsel %vm557, %v896, %v897
      %v917 = vsel %vm557, %v895, %v896
      %v918 = vsel %vm557, %v894, %v895
      %v919 = vsel %vm557, %v893, %v894
      %v920 = vsel %vm557, %v892, %v893
      %v921 = vsel %vm557, %v891, %v892
      %v922 = vsel %vm557, %v890, %v891
      %v923 = vsel %vm557, %v889, %v890
      %v924 = vsel %vm557, %v888, %v889
      %v925 = vsel %vm557, %v887, %v888
      %v926 = vsel %vm557, %v906, %v887
      %v927 = vadd.f32 %v787, %v926
      %v928 = vadd.f32 %v788, %v925
      %v929 = vadd.f32 %v789, %v924
      %v930 = vadd.f32 %v790, %v923
      %v931 = vadd.f32 %v791, %v922
      %v932 = vadd.f32 %v792, %v921
      %v933 = vadd.f32 %v793, %v920
      %v934 = vadd.f32 %v794, %v919
      %v935 = vadd.f32 %v795, %v918
      %v936 = vadd.f32 %v796, %v917
      %v937 = vadd.f32 %v797, %v916
      %v938 = vadd.f32 %v798, %v915
      %v939 = vadd.f32 %v799, %v914
      %v940 = vadd.f32 %v800, %v913
      %v941 = vadd.f32 %v801, %v912
      %v942 = vadd.f32 %v802, %v911
      %v943 = vadd.f32 %v803, %v910
      %v944 = vadd.f32 %v804, %v909
      %v945 = vadd.f32 %v805, %v908
      %v946 = vadd.f32 %v806, %v907
      %s947 = scalar_lea.vmem %s1, 16
      %v948 = vld [vmem:[%s947] sm:$0xf]
      %v950 = vsel %vm472, %v948, 0
      %952 = vmatpush.bf16.msra.mxu0 0
      %953 = vmatpush.bf16.msra.mxu0 0
      %954 = vmatpush.bf16.msra.mxu0 0
      %955 = vmatpush.bf16.msra.mxu0 0
      %956 = vmatpush.bf16.msra.mxu0 0
      %957 = vmatpush.bf16.msra.mxu0 0
      %958 = vmatpush.bf16.msra.mxu0 0
      %959 = vmatpush.bf16.msra.mxu0 %v950
      %960 = vmatmul.bf16.gmra.mxu0 %v449
      %v961 = vpop.f32.mrf.mxu0
      %v962 = vadd.f32 0.0, %v961
      %v963 = vpop.f32.mrf.mxu0
      %v964 = vadd.f32 0.0, %v963
      %965 = vmatmul.bf16.gmra.mxu0 %v452
      %v966 = vpop.f32.mrf.mxu0
      %v967 = vadd.f32 0.0, %v966
      %v968 = vpop.f32.mrf.mxu0
      %v969 = vadd.f32 0.0, %v968
      %970 = vmatmul.bf16.gmra.mxu0 %v455
      %v971 = vpop.f32.mrf.mxu0
      %v972 = vadd.f32 0.0, %v971
      %v973 = vpop.f32.mrf.mxu0
      %v974 = vadd.f32 0.0, %v973
      %975 = vmatmul.bf16.gmra.mxu0 %v458
      %v976 = vpop.f32.mrf.mxu0
      %v977 = vadd.f32 0.0, %v976
      %v978 = vpop.f32.mrf.mxu0
      %v979 = vadd.f32 0.0, %v978
      %980 = vmatmul.bf16.gmra.mxu0 %v461
      %v981 = vpop.f32.mrf.mxu0
      %v982 = vadd.f32 0.0, %v981
      %v983 = vpop.f32.mrf.mxu0
      %v984 = vadd.f32 0.0, %v983
      %985 = vmatmul.bf16.gmra.mxu0 %v464
      %v986 = vpop.f32.mrf.mxu0
      %v987 = vadd.f32 0.0, %v986
      %v988 = vpop.f32.mrf.mxu0
      %v989 = vadd.f32 0.0, %v988
      %990 = vmatmul.bf16.gmra.mxu0 %v467
      %v991 = vpop.f32.mrf.mxu0
      %v992 = vadd.f32 0.0, %v991
      %v993 = vpop.f32.mrf.mxu0
      %v994 = vadd.f32 0.0, %v993
      %995 = vmatmul.bf16.gmra.mxu0 %v470
      %v996 = vpop.f32.mrf.mxu0
      %v997 = vadd.f32 0.0, %v996
      %v998 = vpop.f32.mrf.mxu0
      %v999 = vadd.f32 0.0, %v998
      %1000 = vmatmul.bf16.gmra.mxu0 %v820
      %v1001 = vpop.f32.mrf.mxu0
      %v1002 = vadd.f32 0.0, %v1001
      %v1003 = vpop.f32.mrf.mxu0
      %v1004 = vadd.f32 0.0, %v1003
      %1005 = vmatmul.bf16.gmra.mxu0 %v823
      %v1006 = vpop.f32.mrf.mxu0
      %v1007 = vadd.f32 0.0, %v1006
      %v1008 = vpop.f32.mrf.mxu0
      %v1009 = vadd.f32 0.0, %v1008
      %1010 = vdwg.mxu0
      %v1011 = vadd.f32 %v927, %v962
      %v1012 = vadd.f32 %v928, %v964
      %v1013 = vadd.f32 %v929, %v967
      %v1014 = vadd.f32 %v930, %v969
      %v1015 = vadd.f32 %v931, %v972
      %v1016 = vadd.f32 %v932, %v974
      %v1017 = vadd.f32 %v933, %v977
      %v1018 = vadd.f32 %v934, %v979
      %v1019 = vadd.f32 %v935, %v982
      %v1020 = vadd.f32 %v936, %v984
      %v1021 = vadd.f32 %v937, %v987
      %v1022 = vadd.f32 %v938, %v989
      %v1023 = vadd.f32 %v939, %v992
      %v1024 = vadd.f32 %v940, %v994
      %v1025 = vadd.f32 %v941, %v997
      %v1026 = vadd.f32 %v942, %v999
      %v1027 = vadd.f32 %v943, %v1002
      %v1028 = vadd.f32 %v944, %v1004
      %v1029 = vadd.f32 %v945, %v1007
      %v1030 = vadd.f32 %v946, %v1009
      %s1031 = scalar_lea.vmem %s1, 20
      %v1032 = vld [vmem:[%s1031] sm:$0xf]
      %v1034 = vsel %vm472, %v1032, 0
      %1036 = vmatpush.bf16.msra.mxu0 0
      %1037 = vmatpush.bf16.msra.mxu0 0
      %1038 = vmatpush.bf16.msra.mxu0 0
      %1039 = vmatpush.bf16.msra.mxu0 0
      %1040 = vmatpush.bf16.msra.mxu0 0
      %1041 = vmatpush.bf16.msra.mxu0 0
      %1042 = vmatpush.bf16.msra.mxu0 0
      %1043 = vmatpush.bf16.msra.mxu0 %v1034
      %1044 = vmatmul.bf16.gmra.mxu0 %v449
      %v1045 = vpop.f32.mrf.mxu0
      %v1046 = vadd.f32 0.0, %v1045
      %v1047 = vpop.f32.mrf.mxu0
      %v1048 = vadd.f32 0.0, %v1047
      %1049 = vmatmul.bf16.gmra.mxu0 %v452
      %v1050 = vpop.f32.mrf.mxu0
      %v1051 = vadd.f32 0.0, %v1050
      %v1052 = vpop.f32.mrf.mxu0
      %v1053 = vadd.f32 0.0, %v1052
      %1054 = vmatmul.bf16.gmra.mxu0 %v455
      %v1055 = vpop.f32.mrf.mxu0
      %v1056 = vadd.f32 0.0, %v1055
      %v1057 = vpop.f32.mrf.mxu0
      %v1058 = vadd.f32 0.0, %v1057
      %1059 = vmatmul.bf16.gmra.mxu0 %v458
      %v1060 = vpop.f32.mrf.mxu0
      %v1061 = vadd.f32 0.0, %v1060
      %v1062 = vpop.f32.mrf.mxu0
      %v1063 = vadd.f32 0.0, %v1062
      %1064 = vmatmul.bf16.gmra.mxu0 %v461
      %v1065 = vpop.f32.mrf.mxu0
      %v1066 = vadd.f32 0.0, %v1065
      %v1067 = vpop.f32.mrf.mxu0
      %v1068 = vadd.f32 0.0, %v1067
      %1069 = vmatmul.bf16.gmra.mxu0 %v464
      %v1070 = vpop.f32.mrf.mxu0
      %v1071 = vadd.f32 0.0, %v1070
      %v1072 = vpop.f32.mrf.mxu0
      %v1073 = vadd.f32 0.0, %v1072
      %1074 = vmatmul.bf16.gmra.mxu0 %v467
      %v1075 = vpop.f32.mrf.mxu0
      %v1076 = vadd.f32 0.0, %v1075
      %v1077 = vpop.f32.mrf.mxu0
      %v1078 = vadd.f32 0.0, %v1077
      %1079 = vmatmul.bf16.gmra.mxu0 %v470
      %v1080 = vpop.f32.mrf.mxu0
      %v1081 = vadd.f32 0.0, %v1080
      %v1082 = vpop.f32.mrf.mxu0
      %v1083 = vadd.f32 0.0, %v1082
      %1084 = vmatmul.bf16.gmra.mxu0 %v820
      %v1085 = vpop.f32.mrf.mxu0
      %v1086 = vadd.f32 0.0, %v1085
      %v1087 = vpop.f32.mrf.mxu0
      %v1088 = vadd.f32 0.0, %v1087
      %1089 = vmatmul.bf16.gmra.mxu0 %v823
      %v1090 = vpop.f32.mrf.mxu0
      %v1091 = vadd.f32 0.0, %v1090
      %v1092 = vpop.f32.mrf.mxu0
      %v1093 = vadd.f32 0.0, %v1092
      %1094 = vdwg.mxu0
      %v1095 = vrot.slane %v1046, 1
      %v1096 = vrot.slane %v1048, 1
      %v1097 = vrot.slane %v1051, 1
      %v1098 = vrot.slane %v1053, 1
      %v1099 = vrot.slane %v1056, 1
      %v1100 = vrot.slane %v1058, 1
      %v1101 = vrot.slane %v1061, 1
      %v1102 = vrot.slane %v1063, 1
      %v1103 = vrot.slane %v1066, 1
      %v1104 = vrot.slane %v1068, 1
      %v1105 = vrot.slane %v1071, 1
      %v1106 = vrot.slane %v1073, 1
      %v1107 = vrot.slane %v1076, 1
      %v1108 = vrot.slane %v1078, 1
      %v1109 = vrot.slane %v1081, 1
      %v1110 = vrot.slane %v1083, 1
      %v1111 = vrot.slane %v1086, 1
      %v1112 = vrot.slane %v1088, 1
      %v1113 = vrot.slane %v1091, 1
      %v1114 = vrot.slane %v1093, 1
      %v1115 = vsel %vm766, %v1113, %v1114
      %v1116 = vsel %vm766, %v1112, %v1113
      %v1117 = vsel %vm766, %v1111, %v1112
      %v1118 = vsel %vm766, %v1110, %v1111
      %v1119 = vsel %vm766, %v1109, %v1110
      %v1120 = vsel %vm766, %v1108, %v1109
      %v1121 = vsel %vm766, %v1107, %v1108
      %v1122 = vsel %vm766, %v1106, %v1107
      %v1123 = vsel %vm766, %v1105, %v1106
      %v1124 = vsel %vm766, %v1104, %v1105
      %v1125 = vsel %vm766, %v1103, %v1104
      %v1126 = vsel %vm766, %v1102, %v1103
      %v1127 = vsel %vm766, %v1101, %v1102
      %v1128 = vsel %vm766, %v1100, %v1101
      %v1129 = vsel %vm766, %v1099, %v1100
      %v1130 = vsel %vm766, %v1098, %v1099
      %v1131 = vsel %vm766, %v1097, %v1098
      %v1132 = vsel %vm766, %v1096, %v1097
      %v1133 = vsel %vm766, %v1095, %v1096
      %v1134 = vsel %vm766, %v1114, %v1095
      %v1135 = vadd.f32 %v1011, %v1133
      %v1136 = vadd.f32 %v1012, %v1132
      %v1137 = vadd.f32 %v1013, %v1131
      %v1138 = vadd.f32 %v1014, %v1130
      %v1139 = vadd.f32 %v1015, %v1129
      %v1140 = vadd.f32 %v1016, %v1128
      %v1141 = vadd.f32 %v1017, %v1127
      %v1142 = vadd.f32 %v1018, %v1126
      %v1143 = vadd.f32 %v1019, %v1125
      %v1144 = vadd.f32 %v1020, %v1124
      %v1145 = vadd.f32 %v1021, %v1123
      %v1146 = vadd.f32 %v1022, %v1122
      %v1147 = vadd.f32 %v1023, %v1121
      %v1148 = vadd.f32 %v1024, %v1120
      %v1149 = vadd.f32 %v1025, %v1119
      %v1150 = vadd.f32 %v1026, %v1118
      %v1151 = vadd.f32 %v1027, %v1117
      %v1152 = vadd.f32 %v1028, %v1116
      %v1153 = vadd.f32 %v1029, %v1115
      %v1154 = vadd.f32 %v1030, %v1134
      %vm1155 = vcmp.gt.f32.partialorder %v1135, 0.0
      %vm1156 = vcmp.gt.f32.partialorder %v1136, 0.0
      %vm1157 = vcmp.gt.f32.partialorder %v1137, 0.0
      %vm1158 = vcmp.gt.f32.partialorder %v1138, 0.0
      %vm1159 = vcmp.gt.f32.partialorder %v1139, 0.0
      %vm1160 = vcmp.gt.f32.partialorder %v1140, 0.0
      %vm1161 = vcmp.gt.f32.partialorder %v1141, 0.0
      %vm1162 = vcmp.gt.f32.partialorder %v1142, 0.0
      %vm1163 = vcmp.gt.f32.partialorder %v1143, 0.0
      %vm1164 = vcmp.gt.f32.partialorder %v1144, 0.0
      %vm1165 = vcmp.gt.f32.partialorder %v1145, 0.0
      %vm1166 = vcmp.gt.f32.partialorder %v1146, 0.0
      %vm1167 = vcmp.gt.f32.partialorder %v1147, 0.0
      %vm1168 = vcmp.gt.f32.partialorder %v1148, 0.0
      %vm1169 = vcmp.gt.f32.partialorder %v1149, 0.0
      %vm1170 = vcmp.gt.f32.partialorder %v1150, 0.0
      %vm1171 = vcmp.gt.f32.partialorder %v1151, 0.0
      %vm1172 = vcmp.gt.f32.partialorder %v1152, 0.0
      %vm1173 = vcmp.gt.f32.partialorder %v1153, 0.0
      %vm1174 = vcmp.gt.f32.partialorder %v1154, 0.0
      %v1175 = vmul.f32 %v1135, 0.2
      %v1176 = vmul.f32 %v1136, 0.2
      %v1177 = vmul.f32 %v1137, 0.2
      %v1178 = vmul.f32 %v1138, 0.2
      %v1179 = vmul.f32 %v1139, 0.2
      %v1180 = vmul.f32 %v1140, 0.2
      %v1181 = vmul.f32 %v1141, 0.2
      %v1182 = vmul.f32 %v1142, 0.2
      %v1183 = vmul.f32 %v1143, 0.2
      %v1184 = vmul.f32 %v1144, 0.2
      %v1185 = vmul.f32 %v1145, 0.2
      %v1186 = vmul.f32 %v1146, 0.2
      %v1187 = vmul.f32 %v1147, 0.2
      %v1188 = vmul.f32 %v1148, 0.2
      %v1189 = vmul.f32 %v1149, 0.2
      %v1190 = vmul.f32 %v1150, 0.2
      %v1191 = vmul.f32 %v1151, 0.2
      %v1192 = vmul.f32 %v1152, 0.2
      %v1193 = vmul.f32 %v1153, 0.2
      %v1194 = vmul.f32 %v1154, 0.2
      %v1195 = vsel %vm1155, %v1135, %v1175
      %v1196 = vsel %vm1156, %v1136, %v1176
      %v1197 = vsel %vm1157, %v1137, %v1177
      %v1198 = vsel %vm1158, %v1138, %v1178
      %v1199 = vsel %vm1159, %v1139, %v1179
      %v1200 = vsel %vm1160, %v1140, %v1180
      %v1201 = vsel %vm1161, %v1141, %v1181
      %v1202 = vsel %vm1162, %v1142, %v1182
      %v1203 = vsel %vm1163, %v1143, %v1183
      %v1204 = vsel %vm1164, %v1144, %v1184
      %v1205 = vsel %vm1165, %v1145, %v1185
      %v1206 = vsel %vm1166, %v1146, %v1186
      %v1207 = vsel %vm1167, %v1147, %v1187
      %v1208 = vsel %vm1168, %v1148, %v1188
      %v1209 = vsel %vm1169, %v1149, %v1189
      %v1210 = vsel %vm1170, %v1150, %v1190
      %v1211 = vsel %vm1171, %v1151, %v1191
      %v1212 = vsel %vm1172, %v1152, %v1192
      %v1213 = vsel %vm1173, %v1153, %v1193
      %v1214 = vsel %vm1174, %v1154, %v1194
      %v1215 = vmul.f32 %v1195, %v1195
      %v1216 = vmul.f32 %v1196, %v1196
      %v1217 = vmul.f32 %v1197, %v1197
      %v1218 = vmul.f32 %v1198, %v1198
      %v1219 = vmul.f32 %v1199, %v1199
      %v1220 = vmul.f32 %v1200, %v1200
      %v1221 = vmul.f32 %v1201, %v1201
      %v1222 = vmul.f32 %v1202, %v1202
      %v1223 = vmul.f32 %v1203, %v1203
      %v1224 = vmul.f32 %v1204, %v1204
      %v1225 = vmul.f32 %v1205, %v1205
      %v1226 = vmul.f32 %v1206, %v1206
      %v1227 = vmul.f32 %v1207, %v1207
      %v1228 = vmul.f32 %v1208, %v1208
      %v1229 = vmul.f32 %v1209, %v1209
      %v1230 = vmul.f32 %v1210, %v1210
      %v1231 = vmul.f32 %v1211, %v1211
      %v1232 = vmul.f32 %v1212, %v1212
      %v1233 = vmul.f32 %v1213, %v1213
      %v1234 = vmul.f32 %v1214, %v1214
      %vm1235 = vcmask 130048
      %v1236 = vsel %vm1235, %v1215, 0.0
      %1237 = vadd.xlane.f32.xlu0 %v1236
      %v1238 = vpop.xlane.xlu0 %1237
      %v1239 = vsel %vm1235, %v1216, 0.0
      %1240 = vadd.xlane.f32.xlu0 %v1239
      %v1241 = vpop.xlane.xlu0 %1240
      %v1242 = vsel %vm1235, %v1217, 0.0
      %1243 = vadd.xlane.f32.xlu0 %v1242
      %v1244 = vpop.xlane.xlu0 %1243
      %v1245 = vsel %vm1235, %v1218, 0.0
      %1246 = vadd.xlane.f32.xlu0 %v1245
      %v1247 = vpop.xlane.xlu0 %1246
      %v1248 = vsel %vm1235, %v1219, 0.0
      %1249 = vadd.xlane.f32.xlu0 %v1248
      %v1250 = vpop.xlane.xlu0 %1249
      %v1251 = vsel %vm1235, %v1220, 0.0
      %1252 = vadd.xlane.f32.xlu0 %v1251
      %v1253 = vpop.xlane.xlu0 %1252
      %v1254 = vsel %vm1235, %v1221, 0.0
      %1255 = vadd.xlane.f32.xlu0 %v1254
      %v1256 = vpop.xlane.xlu0 %1255
      %v1257 = vsel %vm1235, %v1222, 0.0
      %1258 = vadd.xlane.f32.xlu0 %v1257
      %v1259 = vpop.xlane.xlu0 %1258
      %v1260 = vsel %vm1235, %v1223, 0.0
      %1261 = vadd.xlane.f32.xlu0 %v1260
      %v1262 = vpop.xlane.xlu0 %1261
      %v1263 = vsel %vm1235, %v1224, 0.0
      %1264 = vadd.xlane.f32.xlu0 %v1263
      %v1265 = vpop.xlane.xlu0 %1264
      %v1266 = vsel %vm1235, %v1225, 0.0
      %1267 = vadd.xlane.f32.xlu0 %v1266
      %v1268 = vpop.xlane.xlu0 %1267
      %v1269 = vsel %vm1235, %v1226, 0.0
      %1270 = vadd.xlane.f32.xlu0 %v1269
      %v1271 = vpop.xlane.xlu0 %1270
      %v1272 = vsel %vm1235, %v1227, 0.0
      %1273 = vadd.xlane.f32.xlu0 %v1272
      %v1274 = vpop.xlane.xlu0 %1273
      %v1275 = vsel %vm1235, %v1228, 0.0
      %1276 = vadd.xlane.f32.xlu0 %v1275
      %v1277 = vpop.xlane.xlu0 %1276
      %v1278 = vsel %vm1235, %v1229, 0.0
      %1279 = vadd.xlane.f32.xlu0 %v1278
      %v1280 = vpop.xlane.xlu0 %1279
      %v1281 = vsel %vm1235, %v1230, 0.0
      %1282 = vadd.xlane.f32.xlu0 %v1281
      %v1283 = vpop.xlane.xlu0 %1282
      %v1284 = vsel %vm1235, %v1231, 0.0
      %1285 = vadd.xlane.f32.xlu0 %v1284
      %v1286 = vpop.xlane.xlu0 %1285
      %v1287 = vsel %vm1235, %v1232, 0.0
      %1288 = vadd.xlane.f32.xlu0 %v1287
      %v1289 = vpop.xlane.xlu0 %1288
      %v1290 = vsel %vm1235, %v1233, 0.0
      %1291 = vadd.xlane.f32.xlu0 %v1290
      %v1292 = vpop.xlane.xlu0 %1291
      %v1293 = vsel %vm1235, %v1234, 0.0
      %1294 = vadd.xlane.f32.xlu0 %v1293
      %v1295 = vpop.xlane.xlu0 %1294
      %v1296 = vrcp.pop 16.0
      %v1297 = vmul.f32 16.0, %v1296
      %v1298 = vsub.f32 1.0, %v1297
      %v1299 = vmul.f32 %v1296, %v1298
      %v1300 = vadd.f32 %v1296, %v1299
      %vm1301 = vweird.f32 %v1296
      %v1302 = vsel %vm1301, %v1296, %v1300
      %v1303 = vmul.f32 %v1238, %v1302
      %v1304 = vmul.f32 %v1241, %v1302
      %v1305 = vmul.f32 %v1244, %v1302
      %v1306 = vmul.f32 %v1247, %v1302
      %v1307 = vmul.f32 %v1250, %v1302
      %v1308 = vmul.f32 %v1253, %v1302
      %v1309 = vmul.f32 %v1256, %v1302
      %v1310 = vmul.f32 %v1259, %v1302
      %v1311 = vmul.f32 %v1262, %v1302
      %v1312 = vmul.f32 %v1265, %v1302
      %v1313 = vmul.f32 %v1268, %v1302
      %v1314 = vmul.f32 %v1271, %v1302
      %v1315 = vmul.f32 %v1274, %v1302
      %v1316 = vmul.f32 %v1277, %v1302
      %v1317 = vmul.f32 %v1280, %v1302
      %v1318 = vmul.f32 %v1283, %v1302
      %v1319 = vmul.f32 %v1286, %v1302
      %v1320 = vmul.f32 %v1289, %v1302
      %v1321 = vmul.f32 %v1292, %v1302
      %v1322 = vmul.f32 %v1295, %v1302
      %v1323 = vadd.f32 %v1303, 1e-08
      %v1324 = vadd.f32 %v1304, 1e-08
      %v1325 = vadd.f32 %v1305, 1e-08
      %v1326 = vadd.f32 %v1306, 1e-08
      %v1327 = vadd.f32 %v1307, 1e-08
      %v1328 = vadd.f32 %v1308, 1e-08
      %v1329 = vadd.f32 %v1309, 1e-08
      %v1330 = vadd.f32 %v1310, 1e-08
      %v1331 = vadd.f32 %v1311, 1e-08
      %v1332 = vadd.f32 %v1312, 1e-08
      %v1333 = vadd.f32 %v1313, 1e-08
      %v1334 = vadd.f32 %v1314, 1e-08
      %v1335 = vadd.f32 %v1315, 1e-08
      %v1336 = vadd.f32 %v1316, 1e-08
      %v1337 = vadd.f32 %v1317, 1e-08
      %v1338 = vadd.f32 %v1318, 1e-08
      %v1339 = vadd.f32 %v1319, 1e-08
      %v1340 = vadd.f32 %v1320, 1e-08
      %v1341 = vadd.f32 %v1321, 1e-08
      %v1342 = vadd.f32 %v1322, 1e-08
      %v1343 = vrsqrt.pop %v1323
      %v1344 = vmul.f32 %v1343, %v1323
      %v1345 = vmul.f32 %v1344, %v1343
      %v1346 = vmul.f32 0.5, %v1345
      %v1347 = vsub.f32 1.5, %v1346
      %v1348 = vmul.f32 %v1343, %v1347
      %vm1349 = vweird.f32 %v1323
      %vm1350 = vweird.f32 %v1343
      %vm1351 = vmor %vm1349, %vm1350
      %v1352 = vsel %vm1351, %v1343, %v1348
      %v1353 = vrsqrt.pop %v1324
      %v1354 = vmul.f32 %v1353, %v1324
      %v1355 = vmul.f32 %v1354, %v1353
      %v1356 = vmul.f32 0.5, %v1355
      %v1357 = vsub.f32 1.5, %v1356
      %v1358 = vmul.f32 %v1353, %v1357
      %vm1359 = vweird.f32 %v1324
      %vm1360 = vweird.f32 %v1353
      %vm1361 = vmor %vm1359, %vm1360
      %v1362 = vsel %vm1361, %v1353, %v1358
      %v1363 = vrsqrt.pop %v1325
      %v1364 = vmul.f32 %v1363, %v1325
      %v1365 = vmul.f32 %v1364, %v1363
      %v1366 = vmul.f32 0.5, %v1365
      %v1367 = vsub.f32 1.5, %v1366
      %v1368 = vmul.f32 %v1363, %v1367
      %vm1369 = vweird.f32 %v1325
      %vm1370 = vweird.f32 %v1363
      %vm1371 = vmor %vm1369, %vm1370
      %v1372 = vsel %vm1371, %v1363, %v1368
      %v1373 = vrsqrt.pop %v1326
      %v1374 = vmul.f32 %v1373, %v1326
      %v1375 = vmul.f32 %v1374, %v1373
      %v1376 = vmul.f32 0.5, %v1375
      %v1377 = vsub.f32 1.5, %v1376
      %v1378 = vmul.f32 %v1373, %v1377
      %vm1379 = vweird.f32 %v1326
      %vm1380 = vweird.f32 %v1373
      %vm1381 = vmor %vm1379, %vm1380
      %v1382 = vsel %vm1381, %v1373, %v1378
      %v1383 = vrsqrt.pop %v1327
      %v1384 = vmul.f32 %v1383, %v1327
      %v1385 = vmul.f32 %v1384, %v1383
      %v1386 = vmul.f32 0.5, %v1385
      %v1387 = vsub.f32 1.5, %v1386
      %v1388 = vmul.f32 %v1383, %v1387
      %vm1389 = vweird.f32 %v1327
      %vm1390 = vweird.f32 %v1383
      %vm1391 = vmor %vm1389, %vm1390
      %v1392 = vsel %vm1391, %v1383, %v1388
      %v1393 = vrsqrt.pop %v1328
      %v1394 = vmul.f32 %v1393, %v1328
      %v1395 = vmul.f32 %v1394, %v1393
      %v1396 = vmul.f32 0.5, %v1395
      %v1397 = vsub.f32 1.5, %v1396
      %v1398 = vmul.f32 %v1393, %v1397
      %vm1399 = vweird.f32 %v1328
      %vm1400 = vweird.f32 %v1393
      %vm1401 = vmor %vm1399, %vm1400
      %v1402 = vsel %vm1401, %v1393, %v1398
      %v1403 = vrsqrt.pop %v1329
      %v1404 = vmul.f32 %v1403, %v1329
      %v1405 = vmul.f32 %v1404, %v1403
      %v1406 = vmul.f32 0.5, %v1405
      %v1407 = vsub.f32 1.5, %v1406
      %v1408 = vmul.f32 %v1403, %v1407
      %vm1409 = vweird.f32 %v1329
      %vm1410 = vweird.f32 %v1403
      %vm1411 = vmor %vm1409, %vm1410
      %v1412 = vsel %vm1411, %v1403, %v1408
      %v1413 = vrsqrt.pop %v1330
      %v1414 = vmul.f32 %v1413, %v1330
      %v1415 = vmul.f32 %v1414, %v1413
      %v1416 = vmul.f32 0.5, %v1415
      %v1417 = vsub.f32 1.5, %v1416
      %v1418 = vmul.f32 %v1413, %v1417
      %vm1419 = vweird.f32 %v1330
      %vm1420 = vweird.f32 %v1413
      %vm1421 = vmor %vm1419, %vm1420
      %v1422 = vsel %vm1421, %v1413, %v1418
      %v1423 = vrsqrt.pop %v1331
      %v1424 = vmul.f32 %v1423, %v1331
      %v1425 = vmul.f32 %v1424, %v1423
      %v1426 = vmul.f32 0.5, %v1425
      %v1427 = vsub.f32 1.5, %v1426
      %v1428 = vmul.f32 %v1423, %v1427
      %vm1429 = vweird.f32 %v1331
      %vm1430 = vweird.f32 %v1423
      %vm1431 = vmor %vm1429, %vm1430
      %v1432 = vsel %vm1431, %v1423, %v1428
      %v1433 = vrsqrt.pop %v1332
      %v1434 = vmul.f32 %v1433, %v1332
      %v1435 = vmul.f32 %v1434, %v1433
      %v1436 = vmul.f32 0.5, %v1435
      %v1437 = vsub.f32 1.5, %v1436
      %v1438 = vmul.f32 %v1433, %v1437
      %vm1439 = vweird.f32 %v1332
      %vm1440 = vweird.f32 %v1433
      %vm1441 = vmor %vm1439, %vm1440
      %v1442 = vsel %vm1441, %v1433, %v1438
      %v1443 = vrsqrt.pop %v1333
      %v1444 = vmul.f32 %v1443, %v1333
      %v1445 = vmul.f32 %v1444, %v1443
      %v1446 = vmul.f32 0.5, %v1445
      %v1447 = vsub.f32 1.5, %v1446
      %v1448 = vmul.f32 %v1443, %v1447
      %vm1449 = vweird.f32 %v1333
      %vm1450 = vweird.f32 %v1443
      %vm1451 = vmor %vm1449, %vm1450
      %v1452 = vsel %vm1451, %v1443, %v1448
      %v1453 = vrsqrt.pop %v1334
      %v1454 = vmul.f32 %v1453, %v1334
      %v1455 = vmul.f32 %v1454, %v1453
      %v1456 = vmul.f32 0.5, %v1455
      %v1457 = vsub.f32 1.5, %v1456
      %v1458 = vmul.f32 %v1453, %v1457
      %vm1459 = vweird.f32 %v1334
      %vm1460 = vweird.f32 %v1453
      %vm1461 = vmor %vm1459, %vm1460
      %v1462 = vsel %vm1461, %v1453, %v1458
      %v1463 = vrsqrt.pop %v1335
      %v1464 = vmul.f32 %v1463, %v1335
      %v1465 = vmul.f32 %v1464, %v1463
      %v1466 = vmul.f32 0.5, %v1465
      %v1467 = vsub.f32 1.5, %v1466
      %v1468 = vmul.f32 %v1463, %v1467
      %vm1469 = vweird.f32 %v1335
      %vm1470 = vweird.f32 %v1463
      %vm1471 = vmor %vm1469, %vm1470
      %v1472 = vsel %vm1471, %v1463, %v1468
      %v1473 = vrsqrt.pop %v1336
      %v1474 = vmul.f32 %v1473, %v1336
      %v1475 = vmul.f32 %v1474, %v1473
      %v1476 = vmul.f32 0.5, %v1475
      %v1477 = vsub.f32 1.5, %v1476
      %v1478 = vmul.f32 %v1473, %v1477
      %vm1479 = vweird.f32 %v1336
      %vm1480 = vweird.f32 %v1473
      %vm1481 = vmor %vm1479, %vm1480
      %v1482 = vsel %vm1481, %v1473, %v1478
      %v1483 = vrsqrt.pop %v1337
      %v1484 = vmul.f32 %v1483, %v1337
      %v1485 = vmul.f32 %v1484, %v1483
      %v1486 = vmul.f32 0.5, %v1485
      %v1487 = vsub.f32 1.5, %v1486
      %v1488 = vmul.f32 %v1483, %v1487
      %vm1489 = vweird.f32 %v1337
      %vm1490 = vweird.f32 %v1483
      %vm1491 = vmor %vm1489, %vm1490
      %v1492 = vsel %vm1491, %v1483, %v1488
      %v1493 = vrsqrt.pop %v1338
      %v1494 = vmul.f32 %v1493, %v1338
      %v1495 = vmul.f32 %v1494, %v1493
      %v1496 = vmul.f32 0.5, %v1495
      %v1497 = vsub.f32 1.5, %v1496
      %v1498 = vmul.f32 %v1493, %v1497
      %vm1499 = vweird.f32 %v1338
      %vm1500 = vweird.f32 %v1493
      %vm1501 = vmor %vm1499, %vm1500
      %v1502 = vsel %vm1501, %v1493, %v1498
      %v1503 = vrsqrt.pop %v1339
      %v1504 = vmul.f32 %v1503, %v1339
      %v1505 = vmul.f32 %v1504, %v1503
      %v1506 = vmul.f32 0.5, %v1505
      %v1507 = vsub.f32 1.5, %v1506
      %v1508 = vmul.f32 %v1503, %v1507
      %vm1509 = vweird.f32 %v1339
      %vm1510 = vweird.f32 %v1503
      %vm1511 = vmor %vm1509, %vm1510
      %v1512 = vsel %vm1511, %v1503, %v1508
      %v1513 = vrsqrt.pop %v1340
      %v1514 = vmul.f32 %v1513, %v1340
      %v1515 = vmul.f32 %v1514, %v1513
      %v1516 = vmul.f32 0.5, %v1515
      %v1517 = vsub.f32 1.5, %v1516
      %v1518 = vmul.f32 %v1513, %v1517
      %vm1519 = vweird.f32 %v1340
      %vm1520 = vweird.f32 %v1513
      %vm1521 = vmor %vm1519, %vm1520
      %v1522 = vsel %vm1521, %v1513, %v1518
      %v1523 = vrsqrt.pop %v1341
      %v1524 = vmul.f32 %v1523, %v1341
      %v1525 = vmul.f32 %v1524, %v1523
      %v1526 = vmul.f32 0.5, %v1525
      %v1527 = vsub.f32 1.5, %v1526
      %v1528 = vmul.f32 %v1523, %v1527
      %vm1529 = vweird.f32 %v1341
      %vm1530 = vweird.f32 %v1523
      %vm1531 = vmor %vm1529, %vm1530
      %v1532 = vsel %vm1531, %v1523, %v1528
      %v1533 = vrsqrt.pop %v1342
      %v1534 = vmul.f32 %v1533, %v1342
      %v1535 = vmul.f32 %v1534, %v1533
      %v1536 = vmul.f32 0.5, %v1535
      %v1537 = vsub.f32 1.5, %v1536
      %v1538 = vmul.f32 %v1533, %v1537
      %vm1539 = vweird.f32 %v1342
      %vm1540 = vweird.f32 %v1533
      %vm1541 = vmor %vm1539, %vm1540
      %v1542 = vsel %vm1541, %v1533, %v1538
      %v1543 = vmul.f32 %v1195, %v1352
      %v1544 = vmul.f32 %v1196, %v1362
      %v1545 = vmul.f32 %v1197, %v1372
      %v1546 = vmul.f32 %v1198, %v1382
      %v1547 = vmul.f32 %v1199, %v1392
      %v1548 = vmul.f32 %v1200, %v1402
      %v1549 = vmul.f32 %v1201, %v1412
      %v1550 = vmul.f32 %v1202, %v1422
      %v1551 = vmul.f32 %v1203, %v1432
      %v1552 = vmul.f32 %v1204, %v1442
      %v1553 = vmul.f32 %v1205, %v1452
      %v1554 = vmul.f32 %v1206, %v1462
      %v1555 = vmul.f32 %v1207, %v1472
      %v1556 = vmul.f32 %v1208, %v1482
      %v1557 = vmul.f32 %v1209, %v1492
      %v1558 = vmul.f32 %v1210, %v1502
      %v1559 = vmul.f32 %v1211, %v1512
      %v1560 = vmul.f32 %v1212, %v1522
      %v1561 = vmul.f32 %v1213, %v1532
      %v1562 = vmul.f32 %v1214, %v1542
      %s1563 = scalar_lea.vmem %s1, 24
      %v1564 = vld [vmem:[%s1563] sm:$0xf]
      %v1566 = vsel %vm472, %v1564, 0
      %1568 = vmatpush.bf16.msra.mxu0 0
      %1569 = vmatpush.bf16.msra.mxu0 0
      %1570 = vmatpush.bf16.msra.mxu0 0
      %1571 = vmatpush.bf16.msra.mxu0 0
      %1572 = vmatpush.bf16.msra.mxu0 0
      %1573 = vmatpush.bf16.msra.mxu0 0
      %1574 = vmatpush.bf16.msra.mxu0 0
      %1575 = vmatpush.bf16.msra.mxu0 %v1566
      %1576 = vmatmul.bf16.gmra.mxu0 %v443
      %v1577 = vpop.f32.mrf.mxu0
      %v1578 = vadd.f32 0.0, %v1577
      %v1579 = vpop.f32.mrf.mxu0
      %v1580 = vadd.f32 0.0, %v1579
      %1581 = vmatmul.bf16.gmra.mxu0 %v446
      %v1582 = vpop.f32.mrf.mxu0
      %v1583 = vadd.f32 0.0, %v1582
      %v1584 = vpop.f32.mrf.mxu0
      %v1585 = vadd.f32 0.0, %v1584
      %1586 = vmatmul.bf16.gmra.mxu0 %v449
      %v1587 = vpop.f32.mrf.mxu0
      %v1588 = vadd.f32 0.0, %v1587
      %v1589 = vpop.f32.mrf.mxu0
      %v1590 = vadd.f32 0.0, %v1589
      %1591 = vmatmul.bf16.gmra.mxu0 %v452
      %v1592 = vpop.f32.mrf.mxu0
      %v1593 = vadd.f32 0.0, %v1592
      %v1594 = vpop.f32.mrf.mxu0
      %v1595 = vadd.f32 0.0, %v1594
      %1596 = vmatmul.bf16.gmra.mxu0 %v455
      %v1597 = vpop.f32.mrf.mxu0
      %v1598 = vadd.f32 0.0, %v1597
      %v1599 = vpop.f32.mrf.mxu0
      %v1600 = vadd.f32 0.0, %v1599
      %1601 = vmatmul.bf16.gmra.mxu0 %v458
      %v1602 = vpop.f32.mrf.mxu0
      %v1603 = vadd.f32 0.0, %v1602
      %v1604 = vpop.f32.mrf.mxu0
      %v1605 = vadd.f32 0.0, %v1604
      %1606 = vmatmul.bf16.gmra.mxu0 %v461
      %v1607 = vpop.f32.mrf.mxu0
      %v1608 = vadd.f32 0.0, %v1607
      %v1609 = vpop.f32.mrf.mxu0
      %v1610 = vadd.f32 0.0, %v1609
      %1611 = vmatmul.bf16.gmra.mxu0 %v464
      %v1612 = vpop.f32.mrf.mxu0
      %v1613 = vadd.f32 0.0, %v1612
      %v1614 = vpop.f32.mrf.mxu0
      %v1615 = vadd.f32 0.0, %v1614
      %1616 = vmatmul.bf16.gmra.mxu0 %v467
      %v1617 = vpop.f32.mrf.mxu0
      %v1618 = vadd.f32 0.0, %v1617
      %v1619 = vpop.f32.mrf.mxu0
      %v1620 = vadd.f32 0.0, %v1619
      %1621 = vmatmul.bf16.gmra.mxu0 %v470
      %v1622 = vpop.f32.mrf.mxu0
      %v1623 = vadd.f32 0.0, %v1622
      %v1624 = vpop.f32.mrf.mxu0
      %v1625 = vadd.f32 0.0, %v1624
      %1626 = vdwg.mxu0
      %v1627 = vrot.slane %v1578, 7
      %v1628 = vrot.slane %v1580, 7
      %v1629 = vrot.slane %v1583, 7
      %v1630 = vrot.slane %v1585, 7
      %v1631 = vrot.slane %v1588, 7
      %v1632 = vrot.slane %v1590, 7
      %v1633 = vrot.slane %v1593, 7
      %v1634 = vrot.slane %v1595, 7
      %v1635 = vrot.slane %v1598, 7
      %v1636 = vrot.slane %v1600, 7
      %v1637 = vrot.slane %v1603, 7
      %v1638 = vrot.slane %v1605, 7
      %v1639 = vrot.slane %v1608, 7
      %v1640 = vrot.slane %v1610, 7
      %v1641 = vrot.slane %v1613, 7
      %v1642 = vrot.slane %v1615, 7
      %v1643 = vrot.slane %v1618, 7
      %v1644 = vrot.slane %v1620, 7
      %v1645 = vrot.slane %v1623, 7
      %v1646 = vrot.slane %v1625, 7
      %v1647 = vsel %vm557, %v1645, %v1646
      %v1648 = vsel %vm557, %v1644, %v1645
      %v1649 = vsel %vm557, %v1643, %v1644
      %v1650 = vsel %vm557, %v1642, %v1643
      %v1651 = vsel %vm557, %v1641, %v1642
      %v1652 = vsel %vm557, %v1640, %v1641
      %v1653 = vsel %vm557, %v1639, %v1640
      %v1654 = vsel %vm557, %v1638, %v1639
      %v1655 = vsel %vm557, %v1637, %v1638
      %v1656 = vsel %vm557, %v1636, %v1637
      %v1657 = vsel %vm557, %v1635, %v1636
      %v1658 = vsel %vm557, %v1634, %v1635
      %v1659 = vsel %vm557, %v1633, %v1634
      %v1660 = vsel %vm557, %v1632, %v1633
      %v1661 = vsel %vm557, %v1631, %v1632
      %v1662 = vsel %vm557, %v1630, %v1631
      %v1663 = vsel %vm557, %v1629, %v1630
      %v1664 = vsel %vm557, %v1628, %v1629
      %v1665 = vsel %vm557, %v1627, %v1628
      %v1666 = vsel %vm557, %v1646, %v1627
      %v1667 = vadd.f32 %v388, %v1666
      %v1668 = vadd.f32 %v388, %v1665
      %v1669 = vadd.f32 %v388, %v1664
      %v1670 = vadd.f32 %v388, %v1663
      %v1671 = vadd.f32 %v388, %v1662
      %v1672 = vadd.f32 %v388, %v1661
      %v1673 = vadd.f32 %v388, %v1660
      %v1674 = vadd.f32 %v388, %v1659
      %v1675 = vadd.f32 %v388, %v1658
      %v1676 = vadd.f32 %v388, %v1657
      %v1677 = vadd.f32 %v388, %v1656
      %v1678 = vadd.f32 %v388, %v1655
      %v1679 = vadd.f32 %v388, %v1654
      %v1680 = vadd.f32 %v388, %v1653
      %v1681 = vadd.f32 %v388, %v1652
      %v1682 = vadd.f32 %v388, %v1651
      %v1683 = vadd.f32 %v388, %v1650
      %v1684 = vadd.f32 %v388, %v1649
      %v1685 = vadd.f32 %v388, %v1648
      %v1686 = vadd.f32 %v388, %v1647
      %s1687 = scalar_lea.vmem %s1, 28
      %v1688 = vld [vmem:[%s1687] sm:$0xf]
      %v1690 = vsel %vm472, %v1688, 0
      %1692 = vmatpush.bf16.msra.mxu0 0
      %1693 = vmatpush.bf16.msra.mxu0 0
      %1694 = vmatpush.bf16.msra.mxu0 0
      %1695 = vmatpush.bf16.msra.mxu0 0
      %1696 = vmatpush.bf16.msra.mxu0 0
      %1697 = vmatpush.bf16.msra.mxu0 0
      %1698 = vmatpush.bf16.msra.mxu0 0
      %1699 = vmatpush.bf16.msra.mxu0 %v1690
      %1700 = vmatmul.bf16.gmra.mxu0 %v443
      %v1701 = vpop.f32.mrf.mxu0
      %v1702 = vadd.f32 0.0, %v1701
      %v1703 = vpop.f32.mrf.mxu0
      %v1704 = vadd.f32 0.0, %v1703
      %1705 = vmatmul.bf16.gmra.mxu0 %v446
      %v1706 = vpop.f32.mrf.mxu0
      %v1707 = vadd.f32 0.0, %v1706
      %v1708 = vpop.f32.mrf.mxu0
      %v1709 = vadd.f32 0.0, %v1708
      %1710 = vmatmul.bf16.gmra.mxu0 %v449
      %v1711 = vpop.f32.mrf.mxu0
      %v1712 = vadd.f32 0.0, %v1711
      %v1713 = vpop.f32.mrf.mxu0
      %v1714 = vadd.f32 0.0, %v1713
      %1715 = vmatmul.bf16.gmra.mxu0 %v452
      %v1716 = vpop.f32.mrf.mxu0
      %v1717 = vadd.f32 0.0, %v1716
      %v1718 = vpop.f32.mrf.mxu0
      %v1719 = vadd.f32 0.0, %v1718
      %1720 = vmatmul.bf16.gmra.mxu0 %v455
      %v1721 = vpop.f32.mrf.mxu0
      %v1722 = vadd.f32 0.0, %v1721
      %v1723 = vpop.f32.mrf.mxu0
      %v1724 = vadd.f32 0.0, %v1723
      %1725 = vmatmul.bf16.gmra.mxu0 %v458
      %v1726 = vpop.f32.mrf.mxu0
      %v1727 = vadd.f32 0.0, %v1726
      %v1728 = vpop.f32.mrf.mxu0
      %v1729 = vadd.f32 0.0, %v1728
      %1730 = vmatmul.bf16.gmra.mxu0 %v461
      %v1731 = vpop.f32.mrf.mxu0
      %v1732 = vadd.f32 0.0, %v1731
      %v1733 = vpop.f32.mrf.mxu0
      %v1734 = vadd.f32 0.0, %v1733
      %1735 = vmatmul.bf16.gmra.mxu0 %v464
      %v1736 = vpop.f32.mrf.mxu0
      %v1737 = vadd.f32 0.0, %v1736
      %v1738 = vpop.f32.mrf.mxu0
      %v1739 = vadd.f32 0.0, %v1738
      %1740 = vmatmul.bf16.gmra.mxu0 %v467
      %v1741 = vpop.f32.mrf.mxu0
      %v1742 = vadd.f32 0.0, %v1741
      %v1743 = vpop.f32.mrf.mxu0
      %v1744 = vadd.f32 0.0, %v1743
      %1745 = vmatmul.bf16.gmra.mxu0 %v470
      %v1746 = vpop.f32.mrf.mxu0
      %v1747 = vadd.f32 0.0, %v1746
      %v1748 = vpop.f32.mrf.mxu0
      %v1749 = vadd.f32 0.0, %v1748
      %1750 = vdwg.mxu0
      %v1751 = vadd.f32 %v1667, %v1702
      %v1752 = vadd.f32 %v1668, %v1704
      %v1753 = vadd.f32 %v1669, %v1707
      %v1754 = vadd.f32 %v1670, %v1709
      %v1755 = vadd.f32 %v1671, %v1712
      %v1756 = vadd.f32 %v1672, %v1714
      %v1757 = vadd.f32 %v1673, %v1717
      %v1758 = vadd.f32 %v1674, %v1719
      %v1759 = vadd.f32 %v1675, %v1722
      %v1760 = vadd.f32 %v1676, %v1724
      %v1761 = vadd.f32 %v1677, %v1727
      %v1762 = vadd.f32 %v1678, %v1729
      %v1763 = vadd.f32 %v1679, %v1732
      %v1764 = vadd.f32 %v1680, %v1734
      %v1765 = vadd.f32 %v1681, %v1737
      %v1766 = vadd.f32 %v1682, %v1739
      %v1767 = vadd.f32 %v1683, %v1742
      %v1768 = vadd.f32 %v1684, %v1744
      %v1769 = vadd.f32 %v1685, %v1747
      %v1770 = vadd.f32 %v1686, %v1749
      %s1771 = scalar_lea.vmem %s1, 32
      %v1772 = vld [vmem:[%s1771] sm:$0xf]
      %v1774 = vsel %vm472, %v1772, 0
      %1776 = vmatpush.bf16.msra.mxu0 0
      %1777 = vmatpush.bf16.msra.mxu0 0
      %1778 = vmatpush.bf16.msra.mxu0 0
      %1779 = vmatpush.bf16.msra.mxu0 0
      %1780 = vmatpush.bf16.msra.mxu0 0
      %1781 = vmatpush.bf16.msra.mxu0 0
      %1782 = vmatpush.bf16.msra.mxu0 0
      %1783 = vmatpush.bf16.msra.mxu0 %v1774
      %1784 = vmatmul.bf16.gmra.mxu0 %v443
      %v1785 = vpop.f32.mrf.mxu0
      %v1786 = vadd.f32 0.0, %v1785
      %v1787 = vpop.f32.mrf.mxu0
      %v1788 = vadd.f32 0.0, %v1787
      %1789 = vmatmul.bf16.gmra.mxu0 %v446
      %v1790 = vpop.f32.mrf.mxu0
      %v1791 = vadd.f32 0.0, %v1790
      %v1792 = vpop.f32.mrf.mxu0
      %v1793 = vadd.f32 0.0, %v1792
      %1794 = vmatmul.bf16.gmra.mxu0 %v449
      %v1795 = vpop.f32.mrf.mxu0
      %v1796 = vadd.f32 0.0, %v1795
      %v1797 = vpop.f32.mrf.mxu0
      %v1798 = vadd.f32 0.0, %v1797
      %1799 = vmatmul.bf16.gmra.mxu0 %v452
      %v1800 = vpop.f32.mrf.mxu0
      %v1801 = vadd.f32 0.0, %v1800
      %v1802 = vpop.f32.mrf.mxu0
      %v1803 = vadd.f32 0.0, %v1802
      %1804 = vmatmul.bf16.gmra.mxu0 %v455
      %v1805 = vpop.f32.mrf.mxu0
      %v1806 = vadd.f32 0.0, %v1805
      %v1807 = vpop.f32.mrf.mxu0
      %v1808 = vadd.f32 0.0, %v1807
      %1809 = vmatmul.bf16.gmra.mxu0 %v458
      %v1810 = vpop.f32.mrf.mxu0
      %v1811 = vadd.f32 0.0, %v1810
      %v1812 = vpop.f32.mrf.mxu0
      %v1813 = vadd.f32 0.0, %v1812
      %1814 = vmatmul.bf16.gmra.mxu0 %v461
      %v1815 = vpop.f32.mrf.mxu0
      %v1816 = vadd.f32 0.0, %v1815
      %v1817 = vpop.f32.mrf.mxu0
      %v1818 = vadd.f32 0.0, %v1817
      %1819 = vmatmul.bf16.gmra.mxu0 %v464
      %v1820 = vpop.f32.mrf.mxu0
      %v1821 = vadd.f32 0.0, %v1820
      %v1822 = vpop.f32.mrf.mxu0
      %v1823 = vadd.f32 0.0, %v1822
      %1824 = vmatmul.bf16.gmra.mxu0 %v467
      %v1825 = vpop.f32.mrf.mxu0
      %v1826 = vadd.f32 0.0, %v1825
      %v1827 = vpop.f32.mrf.mxu0
      %v1828 = vadd.f32 0.0, %v1827
      %1829 = vmatmul.bf16.gmra.mxu0 %v470
      %v1830 = vpop.f32.mrf.mxu0
      %v1831 = vadd.f32 0.0, %v1830
      %v1832 = vpop.f32.mrf.mxu0
      %v1833 = vadd.f32 0.0, %v1832
      %1834 = vdwg.mxu0
      %v1835 = vrot.slane %v1786, 1
      %v1836 = vrot.slane %v1788, 1
      %v1837 = vrot.slane %v1791, 1
      %v1838 = vrot.slane %v1793, 1
      %v1839 = vrot.slane %v1796, 1
      %v1840 = vrot.slane %v1798, 1
      %v1841 = vrot.slane %v1801, 1
      %v1842 = vrot.slane %v1803, 1
      %v1843 = vrot.slane %v1806, 1
      %v1844 = vrot.slane %v1808, 1
      %v1845 = vrot.slane %v1811, 1
      %v1846 = vrot.slane %v1813, 1
      %v1847 = vrot.slane %v1816, 1
      %v1848 = vrot.slane %v1818, 1
      %v1849 = vrot.slane %v1821, 1
      %v1850 = vrot.slane %v1823, 1
      %v1851 = vrot.slane %v1826, 1
      %v1852 = vrot.slane %v1828, 1
      %v1853 = vrot.slane %v1831, 1
      %v1854 = vrot.slane %v1833, 1
      %v1855 = vsel %vm766, %v1853, %v1854
      %v1856 = vsel %vm766, %v1852, %v1853
      %v1857 = vsel %vm766, %v1851, %v1852
      %v1858 = vsel %vm766, %v1850, %v1851
      %v1859 = vsel %vm766, %v1849, %v1850
      %v1860 = vsel %vm766, %v1848, %v1849
      %v1861 = vsel %vm766, %v1847, %v1848
      %v1862 = vsel %vm766, %v1846, %v1847
      %v1863 = vsel %vm766, %v1845, %v1846
      %v1864 = vsel %vm766, %v1844, %v1845
      %v1865 = vsel %vm766, %v1843, %v1844
      %v1866 = vsel %vm766, %v1842, %v1843
      %v1867 = vsel %vm766, %v1841, %v1842
      %v1868 = vsel %vm766, %v1840, %v1841
      %v1869 = vsel %vm766, %v1839, %v1840
      %v1870 = vsel %vm766, %v1838, %v1839
      %v1871 = vsel %vm766, %v1837, %v1838
      %v1872 = vsel %vm766, %v1836, %v1837
      %v1873 = vsel %vm766, %v1835, %v1836
      %v1874 = vsel %vm766, %v1854, %v1835
      %v1875 = vadd.f32 %v1751, %v1873
      %v1876 = vadd.f32 %v1752, %v1872
      %v1877 = vadd.f32 %v1753, %v1871
      %v1878 = vadd.f32 %v1754, %v1870
      %v1879 = vadd.f32 %v1755, %v1869
      %v1880 = vadd.f32 %v1756, %v1868
      %v1881 = vadd.f32 %v1757, %v1867
      %v1882 = vadd.f32 %v1758, %v1866
      %v1883 = vadd.f32 %v1759, %v1865
      %v1884 = vadd.f32 %v1760, %v1864
      %v1885 = vadd.f32 %v1761, %v1863
      %v1886 = vadd.f32 %v1762, %v1862
      %v1887 = vadd.f32 %v1763, %v1861
      %v1888 = vadd.f32 %v1764, %v1860
      %v1889 = vadd.f32 %v1765, %v1859
      %v1890 = vadd.f32 %v1766, %v1858
      %v1891 = vadd.f32 %v1767, %v1857
      %v1892 = vadd.f32 %v1768, %v1856
      %v1893 = vadd.f32 %v1769, %v1855
      %v1894 = vadd.f32 %v1770, %v1874
      %s1895 = scalar_lea.vmem %s1, 36
      %v1896 = vld [vmem:[%s1895] sm:$0xf]
      %v1898 = vsel %vm472, %v1896, 0
      %1900 = vmatpush.bf16.msra.mxu0 0
      %1901 = vmatpush.bf16.msra.mxu0 0
      %1902 = vmatpush.bf16.msra.mxu0 0
      %1903 = vmatpush.bf16.msra.mxu0 0
      %1904 = vmatpush.bf16.msra.mxu0 0
      %1905 = vmatpush.bf16.msra.mxu0 0
      %1906 = vmatpush.bf16.msra.mxu0 0
      %1907 = vmatpush.bf16.msra.mxu0 %v1898
      %1908 = vmatmul.bf16.gmra.mxu0 %v449
      %v1909 = vpop.f32.mrf.mxu0
      %v1910 = vadd.f32 0.0, %v1909
      %v1911 = vpop.f32.mrf.mxu0
      %v1912 = vadd.f32 0.0, %v1911
      %1913 = vmatmul.bf16.gmra.mxu0 %v452
      %v1914 = vpop.f32.mrf.mxu0
      %v1915 = vadd.f32 0.0, %v1914
      %v1916 = vpop.f32.mrf.mxu0
      %v1917 = vadd.f32 0.0, %v1916
      %1918 = vmatmul.bf16.gmra.mxu0 %v455
      %v1919 = vpop.f32.mrf.mxu0
      %v1920 = vadd.f32 0.0, %v1919
      %v1921 = vpop.f32.mrf.mxu0
      %v1922 = vadd.f32 0.0, %v1921
      %1923 = vmatmul.bf16.gmra.mxu0 %v458
      %v1924 = vpop.f32.mrf.mxu0
      %v1925 = vadd.f32 0.0, %v1924
      %v1926 = vpop.f32.mrf.mxu0
      %v1927 = vadd.f32 0.0, %v1926
      %1928 = vmatmul.bf16.gmra.mxu0 %v461
      %v1929 = vpop.f32.mrf.mxu0
      %v1930 = vadd.f32 0.0, %v1929
      %v1931 = vpop.f32.mrf.mxu0
      %v1932 = vadd.f32 0.0, %v1931
      %1933 = vmatmul.bf16.gmra.mxu0 %v464
      %v1934 = vpop.f32.mrf.mxu0
      %v1935 = vadd.f32 0.0, %v1934
      %v1936 = vpop.f32.mrf.mxu0
      %v1937 = vadd.f32 0.0, %v1936
      %1938 = vmatmul.bf16.gmra.mxu0 %v467
      %v1939 = vpop.f32.mrf.mxu0
      %v1940 = vadd.f32 0.0, %v1939
      %v1941 = vpop.f32.mrf.mxu0
      %v1942 = vadd.f32 0.0, %v1941
      %1943 = vmatmul.bf16.gmra.mxu0 %v470
      %v1944 = vpop.f32.mrf.mxu0
      %v1945 = vadd.f32 0.0, %v1944
      %v1946 = vpop.f32.mrf.mxu0
      %v1947 = vadd.f32 0.0, %v1946
      %1948 = vmatmul.bf16.gmra.mxu0 %v820
      %v1949 = vpop.f32.mrf.mxu0
      %v1950 = vadd.f32 0.0, %v1949
      %v1951 = vpop.f32.mrf.mxu0
      %v1952 = vadd.f32 0.0, %v1951
      %1953 = vmatmul.bf16.gmra.mxu0 %v823
      %v1954 = vpop.f32.mrf.mxu0
      %v1955 = vadd.f32 0.0, %v1954
      %v1956 = vpop.f32.mrf.mxu0
      %v1957 = vadd.f32 0.0, %v1956
      %1958 = vdwg.mxu0
      %v1959 = vrot.slane %v1910, 7
      %v1960 = vrot.slane %v1912, 7
      %v1961 = vrot.slane %v1915, 7
      %v1962 = vrot.slane %v1917, 7
      %v1963 = vrot.slane %v1920, 7
      %v1964 = vrot.slane %v1922, 7
      %v1965 = vrot.slane %v1925, 7
      %v1966 = vrot.slane %v1927, 7
      %v1967 = vrot.slane %v1930, 7
      %v1968 = vrot.slane %v1932, 7
      %v1969 = vrot.slane %v1935, 7
      %v1970 = vrot.slane %v1937, 7
      %v1971 = vrot.slane %v1940, 7
      %v1972 = vrot.slane %v1942, 7
      %v1973 = vrot.slane %v1945, 7
      %v1974 = vrot.slane %v1947, 7
      %v1975 = vrot.slane %v1950, 7
      %v1976 = vrot.slane %v1952, 7
      %v1977 = vrot.slane %v1955, 7
      %v1978 = vrot.slane %v1957, 7
      %v1979 = vsel %vm557, %v1977, %v1978
      %v1980 = vsel %vm557, %v1976, %v1977
      %v1981 = vsel %vm557, %v1975, %v1976
      %v1982 = vsel %vm557, %v1974, %v1975
      %v1983 = vsel %vm557, %v1973, %v1974
      %v1984 = vsel %vm557, %v1972, %v1973
      %v1985 = vsel %vm557, %v1971, %v1972
      %v1986 = vsel %vm557, %v1970, %v1971
      %v1987 = vsel %vm557, %v1969, %v1970
      %v1988 = vsel %vm557, %v1968, %v1969
      %v1989 = vsel %vm557, %v1967, %v1968
      %v1990 = vsel %vm557, %v1966, %v1967
      %v1991 = vsel %vm557, %v1965, %v1966
      %v1992 = vsel %vm557, %v1964, %v1965
      %v1993 = vsel %vm557, %v1963, %v1964
      %v1994 = vsel %vm557, %v1962, %v1963
      %v1995 = vsel %vm557, %v1961, %v1962
      %v1996 = vsel %vm557, %v1960, %v1961
      %v1997 = vsel %vm557, %v1959, %v1960
      %v1998 = vsel %vm557, %v1978, %v1959
      %v1999 = vadd.f32 %v1875, %v1998
      %v2000 = vadd.f32 %v1876, %v1997
      %v2001 = vadd.f32 %v1877, %v1996
      %v2002 = vadd.f32 %v1878, %v1995
      %v2003 = vadd.f32 %v1879, %v1994
      %v2004 = vadd.f32 %v1880, %v1993
      %v2005 = vadd.f32 %v1881, %v1992
      %v2006 = vadd.f32 %v1882, %v1991
      %v2007 = vadd.f32 %v1883, %v1990
      %v2008 = vadd.f32 %v1884, %v1989
      %v2009 = vadd.f32 %v1885, %v1988
      %v2010 = vadd.f32 %v1886, %v1987
      %v2011 = vadd.f32 %v1887, %v1986
      %v2012 = vadd.f32 %v1888, %v1985
      %v2013 = vadd.f32 %v1889, %v1984
      %v2014 = vadd.f32 %v1890, %v1983
      %v2015 = vadd.f32 %v1891, %v1982
      %v2016 = vadd.f32 %v1892, %v1981
      %v2017 = vadd.f32 %v1893, %v1980
      %v2018 = vadd.f32 %v1894, %v1979
      %s2019 = scalar_lea.vmem %s1, 40
      %v2020 = vld [vmem:[%s2019] sm:$0xf]
      %v2022 = vsel %vm472, %v2020, 0
      %2024 = vmatpush.bf16.msra.mxu0 0
      %2025 = vmatpush.bf16.msra.mxu0 0
      %2026 = vmatpush.bf16.msra.mxu0 0
      %2027 = vmatpush.bf16.msra.mxu0 0
      %2028 = vmatpush.bf16.msra.mxu0 0
      %2029 = vmatpush.bf16.msra.mxu0 0
      %2030 = vmatpush.bf16.msra.mxu0 0
      %2031 = vmatpush.bf16.msra.mxu0 %v2022
      %2032 = vmatmul.bf16.gmra.mxu0 %v449
      %v2033 = vpop.f32.mrf.mxu0
      %v2034 = vadd.f32 0.0, %v2033
      %v2035 = vpop.f32.mrf.mxu0
      %v2036 = vadd.f32 0.0, %v2035
      %2037 = vmatmul.bf16.gmra.mxu0 %v452
      %v2038 = vpop.f32.mrf.mxu0
      %v2039 = vadd.f32 0.0, %v2038
      %v2040 = vpop.f32.mrf.mxu0
      %v2041 = vadd.f32 0.0, %v2040
      %2042 = vmatmul.bf16.gmra.mxu0 %v455
      %v2043 = vpop.f32.mrf.mxu0
      %v2044 = vadd.f32 0.0, %v2043
      %v2045 = vpop.f32.mrf.mxu0
      %v2046 = vadd.f32 0.0, %v2045
      %2047 = vmatmul.bf16.gmra.mxu0 %v458
      %v2048 = vpop.f32.mrf.mxu0
      %v2049 = vadd.f32 0.0, %v2048
      %v2050 = vpop.f32.mrf.mxu0
      %v2051 = vadd.f32 0.0, %v2050
      %2052 = vmatmul.bf16.gmra.mxu0 %v461
      %v2053 = vpop.f32.mrf.mxu0
      %v2054 = vadd.f32 0.0, %v2053
      %v2055 = vpop.f32.mrf.mxu0
      %v2056 = vadd.f32 0.0, %v2055
      %2057 = vmatmul.bf16.gmra.mxu0 %v464
      %v2058 = vpop.f32.mrf.mxu0
      %v2059 = vadd.f32 0.0, %v2058
      %v2060 = vpop.f32.mrf.mxu0
      %v2061 = vadd.f32 0.0, %v2060
      %2062 = vmatmul.bf16.gmra.mxu0 %v467
      %v2063 = vpop.f32.mrf.mxu0
      %v2064 = vadd.f32 0.0, %v2063
      %v2065 = vpop.f32.mrf.mxu0
      %v2066 = vadd.f32 0.0, %v2065
      %2067 = vmatmul.bf16.gmra.mxu0 %v470
      %v2068 = vpop.f32.mrf.mxu0
      %v2069 = vadd.f32 0.0, %v2068
      %v2070 = vpop.f32.mrf.mxu0
      %v2071 = vadd.f32 0.0, %v2070
      %2072 = vmatmul.bf16.gmra.mxu0 %v820
      %v2073 = vpop.f32.mrf.mxu0
      %v2074 = vadd.f32 0.0, %v2073
      %v2075 = vpop.f32.mrf.mxu0
      %v2076 = vadd.f32 0.0, %v2075
      %2077 = vmatmul.bf16.gmra.mxu0 %v823
      %v2078 = vpop.f32.mrf.mxu0
      %v2079 = vadd.f32 0.0, %v2078
      %v2080 = vpop.f32.mrf.mxu0
      %v2081 = vadd.f32 0.0, %v2080
      %2082 = vdwg.mxu0
      %v2083 = vadd.f32 %v1999, %v2034
      %v2084 = vadd.f32 %v2000, %v2036
      %v2085 = vadd.f32 %v2001, %v2039
      %v2086 = vadd.f32 %v2002, %v2041
      %v2087 = vadd.f32 %v2003, %v2044
      %v2088 = vadd.f32 %v2004, %v2046
      %v2089 = vadd.f32 %v2005, %v2049
      %v2090 = vadd.f32 %v2006, %v2051
      %v2091 = vadd.f32 %v2007, %v2054
      %v2092 = vadd.f32 %v2008, %v2056
      %v2093 = vadd.f32 %v2009, %v2059
      %v2094 = vadd.f32 %v2010, %v2061
      %v2095 = vadd.f32 %v2011, %v2064
      %v2096 = vadd.f32 %v2012, %v2066
      %v2097 = vadd.f32 %v2013, %v2069
      %v2098 = vadd.f32 %v2014, %v2071
      %v2099 = vadd.f32 %v2015, %v2074
      %v2100 = vadd.f32 %v2016, %v2076
      %v2101 = vadd.f32 %v2017, %v2079
      %v2102 = vadd.f32 %v2018, %v2081
      %s2103 = scalar_lea.vmem %s1, 44
      %v2104 = vld [vmem:[%s2103] sm:$0xf]
      %v2106 = vsel %vm472, %v2104, 0
      %2108 = vmatpush.bf16.msra.mxu0 0
      %2109 = vmatpush.bf16.msra.mxu0 0
      %2110 = vmatpush.bf16.msra.mxu0 0
      %2111 = vmatpush.bf16.msra.mxu0 0
      %2112 = vmatpush.bf16.msra.mxu0 0
      %2113 = vmatpush.bf16.msra.mxu0 0
      %2114 = vmatpush.bf16.msra.mxu0 0
      %2115 = vmatpush.bf16.msra.mxu0 %v2106
      %2116 = vmatmul.bf16.gmra.mxu0 %v449
      %v2117 = vpop.f32.mrf.mxu0
      %v2118 = vadd.f32 0.0, %v2117
      %v2119 = vpop.f32.mrf.mxu0
      %v2120 = vadd.f32 0.0, %v2119
      %2121 = vmatmul.bf16.gmra.mxu0 %v452
      %v2122 = vpop.f32.mrf.mxu0
      %v2123 = vadd.f32 0.0, %v2122
      %v2124 = vpop.f32.mrf.mxu0
      %v2125 = vadd.f32 0.0, %v2124
      %2126 = vmatmul.bf16.gmra.mxu0 %v455
      %v2127 = vpop.f32.mrf.mxu0
      %v2128 = vadd.f32 0.0, %v2127
      %v2129 = vpop.f32.mrf.mxu0
      %v2130 = vadd.f32 0.0, %v2129
      %2131 = vmatmul.bf16.gmra.mxu0 %v458
      %v2132 = vpop.f32.mrf.mxu0
      %v2133 = vadd.f32 0.0, %v2132
      %v2134 = vpop.f32.mrf.mxu0
      %v2135 = vadd.f32 0.0, %v2134
      %2136 = vmatmul.bf16.gmra.mxu0 %v461
      %v2137 = vpop.f32.mrf.mxu0
      %v2138 = vadd.f32 0.0, %v2137
      %v2139 = vpop.f32.mrf.mxu0
      %v2140 = vadd.f32 0.0, %v2139
      %2141 = vmatmul.bf16.gmra.mxu0 %v464
      %v2142 = vpop.f32.mrf.mxu0
      %v2143 = vadd.f32 0.0, %v2142
      %v2144 = vpop.f32.mrf.mxu0
      %v2145 = vadd.f32 0.0, %v2144
      %2146 = vmatmul.bf16.gmra.mxu0 %v467
      %v2147 = vpop.f32.mrf.mxu0
      %v2148 = vadd.f32 0.0, %v2147
      %v2149 = vpop.f32.mrf.mxu0
      %v2150 = vadd.f32 0.0, %v2149
      %2151 = vmatmul.bf16.gmra.mxu0 %v470
      %v2152 = vpop.f32.mrf.mxu0
      %v2153 = vadd.f32 0.0, %v2152
      %v2154 = vpop.f32.mrf.mxu0
      %v2155 = vadd.f32 0.0, %v2154
      %2156 = vmatmul.bf16.gmra.mxu0 %v820
      %v2157 = vpop.f32.mrf.mxu0
      %v2158 = vadd.f32 0.0, %v2157
      %v2159 = vpop.f32.mrf.mxu0
      %v2160 = vadd.f32 0.0, %v2159
      %2161 = vmatmul.bf16.gmra.mxu0 %v823
      %v2162 = vpop.f32.mrf.mxu0
      %v2163 = vadd.f32 0.0, %v2162
      %v2164 = vpop.f32.mrf.mxu0
      %v2165 = vadd.f32 0.0, %v2164
      %2166 = vdwg.mxu0
      %v2167 = vrot.slane %v2118, 1
      %v2168 = vrot.slane %v2120, 1
      %v2169 = vrot.slane %v2123, 1
      %v2170 = vrot.slane %v2125, 1
      %v2171 = vrot.slane %v2128, 1
      %v2172 = vrot.slane %v2130, 1
      %v2173 = vrot.slane %v2133, 1
      %v2174 = vrot.slane %v2135, 1
      %v2175 = vrot.slane %v2138, 1
      %v2176 = vrot.slane %v2140, 1
      %v2177 = vrot.slane %v2143, 1
      %v2178 = vrot.slane %v2145, 1
      %v2179 = vrot.slane %v2148, 1
      %v2180 = vrot.slane %v2150, 1
      %v2181 = vrot.slane %v2153, 1
      %v2182 = vrot.slane %v2155, 1
      %v2183 = vrot.slane %v2158, 1
      %v2184 = vrot.slane %v2160, 1
      %v2185 = vrot.slane %v2163, 1
      %v2186 = vrot.slane %v2165, 1
      %v2187 = vsel %vm766, %v2185, %v2186
      %v2188 = vsel %vm766, %v2184, %v2185
      %v2189 = vsel %vm766, %v2183, %v2184
      %v2190 = vsel %vm766, %v2182, %v2183
      %v2191 = vsel %vm766, %v2181, %v2182
      %v2192 = vsel %vm766, %v2180, %v2181
      %v2193 = vsel %vm766, %v2179, %v2180
      %v2194 = vsel %vm766, %v2178, %v2179
      %v2195 = vsel %vm766, %v2177, %v2178
      %v2196 = vsel %vm766, %v2176, %v2177
      %v2197 = vsel %vm766, %v2175, %v2176
      %v2198 = vsel %vm766, %v2174, %v2175
      %v2199 = vsel %vm766, %v2173, %v2174
      %v2200 = vsel %vm766, %v2172, %v2173
      %v2201 = vsel %vm766, %v2171, %v2172
      %v2202 = vsel %vm766, %v2170, %v2171
      %v2203 = vsel %vm766, %v2169, %v2170
      %v2204 = vsel %vm766, %v2168, %v2169
      %v2205 = vsel %vm766, %v2167, %v2168
      %v2206 = vsel %vm766, %v2186, %v2167
      %v2207 = vadd.f32 %v2083, %v2205
      %v2208 = vadd.f32 %v2084, %v2204
      %v2209 = vadd.f32 %v2085, %v2203
      %v2210 = vadd.f32 %v2086, %v2202
      %v2211 = vadd.f32 %v2087, %v2201
      %v2212 = vadd.f32 %v2088, %v2200
      %v2213 = vadd.f32 %v2089, %v2199
      %v2214 = vadd.f32 %v2090, %v2198
      %v2215 = vadd.f32 %v2091, %v2197
      %v2216 = vadd.f32 %v2092, %v2196
      %v2217 = vadd.f32 %v2093, %v2195
      %v2218 = vadd.f32 %v2094, %v2194
      %v2219 = vadd.f32 %v2095, %v2193
      %v2220 = vadd.f32 %v2096, %v2192
      %v2221 = vadd.f32 %v2097, %v2191
      %v2222 = vadd.f32 %v2098, %v2190
      %v2223 = vadd.f32 %v2099, %v2189
      %v2224 = vadd.f32 %v2100, %v2188
      %v2225 = vadd.f32 %v2101, %v2187
      %v2226 = vadd.f32 %v2102, %v2206
      %vm2227 = vcmp.gt.f32.partialorder %v2207, 0.0
      %vm2228 = vcmp.gt.f32.partialorder %v2208, 0.0
      %vm2229 = vcmp.gt.f32.partialorder %v2209, 0.0
      %vm2230 = vcmp.gt.f32.partialorder %v2210, 0.0
      %vm2231 = vcmp.gt.f32.partialorder %v2211, 0.0
      %vm2232 = vcmp.gt.f32.partialorder %v2212, 0.0
      %vm2233 = vcmp.gt.f32.partialorder %v2213, 0.0
      %vm2234 = vcmp.gt.f32.partialorder %v2214, 0.0
      %vm2235 = vcmp.gt.f32.partialorder %v2215, 0.0
      %vm2236 = vcmp.gt.f32.partialorder %v2216, 0.0
      %vm2237 = vcmp.gt.f32.partialorder %v2217, 0.0
      %vm2238 = vcmp.gt.f32.partialorder %v2218, 0.0
      %vm2239 = vcmp.gt.f32.partialorder %v2219, 0.0
      %vm2240 = vcmp.gt.f32.partialorder %v2220, 0.0
      %vm2241 = vcmp.gt.f32.partialorder %v2221, 0.0
      %vm2242 = vcmp.gt.f32.partialorder %v2222, 0.0
      %vm2243 = vcmp.gt.f32.partialorder %v2223, 0.0
      %vm2244 = vcmp.gt.f32.partialorder %v2224, 0.0
      %vm2245 = vcmp.gt.f32.partialorder %v2225, 0.0
      %vm2246 = vcmp.gt.f32.partialorder %v2226, 0.0
      %v2247 = vmul.f32 %v2207, 0.2
      %v2248 = vmul.f32 %v2208, 0.2
      %v2249 = vmul.f32 %v2209, 0.2
      %v2250 = vmul.f32 %v2210, 0.2
      %v2251 = vmul.f32 %v2211, 0.2
      %v2252 = vmul.f32 %v2212, 0.2
      %v2253 = vmul.f32 %v2213, 0.2
      %v2254 = vmul.f32 %v2214, 0.2
      %v2255 = vmul.f32 %v2215, 0.2
      %v2256 = vmul.f32 %v2216, 0.2
      %v2257 = vmul.f32 %v2217, 0.2
      %v2258 = vmul.f32 %v2218, 0.2
      %v2259 = vmul.f32 %v2219, 0.2
      %v2260 = vmul.f32 %v2220, 0.2
      %v2261 = vmul.f32 %v2221, 0.2
      %v2262 = vmul.f32 %v2222, 0.2
      %v2263 = vmul.f32 %v2223, 0.2
      %v2264 = vmul.f32 %v2224, 0.2
      %v2265 = vmul.f32 %v2225, 0.2
      %v2266 = vmul.f32 %v2226, 0.2
      %v2267 = vsel %vm2227, %v2207, %v2247
      %v2268 = vsel %vm2228, %v2208, %v2248
      %v2269 = vsel %vm2229, %v2209, %v2249
      %v2270 = vsel %vm2230, %v2210, %v2250
      %v2271 = vsel %vm2231, %v2211, %v2251
      %v2272 = vsel %vm2232, %v2212, %v2252
      %v2273 = vsel %vm2233, %v2213, %v2253
      %v2274 = vsel %vm2234, %v2214, %v2254
      %v2275 = vsel %vm2235, %v2215, %v2255
      %v2276 = vsel %vm2236, %v2216, %v2256
      %v2277 = vsel %vm2237, %v2217, %v2257
      %v2278 = vsel %vm2238, %v2218, %v2258
      %v2279 = vsel %vm2239, %v2219, %v2259
      %v2280 = vsel %vm2240, %v2220, %v2260
      %v2281 = vsel %vm2241, %v2221, %v2261
      %v2282 = vsel %vm2242, %v2222, %v2262
      %v2283 = vsel %vm2243, %v2223, %v2263
      %v2284 = vsel %vm2244, %v2224, %v2264
      %v2285 = vsel %vm2245, %v2225, %v2265
      %v2286 = vsel %vm2246, %v2226, %v2266
      %v2287 = vmul.f32 %v2267, %v2267
      %v2288 = vmul.f32 %v2268, %v2268
      %v2289 = vmul.f32 %v2269, %v2269
      %v2290 = vmul.f32 %v2270, %v2270
      %v2291 = vmul.f32 %v2271, %v2271
      %v2292 = vmul.f32 %v2272, %v2272
      %v2293 = vmul.f32 %v2273, %v2273
      %v2294 = vmul.f32 %v2274, %v2274
      %v2295 = vmul.f32 %v2275, %v2275
      %v2296 = vmul.f32 %v2276, %v2276
      %v2297 = vmul.f32 %v2277, %v2277
      %v2298 = vmul.f32 %v2278, %v2278
      %v2299 = vmul.f32 %v2279, %v2279
      %v2300 = vmul.f32 %v2280, %v2280
      %v2301 = vmul.f32 %v2281, %v2281
      %v2302 = vmul.f32 %v2282, %v2282
      %v2303 = vmul.f32 %v2283, %v2283
      %v2304 = vmul.f32 %v2284, %v2284
      %v2305 = vmul.f32 %v2285, %v2285
      %v2306 = vmul.f32 %v2286, %v2286
      %v2307 = vsel %vm1235, %v2287, 0.0
      %2308 = vadd.xlane.f32.xlu0 %v2307
      %v2309 = vpop.xlane.xlu0 %2308
      %v2310 = vsel %vm1235, %v2288, 0.0
      %2311 = vadd.xlane.f32.xlu0 %v2310
      %v2312 = vpop.xlane.xlu0 %2311
      %v2313 = vsel %vm1235, %v2289, 0.0
      %2314 = vadd.xlane.f32.xlu0 %v2313
      %v2315 = vpop.xlane.xlu0 %2314
      %v2316 = vsel %vm1235, %v2290, 0.0
      %2317 = vadd.xlane.f32.xlu0 %v2316
      %v2318 = vpop.xlane.xlu0 %2317
      %v2319 = vsel %vm1235, %v2291, 0.0
      %2320 = vadd.xlane.f32.xlu0 %v2319
      %v2321 = vpop.xlane.xlu0 %2320
      %v2322 = vsel %vm1235, %v2292, 0.0
      %2323 = vadd.xlane.f32.xlu0 %v2322
      %v2324 = vpop.xlane.xlu0 %2323
      %v2325 = vsel %vm1235, %v2293, 0.0
      %2326 = vadd.xlane.f32.xlu0 %v2325
      %v2327 = vpop.xlane.xlu0 %2326
      %v2328 = vsel %vm1235, %v2294, 0.0
      %2329 = vadd.xlane.f32.xlu0 %v2328
      %v2330 = vpop.xlane.xlu0 %2329
      %v2331 = vsel %vm1235, %v2295, 0.0
      %2332 = vadd.xlane.f32.xlu0 %v2331
      %v2333 = vpop.xlane.xlu0 %2332
      %v2334 = vsel %vm1235, %v2296, 0.0
      %2335 = vadd.xlane.f32.xlu0 %v2334
      %v2336 = vpop.xlane.xlu0 %2335
      %v2337 = vsel %vm1235, %v2297, 0.0
      %2338 = vadd.xlane.f32.xlu0 %v2337
      %v2339 = vpop.xlane.xlu0 %2338
      %v2340 = vsel %vm1235, %v2298, 0.0
      %2341 = vadd.xlane.f32.xlu0 %v2340
      %v2342 = vpop.xlane.xlu0 %2341
      %v2343 = vsel %vm1235, %v2299, 0.0
      %2344 = vadd.xlane.f32.xlu0 %v2343
      %v2345 = vpop.xlane.xlu0 %2344
      %v2346 = vsel %vm1235, %v2300, 0.0
      %2347 = vadd.xlane.f32.xlu0 %v2346
      %v2348 = vpop.xlane.xlu0 %2347
      %v2349 = vsel %vm1235, %v2301, 0.0
      %2350 = vadd.xlane.f32.xlu0 %v2349
      %v2351 = vpop.xlane.xlu0 %2350
      %v2352 = vsel %vm1235, %v2302, 0.0
      %2353 = vadd.xlane.f32.xlu0 %v2352
      %v2354 = vpop.xlane.xlu0 %2353
      %v2355 = vsel %vm1235, %v2303, 0.0
      %2356 = vadd.xlane.f32.xlu0 %v2355
      %v2357 = vpop.xlane.xlu0 %2356
      %v2358 = vsel %vm1235, %v2304, 0.0
      %2359 = vadd.xlane.f32.xlu0 %v2358
      %v2360 = vpop.xlane.xlu0 %2359
      %v2361 = vsel %vm1235, %v2305, 0.0
      %2362 = vadd.xlane.f32.xlu0 %v2361
      %v2363 = vpop.xlane.xlu0 %2362
      %v2364 = vsel %vm1235, %v2306, 0.0
      %2365 = vadd.xlane.f32.xlu0 %v2364
      %v2366 = vpop.xlane.xlu0 %2365
      %v2367 = vmul.f32 %v2309, %v1302
      %v2368 = vmul.f32 %v2312, %v1302
      %v2369 = vmul.f32 %v2315, %v1302
      %v2370 = vmul.f32 %v2318, %v1302
      %v2371 = vmul.f32 %v2321, %v1302
      %v2372 = vmul.f32 %v2324, %v1302
      %v2373 = vmul.f32 %v2327, %v1302
      %v2374 = vmul.f32 %v2330, %v1302
      %v2375 = vmul.f32 %v2333, %v1302
      %v2376 = vmul.f32 %v2336, %v1302
      %v2377 = vmul.f32 %v2339, %v1302
      %v2378 = vmul.f32 %v2342, %v1302
      %v2379 = vmul.f32 %v2345, %v1302
      %v2380 = vmul.f32 %v2348, %v1302
      %v2381 = vmul.f32 %v2351, %v1302
      %v2382 = vmul.f32 %v2354, %v1302
      %v2383 = vmul.f32 %v2357, %v1302
      %v2384 = vmul.f32 %v2360, %v1302
      %v2385 = vmul.f32 %v2363, %v1302
      %v2386 = vmul.f32 %v2366, %v1302
      %v2387 = vadd.f32 %v2367, 1e-08
      %v2388 = vadd.f32 %v2368, 1e-08
      %v2389 = vadd.f32 %v2369, 1e-08
      %v2390 = vadd.f32 %v2370, 1e-08
      %v2391 = vadd.f32 %v2371, 1e-08
      %v2392 = vadd.f32 %v2372, 1e-08
      %v2393 = vadd.f32 %v2373, 1e-08
      %v2394 = vadd.f32 %v2374, 1e-08
      %v2395 = vadd.f32 %v2375, 1e-08
      %v2396 = vadd.f32 %v2376, 1e-08
      %v2397 = vadd.f32 %v2377, 1e-08
      %v2398 = vadd.f32 %v2378, 1e-08
      %v2399 = vadd.f32 %v2379, 1e-08
      %v2400 = vadd.f32 %v2380, 1e-08
      %v2401 = vadd.f32 %v2381, 1e-08
      %v2402 = vadd.f32 %v2382, 1e-08
      %v2403 = vadd.f32 %v2383, 1e-08
      %v2404 = vadd.f32 %v2384, 1e-08
      %v2405 = vadd.f32 %v2385, 1e-08
      %v2406 = vadd.f32 %v2386, 1e-08
      %v2407 = vrsqrt.pop %v2387
      %v2408 = vmul.f32 %v2407, %v2387
      %v2409 = vmul.f32 %v2408, %v2407
      %v2410 = vmul.f32 0.5, %v2409
      %v2411 = vsub.f32 1.5, %v2410
      %v2412 = vmul.f32 %v2407, %v2411
      %vm2413 = vweird.f32 %v2387
      %vm2414 = vweird.f32 %v2407
      %vm2415 = vmor %vm2413, %vm2414
      %v2416 = vsel %vm2415, %v2407, %v2412
      %v2417 = vrsqrt.pop %v2388
      %v2418 = vmul.f32 %v2417, %v2388
      %v2419 = vmul.f32 %v2418, %v2417
      %v2420 = vmul.f32 0.5, %v2419
      %v2421 = vsub.f32 1.5, %v2420
      %v2422 = vmul.f32 %v2417, %v2421
      %vm2423 = vweird.f32 %v2388
      %vm2424 = vweird.f32 %v2417
      %vm2425 = vmor %vm2423, %vm2424
      %v2426 = vsel %vm2425, %v2417, %v2422
      %v2427 = vrsqrt.pop %v2389
      %v2428 = vmul.f32 %v2427, %v2389
      %v2429 = vmul.f32 %v2428, %v2427
      %v2430 = vmul.f32 0.5, %v2429
      %v2431 = vsub.f32 1.5, %v2430
      %v2432 = vmul.f32 %v2427, %v2431
      %vm2433 = vweird.f32 %v2389
      %vm2434 = vweird.f32 %v2427
      %vm2435 = vmor %vm2433, %vm2434
      %v2436 = vsel %vm2435, %v2427, %v2432
      %v2437 = vrsqrt.pop %v2390
      %v2438 = vmul.f32 %v2437, %v2390
      %v2439 = vmul.f32 %v2438, %v2437
      %v2440 = vmul.f32 0.5, %v2439
      %v2441 = vsub.f32 1.5, %v2440
      %v2442 = vmul.f32 %v2437, %v2441
      %vm2443 = vweird.f32 %v2390
      %vm2444 = vweird.f32 %v2437
      %vm2445 = vmor %vm2443, %vm2444
      %v2446 = vsel %vm2445, %v2437, %v2442
      %v2447 = vrsqrt.pop %v2391
      %v2448 = vmul.f32 %v2447, %v2391
      %v2449 = vmul.f32 %v2448, %v2447
      %v2450 = vmul.f32 0.5, %v2449
      %v2451 = vsub.f32 1.5, %v2450
      %v2452 = vmul.f32 %v2447, %v2451
      %vm2453 = vweird.f32 %v2391
      %vm2454 = vweird.f32 %v2447
      %vm2455 = vmor %vm2453, %vm2454
      %v2456 = vsel %vm2455, %v2447, %v2452
      %v2457 = vrsqrt.pop %v2392
      %v2458 = vmul.f32 %v2457, %v2392
      %v2459 = vmul.f32 %v2458, %v2457
      %v2460 = vmul.f32 0.5, %v2459
      %v2461 = vsub.f32 1.5, %v2460
      %v2462 = vmul.f32 %v2457, %v2461
      %vm2463 = vweird.f32 %v2392
      %vm2464 = vweird.f32 %v2457
      %vm2465 = vmor %vm2463, %vm2464
      %v2466 = vsel %vm2465, %v2457, %v2462
      %v2467 = vrsqrt.pop %v2393
      %v2468 = vmul.f32 %v2467, %v2393
      %v2469 = vmul.f32 %v2468, %v2467
      %v2470 = vmul.f32 0.5, %v2469
      %v2471 = vsub.f32 1.5, %v2470
      %v2472 = vmul.f32 %v2467, %v2471
      %vm2473 = vweird.f32 %v2393
      %vm2474 = vweird.f32 %v2467
      %vm2475 = vmor %vm2473, %vm2474
      %v2476 = vsel %vm2475, %v2467, %v2472
      %v2477 = vrsqrt.pop %v2394
      %v2478 = vmul.f32 %v2477, %v2394
      %v2479 = vmul.f32 %v2478, %v2477
      %v2480 = vmul.f32 0.5, %v2479
      %v2481 = vsub.f32 1.5, %v2480
      %v2482 = vmul.f32 %v2477, %v2481
      %vm2483 = vweird.f32 %v2394
      %vm2484 = vweird.f32 %v2477
      %vm2485 = vmor %vm2483, %vm2484
      %v2486 = vsel %vm2485, %v2477, %v2482
      %v2487 = vrsqrt.pop %v2395
      %v2488 = vmul.f32 %v2487, %v2395
      %v2489 = vmul.f32 %v2488, %v2487
      %v2490 = vmul.f32 0.5, %v2489
      %v2491 = vsub.f32 1.5, %v2490
      %v2492 = vmul.f32 %v2487, %v2491
      %vm2493 = vweird.f32 %v2395
      %vm2494 = vweird.f32 %v2487
      %vm2495 = vmor %vm2493, %vm2494
      %v2496 = vsel %vm2495, %v2487, %v2492
      %v2497 = vrsqrt.pop %v2396
      %v2498 = vmul.f32 %v2497, %v2396
      %v2499 = vmul.f32 %v2498, %v2497
      %v2500 = vmul.f32 0.5, %v2499
      %v2501 = vsub.f32 1.5, %v2500
      %v2502 = vmul.f32 %v2497, %v2501
      %vm2503 = vweird.f32 %v2396
      %vm2504 = vweird.f32 %v2497
      %vm2505 = vmor %vm2503, %vm2504
      %v2506 = vsel %vm2505, %v2497, %v2502
      %v2507 = vrsqrt.pop %v2397
      %v2508 = vmul.f32 %v2507, %v2397
      %v2509 = vmul.f32 %v2508, %v2507
      %v2510 = vmul.f32 0.5, %v2509
      %v2511 = vsub.f32 1.5, %v2510
      %v2512 = vmul.f32 %v2507, %v2511
      %vm2513 = vweird.f32 %v2397
      %vm2514 = vweird.f32 %v2507
      %vm2515 = vmor %vm2513, %vm2514
      %v2516 = vsel %vm2515, %v2507, %v2512
      %v2517 = vrsqrt.pop %v2398
      %v2518 = vmul.f32 %v2517, %v2398
      %v2519 = vmul.f32 %v2518, %v2517
      %v2520 = vmul.f32 0.5, %v2519
      %v2521 = vsub.f32 1.5, %v2520
      %v2522 = vmul.f32 %v2517, %v2521
      %vm2523 = vweird.f32 %v2398
      %vm2524 = vweird.f32 %v2517
      %vm2525 = vmor %vm2523, %vm2524
      %v2526 = vsel %vm2525, %v2517, %v2522
      %v2527 = vrsqrt.pop %v2399
      %v2528 = vmul.f32 %v2527, %v2399
      %v2529 = vmul.f32 %v2528, %v2527
      %v2530 = vmul.f32 0.5, %v2529
      %v2531 = vsub.f32 1.5, %v2530
      %v2532 = vmul.f32 %v2527, %v2531
      %vm2533 = vweird.f32 %v2399
      %vm2534 = vweird.f32 %v2527
      %vm2535 = vmor %vm2533, %vm2534
      %v2536 = vsel %vm2535, %v2527, %v2532
      %v2537 = vrsqrt.pop %v2400
      %v2538 = vmul.f32 %v2537, %v2400
      %v2539 = vmul.f32 %v2538, %v2537
      %v2540 = vmul.f32 0.5, %v2539
      %v2541 = vsub.f32 1.5, %v2540
      %v2542 = vmul.f32 %v2537, %v2541
      %vm2543 = vweird.f32 %v2400
      %vm2544 = vweird.f32 %v2537
      %vm2545 = vmor %vm2543, %vm2544
      %v2546 = vsel %vm2545, %v2537, %v2542
      %v2547 = vrsqrt.pop %v2401
      %v2548 = vmul.f32 %v2547, %v2401
      %v2549 = vmul.f32 %v2548, %v2547
      %v2550 = vmul.f32 0.5, %v2549
      %v2551 = vsub.f32 1.5, %v2550
      %v2552 = vmul.f32 %v2547, %v2551
      %vm2553 = vweird.f32 %v2401
      %vm2554 = vweird.f32 %v2547
      %vm2555 = vmor %vm2553, %vm2554
      %v2556 = vsel %vm2555, %v2547, %v2552
      %v2557 = vrsqrt.pop %v2402
      %v2558 = vmul.f32 %v2557, %v2402
      %v2559 = vmul.f32 %v2558, %v2557
      %v2560 = vmul.f32 0.5, %v2559
      %v2561 = vsub.f32 1.5, %v2560
      %v2562 = vmul.f32 %v2557, %v2561
      %vm2563 = vweird.f32 %v2402
      %vm2564 = vweird.f32 %v2557
      %vm2565 = vmor %vm2563, %vm2564
      %v2566 = vsel %vm2565, %v2557, %v2562
      %v2567 = vrsqrt.pop %v2403
      %v2568 = vmul.f32 %v2567, %v2403
      %v2569 = vmul.f32 %v2568, %v2567
      %v2570 = vmul.f32 0.5, %v2569
      %v2571 = vsub.f32 1.5, %v2570
      %v2572 = vmul.f32 %v2567, %v2571
      %vm2573 = vweird.f32 %v2403
      %vm2574 = vweird.f32 %v2567
      %vm2575 = vmor %vm2573, %vm2574
      %v2576 = vsel %vm2575, %v2567, %v2572
      %v2577 = vrsqrt.pop %v2404
      %v2578 = vmul.f32 %v2577, %v2404
      %v2579 = vmul.f32 %v2578, %v2577
      %v2580 = vmul.f32 0.5, %v2579
      %v2581 = vsub.f32 1.5, %v2580
      %v2582 = vmul.f32 %v2577, %v2581
      %vm2583 = vweird.f32 %v2404
      %vm2584 = vweird.f32 %v2577
      %vm2585 = vmor %vm2583, %vm2584
      %v2586 = vsel %vm2585, %v2577, %v2582
      %v2587 = vrsqrt.pop %v2405
      %v2588 = vmul.f32 %v2587, %v2405
      %v2589 = vmul.f32 %v2588, %v2587
      %v2590 = vmul.f32 0.5, %v2589
      %v2591 = vsub.f32 1.5, %v2590
      %v2592 = vmul.f32 %v2587, %v2591
      %vm2593 = vweird.f32 %v2405
      %vm2594 = vweird.f32 %v2587
      %vm2595 = vmor %vm2593, %vm2594
      %v2596 = vsel %vm2595, %v2587, %v2592
      %v2597 = vrsqrt.pop %v2406
      %v2598 = vmul.f32 %v2597, %v2406
      %v2599 = vmul.f32 %v2598, %v2597
      %v2600 = vmul.f32 0.5, %v2599
      %v2601 = vsub.f32 1.5, %v2600
      %v2602 = vmul.f32 %v2597, %v2601
      %vm2603 = vweird.f32 %v2406
      %vm2604 = vweird.f32 %v2597
      %vm2605 = vmor %vm2603, %vm2604
      %v2606 = vsel %vm2605, %v2597, %v2602
      %v2607 = vmul.f32 %v2267, %v2416
      %v2608 = vmul.f32 %v2268, %v2426
      %v2609 = vmul.f32 %v2269, %v2436
      %v2610 = vmul.f32 %v2270, %v2446
      %v2611 = vmul.f32 %v2271, %v2456
      %v2612 = vmul.f32 %v2272, %v2466
      %v2613 = vmul.f32 %v2273, %v2476
      %v2614 = vmul.f32 %v2274, %v2486
      %v2615 = vmul.f32 %v2275, %v2496
      %v2616 = vmul.f32 %v2276, %v2506
      %v2617 = vmul.f32 %v2277, %v2516
      %v2618 = vmul.f32 %v2278, %v2526
      %v2619 = vmul.f32 %v2279, %v2536
      %v2620 = vmul.f32 %v2280, %v2546
      %v2621 = vmul.f32 %v2281, %v2556
      %v2622 = vmul.f32 %v2282, %v2566
      %v2623 = vmul.f32 %v2283, %v2576
      %v2624 = vmul.f32 %v2284, %v2586
      %v2625 = vmul.f32 %v2285, %v2596
      %v2626 = vmul.f32 %v2286, %v2606
      %v2627 = vadd.s32 %v556, 8
      %v2628 = vadd.s32 %v556, 16
      %v2629 = vadd.s32 %v556, 24
      %p2630 = scmp.eq.s32.totalorder %s25, 0
      %s2631 = scalar_select %p2630, 1, 0
      %p2632 = scmp.eq.s32.totalorder %s25, 1
      %s2633 = scalar_select %p2632, 8, 9
      %v2634 = vstv %s2631
      %vm2635 = vcmp.le.s32.totalorder %v2634, 0
      %vm2636 = vcmp.le.s32.totalorder %v2634, 1
      %vm2637 = vcmp.le.s32.totalorder %v2634, 2
      %vm2638 = vcmp.le.s32.totalorder %v2634, 3
      %vm2639 = vcmp.le.s32.totalorder %v2634, 4
      %vm2640 = vcmp.le.s32.totalorder %v2634, 5
      %vm2641 = vcmp.le.s32.totalorder %v2634, 6
      %vm2642 = vcmp.le.s32.totalorder %v2634, 7
      %vm2643 = vcmp.le.s32.totalorder %v2634, 8
      %vm2644 = vcmp.le.s32.totalorder %v2634, 9
      %v2645 = vstv %s2633
      %vm2646 = vcmp.ge.s32.totalorder %v2645, 0
      %vm2647 = vcmp.ge.s32.totalorder %v2645, 1
      %vm2648 = vcmp.ge.s32.totalorder %v2645, 2
      %vm2649 = vcmp.ge.s32.totalorder %v2645, 3
      %vm2650 = vcmp.ge.s32.totalorder %v2645, 4
      %vm2651 = vcmp.ge.s32.totalorder %v2645, 5
      %vm2652 = vcmp.ge.s32.totalorder %v2645, 6
      %vm2653 = vcmp.ge.s32.totalorder %v2645, 7
      %vm2654 = vcmp.ge.s32.totalorder %v2645, 8
      %vm2655 = vcmp.ge.s32.totalorder %v2645, 9
      %vm2656 = vmand %vm2635, %vm2646
      %vm2657 = vmand %vm2636, %vm2647
      %vm2658 = vmand %vm2637, %vm2648
      %vm2659 = vmand %vm2638, %vm2649
      %vm2660 = vmand %vm2639, %vm2650
      %vm2661 = vmand %vm2640, %vm2651
      %vm2662 = vmand %vm2641, %vm2652
      %vm2663 = vmand %vm2642, %vm2653
      %vm2664 = vmand %vm2643, %vm2654
      %vm2665 = vmand %vm2644, %vm2655
      %vm2666 = vcmp.lt.s32.totalorder %v556, 16
      %vm2667 = vcmp.lt.s32.totalorder %v2627, 16
      %vm2668 = vcmp.lt.s32.totalorder %v2628, 16
      %vm2669 = vcmp.lt.s32.totalorder %v2629, 16
      %vm2670 = vmand %vm2656, %vm2666
      %vm2671 = vmand %vm2656, %vm2667
      %vm2672 = vmand %vm2656, %vm2668
      %vm2673 = vmand %vm2656, %vm2669
      %vm2674 = vmand %vm2657, %vm2666
      %vm2675 = vmand %vm2657, %vm2667
      %vm2676 = vmand %vm2657, %vm2668
      %vm2677 = vmand %vm2657, %vm2669
      %vm2678 = vmand %vm2658, %vm2666
      %vm2679 = vmand %vm2658, %vm2667
      %vm2680 = vmand %vm2658, %vm2668
      %vm2681 = vmand %vm2658, %vm2669
      %vm2682 = vmand %vm2659, %vm2666
      %vm2683 = vmand %vm2659, %vm2667
      %vm2684 = vmand %vm2659, %vm2668
      %vm2685 = vmand %vm2659, %vm2669
      %vm2686 = vmand %vm2660, %vm2666
      %vm2687 = vmand %vm2660, %vm2667
      %vm2688 = vmand %vm2660, %vm2668
      %vm2689 = vmand %vm2660, %vm2669
      %vm2690 = vmand %vm2661, %vm2666
      %vm2691 = vmand %vm2661, %vm2667
      %vm2692 = vmand %vm2661, %vm2668
      %vm2693 = vmand %vm2661, %vm2669
      %vm2694 = vmand %vm2662, %vm2666
      %vm2695 = vmand %vm2662, %vm2667
      %vm2696 = vmand %vm2662, %vm2668
      %vm2697 = vmand %vm2662, %vm2669
      %vm2698 = vmand %vm2663, %vm2666
      %vm2699 = vmand %vm2663, %vm2667
      %vm2700 = vmand %vm2663, %vm2668
      %vm2701 = vmand %vm2663, %vm2669
      %vm2702 = vmand %vm2664, %vm2666
      %vm2703 = vmand %vm2664, %vm2667
      %vm2704 = vmand %vm2664, %vm2668
      %vm2705 = vmand %vm2664, %vm2669
      %vm2706 = vmand %vm2665, %vm2666
      %vm2707 = vmand %vm2665, %vm2667
      %vm2708 = vmand %vm2665, %vm2668
      %vm2709 = vmand %vm2665, %vm2669
      %v2710 = vsel %vm2670, 1, 0
      %v2711 = vsel %vm2671, 1, 0
      %v2712 = vsel %vm2672, 1, 0
      %v2713 = vsel %vm2673, 1, 0
      %v2714 = vsel %vm2674, 1, 0
      %v2715 = vsel %vm2675, 1, 0
      %v2716 = vsel %vm2676, 1, 0
      %v2717 = vsel %vm2677, 1, 0
      %v2718 = vsel %vm2678, 1, 0
      %v2719 = vsel %vm2679, 1, 0
      %v2720 = vsel %vm2680, 1, 0
      %v2721 = vsel %vm2681, 1, 0
      %v2722 = vsel %vm2682, 1, 0
      %v2723 = vsel %vm2683, 1, 0
      %v2724 = vsel %vm2684, 1, 0
      %v2725 = vsel %vm2685, 1, 0
      %v2726 = vsel %vm2686, 1, 0
      %v2727 = vsel %vm2687, 1, 0
      %v2728 = vsel %vm2688, 1, 0
      %v2729 = vsel %vm2689, 1, 0
      %v2730 = vsel %vm2690, 1, 0
      %v2731 = vsel %vm2691, 1, 0
      %v2732 = vsel %vm2692, 1, 0
      %v2733 = vsel %vm2693, 1, 0
      %v2734 = vsel %vm2694, 1, 0
      %v2735 = vsel %vm2695, 1, 0
      %v2736 = vsel %vm2696, 1, 0
      %v2737 = vsel %vm2697, 1, 0
      %v2738 = vsel %vm2698, 1, 0
      %v2739 = vsel %vm2699, 1, 0
      %v2740 = vsel %vm2700, 1, 0
      %v2741 = vsel %vm2701, 1, 0
      %v2742 = vsel %vm2702, 1, 0
      %v2743 = vsel %vm2703, 1, 0
      %v2744 = vsel %vm2704, 1, 0
      %v2745 = vsel %vm2705, 1, 0
      %v2746 = vsel %vm2706, 1, 0
      %v2747 = vsel %vm2707, 1, 0
      %v2748 = vsel %vm2708, 1, 0
      %v2749 = vsel %vm2709, 1, 0
      %vm2750 = vcmp.eq.s32.totalorder %v2710, 1
      %vm2751 = vcmp.eq.s32.totalorder %v2711, 1
      %vm2752 = vcmp.eq.s32.totalorder %v2712, 1
      %vm2753 = vcmp.eq.s32.totalorder %v2713, 1
      %vm2754 = vcmp.eq.s32.totalorder %v2714, 1
      %vm2755 = vcmp.eq.s32.totalorder %v2715, 1
      %vm2756 = vcmp.eq.s32.totalorder %v2716, 1
      %vm2757 = vcmp.eq.s32.totalorder %v2717, 1
      %vm2758 = vcmp.eq.s32.totalorder %v2718, 1
      %vm2759 = vcmp.eq.s32.totalorder %v2719, 1
      %vm2760 = vcmp.eq.s32.totalorder %v2720, 1
      %vm2761 = vcmp.eq.s32.totalorder %v2721, 1
      %vm2762 = vcmp.eq.s32.totalorder %v2722, 1
      %vm2763 = vcmp.eq.s32.totalorder %v2723, 1
      %vm2764 = vcmp.eq.s32.totalorder %v2724, 1
      %vm2765 = vcmp.eq.s32.totalorder %v2725, 1
      %vm2766 = vcmp.eq.s32.totalorder %v2726, 1
      %vm2767 = vcmp.eq.s32.totalorder %v2727, 1
      %vm2768 = vcmp.eq.s32.totalorder %v2728, 1
      %vm2769 = vcmp.eq.s32.totalorder %v2729, 1
      %vm2770 = vcmp.eq.s32.totalorder %v2730, 1
      %vm2771 = vcmp.eq.s32.totalorder %v2731, 1
      %vm2772 = vcmp.eq.s32.totalorder %v2732, 1
      %vm2773 = vcmp.eq.s32.totalorder %v2733, 1
      %vm2774 = vcmp.eq.s32.totalorder %v2734, 1
      %vm2775 = vcmp.eq.s32.totalorder %v2735, 1
      %vm2776 = vcmp.eq.s32.totalorder %v2736, 1
      %vm2777 = vcmp.eq.s32.totalorder %v2737, 1
      %vm2778 = vcmp.eq.s32.totalorder %v2738, 1
      %vm2779 = vcmp.eq.s32.totalorder %v2739, 1
      %vm2780 = vcmp.eq.s32.totalorder %v2740, 1
      %vm2781 = vcmp.eq.s32.totalorder %v2741, 1
      %vm2782 = vcmp.eq.s32.totalorder %v2742, 1
      %vm2783 = vcmp.eq.s32.totalorder %v2743, 1
      %vm2784 = vcmp.eq.s32.totalorder %v2744, 1
      %vm2785 = vcmp.eq.s32.totalorder %v2745, 1
      %vm2786 = vcmp.eq.s32.totalorder %v2746, 1
      %vm2787 = vcmp.eq.s32.totalorder %v2747, 1
      %vm2788 = vcmp.eq.s32.totalorder %v2748, 1
      %vm2789 = vcmp.eq.s32.totalorder %v2749, 1
      %v2790 = vsel %vm2750, %v2607, 0.0
      %v2791 = vsel %vm2751, %v2608, 0.0
      %v2792 = vsel %vm2752, %v2609, 0.0
      %v2793 = vsel %vm2753, %v2610, 0.0
      %v2794 = vsel %vm2754, %v1543, 0.0
      %v2795 = vsel %vm2755, %v1544, 0.0
      %v2796 = vsel %vm2756, %v1545, 0.0
      %v2797 = vsel %vm2757, %v1546, 0.0
      %v2798 = vsel %vm2758, %v2611, 0.0
      %v2799 = vsel %vm2759, %v2612, 0.0
      %v2800 = vsel %vm2760, %v2613, 0.0
      %v2801 = vsel %vm2761, %v2614, 0.0
      %v2802 = vsel %vm2762, %v1547, 0.0
      %v2803 = vsel %vm2763, %v1548, 0.0
      %v2804 = vsel %vm2764, %v1549, 0.0
      %v2805 = vsel %vm2765, %v1550, 0.0
      %v2806 = vsel %vm2766, %v2615, 0.0
      %v2807 = vsel %vm2767, %v2616, 0.0
      %v2808 = vsel %vm2768, %v2617, 0.0
      %v2809 = vsel %vm2769, %v2618, 0.0
      %v2810 = vsel %vm2770, %v1551, 0.0
      %v2811 = vsel %vm2771, %v1552, 0.0
      %v2812 = vsel %vm2772, %v1553, 0.0
      %v2813 = vsel %vm2773, %v1554, 0.0
      %v2814 = vsel %vm2774, %v2619, 0.0
      %v2815 = vsel %vm2775, %v2620, 0.0
      %v2816 = vsel %vm2776, %v2621, 0.0
      %v2817 = vsel %vm2777, %v2622, 0.0
      %v2818 = vsel %vm2778, %v1555, 0.0
      %v2819 = vsel %vm2779, %v1556, 0.0
      %v2820 = vsel %vm2780, %v1557, 0.0
      %v2821 = vsel %vm2781, %v1558, 0.0
      %v2822 = vsel %vm2782, %v2623, 0.0
      %v2823 = vsel %vm2783, %v2624, 0.0
      %v2824 = vsel %vm2784, %v2625, 0.0
      %v2825 = vsel %vm2785, %v2626, 0.0
      %v2826 = vsel %vm2786, %v1559, 0.0
      %v2827 = vsel %vm2787, %v1560, 0.0
      %v2828 = vsel %vm2788, %v1561, 0.0
      %v2829 = vsel %vm2789, %v1562, 0.0
      %v2830 = vpack.c.bf16 %v2790, %v2790
      %v2831 = vpack.c.bf16 %v2791, %v2791
      %v2832 = vpack.c.bf16 %v2792, %v2792
      %v2833 = vpack.c.bf16 %v2793, %v2793
      %v2834 = vpack.c.bf16 %v2794, %v2794
      %v2835 = vpack.c.bf16 %v2795, %v2795
      %v2836 = vpack.c.bf16 %v2796, %v2796
      %v2837 = vpack.c.bf16 %v2797, %v2797
      %v2838 = vpack.c.bf16 %v2798, %v2798
      %v2839 = vpack.c.bf16 %v2799, %v2799
      %v2840 = vpack.c.bf16 %v2800, %v2800
      %v2841 = vpack.c.bf16 %v2801, %v2801
      %v2842 = vpack.c.bf16 %v2802, %v2802
      %v2843 = vpack.c.bf16 %v2803, %v2803
      %v2844 = vpack.c.bf16 %v2804, %v2804
      %v2845 = vpack.c.bf16 %v2805, %v2805
      %v2846 = vpack.c.bf16 %v2806, %v2806
      %v2847 = vpack.c.bf16 %v2807, %v2807
      %v2848 = vpack.c.bf16 %v2808, %v2808
      %v2849 = vpack.c.bf16 %v2809, %v2809
      %v2850 = vpack.c.bf16 %v2810, %v2810
      %v2851 = vpack.c.bf16 %v2811, %v2811
      %v2852 = vpack.c.bf16 %v2812, %v2812
      %v2853 = vpack.c.bf16 %v2813, %v2813
      %v2854 = vpack.c.bf16 %v2814, %v2814
      %v2855 = vpack.c.bf16 %v2815, %v2815
      %v2856 = vpack.c.bf16 %v2816, %v2816
      %v2857 = vpack.c.bf16 %v2817, %v2817
      %v2858 = vpack.c.bf16 %v2818, %v2818
      %v2859 = vpack.c.bf16 %v2819, %v2819
      %v2860 = vpack.c.bf16 %v2820, %v2820
      %v2861 = vpack.c.bf16 %v2821, %v2821
      %v2862 = vpack.c.bf16 %v2822, %v2822
      %v2863 = vpack.c.bf16 %v2823, %v2823
      %v2864 = vpack.c.bf16 %v2824, %v2824
      %v2865 = vpack.c.bf16 %v2825, %v2825
      %v2866 = vpack.c.bf16 %v2826, %v2826
      %v2867 = vpack.c.bf16 %v2827, %v2827
      %v2868 = vpack.c.bf16 %v2828, %v2828
      %v2869 = vpack.c.bf16 %v2829, %v2829
      %v2870 = vld [vmem:[%s4] sm:$0x1]
      %v2872 = vperm.slane %v2870, 0
      %v2874 = vld [vmem:[%s3] sm:$0xf]
      %v2875 = vld [vmem:[%s3 + $0x4] sm:$0xf]
      %v2908 = vunpack.c.l.b16 %v2830
      %v2909 = vunpack.c.l.b16 %v2831
      %v2910 = vunpack.c.l.b16 %v2832
      %v2911 = vunpack.c.l.b16 %v2833
      %v2912 = vunpack.c.l.b16 %v2834
      %v2913 = vunpack.c.l.b16 %v2835
      %v2914 = vunpack.c.l.b16 %v2836
      %v2915 = vunpack.c.l.b16 %v2837
      %v2916 = vunpack.c.l.b16 %v2838
      %v2917 = vunpack.c.l.b16 %v2839
      %v2918 = vunpack.c.l.b16 %v2840
      %v2919 = vunpack.c.l.b16 %v2841
      %v2920 = vunpack.c.l.b16 %v2842
      %v2921 = vunpack.c.l.b16 %v2843
      %v2922 = vunpack.c.l.b16 %v2844
      %v2923 = vunpack.c.l.b16 %v2845
      %v2924 = vunpack.c.l.b16 %v2846
      %v2925 = vunpack.c.l.b16 %v2847
      %v2926 = vunpack.c.l.b16 %v2848
      %v2927 = vunpack.c.l.b16 %v2849
      %v2928 = vunpack.c.l.b16 %v2850
      %v2929 = vunpack.c.l.b16 %v2851
      %v2930 = vunpack.c.l.b16 %v2852
      %v2931 = vunpack.c.l.b16 %v2853
      %v2932 = vunpack.c.l.b16 %v2854
      %v2933 = vunpack.c.l.b16 %v2855
      %v2934 = vunpack.c.l.b16 %v2856
      %v2935 = vunpack.c.l.b16 %v2857
      %v2936 = vunpack.c.l.b16 %v2858
      %v2937 = vunpack.c.l.b16 %v2859
      %v2938 = vunpack.c.l.b16 %v2860
      %v2939 = vunpack.c.l.b16 %v2861
      %v2940 = vpack.c.b16 %v2909, %v2908
      %v2941 = vpack.c.b16 %v2911, %v2910
      %v2942 = vpack.c.b16 %v2913, %v2912
      %v2943 = vpack.c.b16 %v2915, %v2914
      %v2944 = vpack.c.b16 %v2917, %v2916
      %v2945 = vpack.c.b16 %v2919, %v2918
      %v2946 = vpack.c.b16 %v2921, %v2920
      %v2947 = vpack.c.b16 %v2923, %v2922
      %v2948 = vpack.c.b16 %v2925, %v2924
      %v2949 = vpack.c.b16 %v2927, %v2926
      %v2950 = vpack.c.b16 %v2929, %v2928
      %v2951 = vpack.c.b16 %v2931, %v2930
      %v2952 = vpack.c.b16 %v2933, %v2932
      %v2953 = vpack.c.b16 %v2935, %v2934
      %v2954 = vpack.c.b16 %v2937, %v2936
      %v2955 = vpack.c.b16 %v2939, %v2938
      %v2958 = vunpack.c.l.b16 %v2874
      %v2959 = vunpack.c.l.b16 %v2875
      %v2960 = vpack.c.b16 %v2959, %v2958
      %v2963 = vsel %vm1235, %v2940, 0
      %v2966 = vsel %vm1235, %v2941, 0
      %v2969 = vsel %vm1235, %v2942, 0
      %v2972 = vsel %vm1235, %v2943, 0
      %v2975 = vsel %vm1235, %v2944, 0
      %v2978 = vsel %vm1235, %v2945, 0
      %v2981 = vsel %vm1235, %v2946, 0
      %v2984 = vsel %vm1235, %v2947, 0
      %v2987 = vsel %vm1235, %v2948, 0
      %v2990 = vsel %vm1235, %v2949, 0
      %v2993 = vsel %vm1235, %v2950, 0
      %v2996 = vsel %vm1235, %v2951, 0
      %v2999 = vsel %vm1235, %v2952, 0
      %v3002 = vsel %vm1235, %v2953, 0
      %v3005 = vsel %vm1235, %v2954, 0
      %v3008 = vsel %vm1235, %v2955, 0
      %3010 = vmatpush.bf16.msra.mxu0 0
      %3011 = vmatpush.bf16.msra.mxu0 0
      %3012 = vmatpush.bf16.msra.mxu0 0
      %3013 = vmatpush.bf16.msra.mxu0 0
      %3014 = vmatpush.bf16.msra.mxu0 0
      %3015 = vmatpush.bf16.msra.mxu0 0
      %3016 = vmatpush.bf16.msra.mxu0 0
      %3017 = vmatpush.bf16.msra.mxu0 %v2960
      %3018 = vmatmul.bf16.gmra.mxu0 %v2963
      %v3019 = vpop.f32.mrf.mxu0
      %v3020 = vadd.f32 0.0, %v3019
      %v3021 = vpop.f32.mrf.mxu0
      %v3022 = vadd.f32 0.0, %v3021
      %3023 = vmatmul.bf16.gmra.mxu0 %v2966
      %v3024 = vpop.f32.mrf.mxu0
      %v3025 = vadd.f32 0.0, %v3024
      %v3026 = vpop.f32.mrf.mxu0
      %v3027 = vadd.f32 0.0, %v3026
      %3028 = vmatmul.bf16.gmra.mxu0 %v2969
      %v3029 = vpop.f32.mrf.mxu0
      %v3030 = vadd.f32 0.0, %v3029
      %v3031 = vpop.f32.mrf.mxu0
      %v3032 = vadd.f32 0.0, %v3031
      %3033 = vmatmul.bf16.gmra.mxu0 %v2972
      %v3034 = vpop.f32.mrf.mxu0
      %v3035 = vadd.f32 0.0, %v3034
      %v3036 = vpop.f32.mrf.mxu0
      %v3037 = vadd.f32 0.0, %v3036
      %3038 = vmatmul.bf16.gmra.mxu0 %v2975
      %v3039 = vpop.f32.mrf.mxu0
      %v3040 = vadd.f32 0.0, %v3039
      %v3041 = vpop.f32.mrf.mxu0
      %v3042 = vadd.f32 0.0, %v3041
      %3043 = vmatmul.bf16.gmra.mxu0 %v2978
      %v3044 = vpop.f32.mrf.mxu0
      %v3045 = vadd.f32 0.0, %v3044
      %v3046 = vpop.f32.mrf.mxu0
      %v3047 = vadd.f32 0.0, %v3046
      %3048 = vmatmul.bf16.gmra.mxu0 %v2981
      %v3049 = vpop.f32.mrf.mxu0
      %v3050 = vadd.f32 0.0, %v3049
      %v3051 = vpop.f32.mrf.mxu0
      %v3052 = vadd.f32 0.0, %v3051
      %3053 = vmatmul.bf16.gmra.mxu0 %v2984
      %v3054 = vpop.f32.mrf.mxu0
      %v3055 = vadd.f32 0.0, %v3054
      %v3056 = vpop.f32.mrf.mxu0
      %v3057 = vadd.f32 0.0, %v3056
      %3058 = vmatmul.bf16.gmra.mxu0 %v2987
      %v3059 = vpop.f32.mrf.mxu0
      %v3060 = vadd.f32 0.0, %v3059
      %v3061 = vpop.f32.mrf.mxu0
      %v3062 = vadd.f32 0.0, %v3061
      %3063 = vmatmul.bf16.gmra.mxu0 %v2990
      %v3064 = vpop.f32.mrf.mxu0
      %v3065 = vadd.f32 0.0, %v3064
      %v3066 = vpop.f32.mrf.mxu0
      %v3067 = vadd.f32 0.0, %v3066
      %3068 = vmatmul.bf16.gmra.mxu0 %v2993
      %v3069 = vpop.f32.mrf.mxu0
      %v3070 = vadd.f32 0.0, %v3069
      %v3071 = vpop.f32.mrf.mxu0
      %v3072 = vadd.f32 0.0, %v3071
      %3073 = vmatmul.bf16.gmra.mxu0 %v2996
      %v3074 = vpop.f32.mrf.mxu0
      %v3075 = vadd.f32 0.0, %v3074
      %v3076 = vpop.f32.mrf.mxu0
      %v3077 = vadd.f32 0.0, %v3076
      %3078 = vmatmul.bf16.gmra.mxu0 %v2999
      %v3079 = vpop.f32.mrf.mxu0
      %v3080 = vadd.f32 0.0, %v3079
      %v3081 = vpop.f32.mrf.mxu0
      %v3082 = vadd.f32 0.0, %v3081
      %3083 = vmatmul.bf16.gmra.mxu0 %v3002
      %v3084 = vpop.f32.mrf.mxu0
      %v3085 = vadd.f32 0.0, %v3084
      %v3086 = vpop.f32.mrf.mxu0
      %v3087 = vadd.f32 0.0, %v3086
      %3088 = vmatmul.bf16.gmra.mxu0 %v3005
      %v3089 = vpop.f32.mrf.mxu0
      %v3090 = vadd.f32 0.0, %v3089
      %v3091 = vpop.f32.mrf.mxu0
      %v3092 = vadd.f32 0.0, %v3091
      %3093 = vmatmul.bf16.gmra.mxu0 %v3008
      %v3094 = vpop.f32.mrf.mxu0
      %v3095 = vadd.f32 0.0, %v3094
      %v3096 = vpop.f32.mrf.mxu0
      %v3097 = vadd.f32 0.0, %v3096
      %3098 = vdwg.mxu0
      %v3099 = vrot.slane %v3020, 7
      %v3100 = vrot.slane %v3022, 7
      %v3101 = vrot.slane %v3025, 7
      %v3102 = vrot.slane %v3027, 7
      %v3103 = vrot.slane %v3030, 7
      %v3104 = vrot.slane %v3032, 7
      %v3105 = vrot.slane %v3035, 7
      %v3106 = vrot.slane %v3037, 7
      %v3107 = vrot.slane %v3040, 7
      %v3108 = vrot.slane %v3042, 7
      %v3109 = vrot.slane %v3045, 7
      %v3110 = vrot.slane %v3047, 7
      %v3111 = vrot.slane %v3050, 7
      %v3112 = vrot.slane %v3052, 7
      %v3113 = vrot.slane %v3055, 7
      %v3114 = vrot.slane %v3057, 7
      %v3115 = vrot.slane %v3060, 7
      %v3116 = vrot.slane %v3062, 7
      %v3117 = vrot.slane %v3065, 7
      %v3118 = vrot.slane %v3067, 7
      %v3119 = vrot.slane %v3070, 7
      %v3120 = vrot.slane %v3072, 7
      %v3121 = vrot.slane %v3075, 7
      %v3122 = vrot.slane %v3077, 7
      %v3123 = vrot.slane %v3080, 7
      %v3124 = vrot.slane %v3082, 7
      %v3125 = vrot.slane %v3085, 7
      %v3126 = vrot.slane %v3087, 7
      %v3127 = vrot.slane %v3090, 7
      %v3128 = vrot.slane %v3092, 7
      %v3129 = vrot.slane %v3095, 7
      %v3130 = vrot.slane %v3097, 7
      %v3131 = vsel %vm557, %v3129, %v3130
      %v3132 = vsel %vm557, %v3128, %v3129
      %v3133 = vsel %vm557, %v3127, %v3128
      %v3134 = vsel %vm557, %v3126, %v3127
      %v3135 = vsel %vm557, %v3125, %v3126
      %v3136 = vsel %vm557, %v3124, %v3125
      %v3137 = vsel %vm557, %v3123, %v3124
      %v3138 = vsel %vm557, %v3122, %v3123
      %v3139 = vsel %vm557, %v3121, %v3122
      %v3140 = vsel %vm557, %v3120, %v3121
      %v3141 = vsel %vm557, %v3119, %v3120
      %v3142 = vsel %vm557, %v3118, %v3119
      %v3143 = vsel %vm557, %v3117, %v3118
      %v3144 = vsel %vm557, %v3116, %v3117
      %v3145 = vsel %vm557, %v3115, %v3116
      %v3146 = vsel %vm557, %v3114, %v3115
      %v3147 = vsel %vm557, %v3113, %v3114
      %v3148 = vsel %vm557, %v3112, %v3113
      %v3149 = vsel %vm557, %v3111, %v3112
      %v3150 = vsel %vm557, %v3110, %v3111
      %v3151 = vsel %vm557, %v3109, %v3110
      %v3152 = vsel %vm557, %v3108, %v3109
      %v3153 = vsel %vm557, %v3107, %v3108
      %v3154 = vsel %vm557, %v3106, %v3107
      %v3155 = vsel %vm557, %v3105, %v3106
      %v3156 = vsel %vm557, %v3104, %v3105
      %v3157 = vsel %vm557, %v3103, %v3104
      %v3158 = vsel %vm557, %v3102, %v3103
      %v3159 = vsel %vm557, %v3101, %v3102
      %v3160 = vsel %vm557, %v3100, %v3101
      %v3161 = vsel %vm557, %v3099, %v3100
      %v3162 = vsel %vm557, %v3130, %v3099
      %v3163 = vadd.f32 %v2872, %v3162
      %v3164 = vadd.f32 %v2872, %v3161
      %v3165 = vadd.f32 %v2872, %v3160
      %v3166 = vadd.f32 %v2872, %v3159
      %v3167 = vadd.f32 %v2872, %v3158
      %v3168 = vadd.f32 %v2872, %v3157
      %v3169 = vadd.f32 %v2872, %v3156
      %v3170 = vadd.f32 %v2872, %v3155
      %v3171 = vadd.f32 %v2872, %v3154
      %v3172 = vadd.f32 %v2872, %v3153
      %v3173 = vadd.f32 %v2872, %v3152
      %v3174 = vadd.f32 %v2872, %v3151
      %v3175 = vadd.f32 %v2872, %v3150
      %v3176 = vadd.f32 %v2872, %v3149
      %v3177 = vadd.f32 %v2872, %v3148
      %v3178 = vadd.f32 %v2872, %v3147
      %v3179 = vadd.f32 %v2872, %v3146
      %v3180 = vadd.f32 %v2872, %v3145
      %v3181 = vadd.f32 %v2872, %v3144
      %v3182 = vadd.f32 %v2872, %v3143
      %v3183 = vadd.f32 %v2872, %v3142
      %v3184 = vadd.f32 %v2872, %v3141
      %v3185 = vadd.f32 %v2872, %v3140
      %v3186 = vadd.f32 %v2872, %v3139
      %v3187 = vadd.f32 %v2872, %v3138
      %v3188 = vadd.f32 %v2872, %v3137
      %v3189 = vadd.f32 %v2872, %v3136
      %v3190 = vadd.f32 %v2872, %v3135
      %v3191 = vadd.f32 %v2872, %v3134
      %v3192 = vadd.f32 %v2872, %v3133
      %v3193 = vadd.f32 %v2872, %v3132
      %v3194 = vadd.f32 %v2872, %v3131
      %s3195 = scalar_lea.vmem %s3, 8
      %v3196 = vld [vmem:[%s3195] sm:$0xf]
      %v3197 = vld [vmem:[%s3195 + $0x4] sm:$0xf]
      %v3200 = vunpack.c.l.b16 %v3196
      %v3201 = vunpack.c.l.b16 %v3197
      %v3202 = vpack.c.b16 %v3201, %v3200
      %3204 = vmatpush.bf16.msra.mxu0 0
      %3205 = vmatpush.bf16.msra.mxu0 0
      %3206 = vmatpush.bf16.msra.mxu0 0
      %3207 = vmatpush.bf16.msra.mxu0 0
      %3208 = vmatpush.bf16.msra.mxu0 0
      %3209 = vmatpush.bf16.msra.mxu0 0
      %3210 = vmatpush.bf16.msra.mxu0 0
      %3211 = vmatpush.bf16.msra.mxu0 %v3202
      %3212 = vmatmul.bf16.gmra.mxu0 %v2963
      %v3213 = vpop.f32.mrf.mxu0
      %v3214 = vadd.f32 0.0, %v3213
      %v3215 = vpop.f32.mrf.mxu0
      %v3216 = vadd.f32 0.0, %v3215
      %3217 = vmatmul.bf16.gmra.mxu0 %v2966
      %v3218 = vpop.f32.mrf.mxu0
      %v3219 = vadd.f32 0.0, %v3218
      %v3220 = vpop.f32.mrf.mxu0
      %v3221 = vadd.f32 0.0, %v3220
      %3222 = vmatmul.bf16.gmra.mxu0 %v2969
      %v3223 = vpop.f32.mrf.mxu0
      %v3224 = vadd.f32 0.0, %v3223
      %v3225 = vpop.f32.mrf.mxu0
      %v3226 = vadd.f32 0.0, %v3225
      %3227 = vmatmul.bf16.gmra.mxu0 %v2972
      %v3228 = vpop.f32.mrf.mxu0
      %v3229 = vadd.f32 0.0, %v3228
      %v3230 = vpop.f32.mrf.mxu0
      %v3231 = vadd.f32 0.0, %v3230
      %3232 = vmatmul.bf16.gmra.mxu0 %v2975
      %v3233 = vpop.f32.mrf.mxu0
      %v3234 = vadd.f32 0.0, %v3233
      %v3235 = vpop.f32.mrf.mxu0
      %v3236 = vadd.f32 0.0, %v3235
      %3237 = vmatmul.bf16.gmra.mxu0 %v2978
      %v3238 = vpop.f32.mrf.mxu0
      %v3239 = vadd.f32 0.0, %v3238
      %v3240 = vpop.f32.mrf.mxu0
      %v3241 = vadd.f32 0.0, %v3240
      %3242 = vmatmul.bf16.gmra.mxu0 %v2981
      %v3243 = vpop.f32.mrf.mxu0
      %v3244 = vadd.f32 0.0, %v3243
      %v3245 = vpop.f32.mrf.mxu0
      %v3246 = vadd.f32 0.0, %v3245
      %3247 = vmatmul.bf16.gmra.mxu0 %v2984
      %v3248 = vpop.f32.mrf.mxu0
      %v3249 = vadd.f32 0.0, %v3248
      %v3250 = vpop.f32.mrf.mxu0
      %v3251 = vadd.f32 0.0, %v3250
      %3252 = vmatmul.bf16.gmra.mxu0 %v2987
      %v3253 = vpop.f32.mrf.mxu0
      %v3254 = vadd.f32 0.0, %v3253
      %v3255 = vpop.f32.mrf.mxu0
      %v3256 = vadd.f32 0.0, %v3255
      %3257 = vmatmul.bf16.gmra.mxu0 %v2990
      %v3258 = vpop.f32.mrf.mxu0
      %v3259 = vadd.f32 0.0, %v3258
      %v3260 = vpop.f32.mrf.mxu0
      %v3261 = vadd.f32 0.0, %v3260
      %3262 = vmatmul.bf16.gmra.mxu0 %v2993
      %v3263 = vpop.f32.mrf.mxu0
      %v3264 = vadd.f32 0.0, %v3263
      %v3265 = vpop.f32.mrf.mxu0
      %v3266 = vadd.f32 0.0, %v3265
      %3267 = vmatmul.bf16.gmra.mxu0 %v2996
      %v3268 = vpop.f32.mrf.mxu0
      %v3269 = vadd.f32 0.0, %v3268
      %v3270 = vpop.f32.mrf.mxu0
      %v3271 = vadd.f32 0.0, %v3270
      %3272 = vmatmul.bf16.gmra.mxu0 %v2999
      %v3273 = vpop.f32.mrf.mxu0
      %v3274 = vadd.f32 0.0, %v3273
      %v3275 = vpop.f32.mrf.mxu0
      %v3276 = vadd.f32 0.0, %v3275
      %3277 = vmatmul.bf16.gmra.mxu0 %v3002
      %v3278 = vpop.f32.mrf.mxu0
      %v3279 = vadd.f32 0.0, %v3278
      %v3280 = vpop.f32.mrf.mxu0
      %v3281 = vadd.f32 0.0, %v3280
      %3282 = vmatmul.bf16.gmra.mxu0 %v3005
      %v3283 = vpop.f32.mrf.mxu0
      %v3284 = vadd.f32 0.0, %v3283
      %v3285 = vpop.f32.mrf.mxu0
      %v3286 = vadd.f32 0.0, %v3285
      %3287 = vmatmul.bf16.gmra.mxu0 %v3008
      %v3288 = vpop.f32.mrf.mxu0
      %v3289 = vadd.f32 0.0, %v3288
      %v3290 = vpop.f32.mrf.mxu0
      %v3291 = vadd.f32 0.0, %v3290
      %3292 = vdwg.mxu0
      %v3293 = vadd.f32 %v3163, %v3214
      %v3294 = vadd.f32 %v3164, %v3216
      %v3295 = vadd.f32 %v3165, %v3219
      %v3296 = vadd.f32 %v3166, %v3221
      %v3297 = vadd.f32 %v3167, %v3224
      %v3298 = vadd.f32 %v3168, %v3226
      %v3299 = vadd.f32 %v3169, %v3229
      %v3300 = vadd.f32 %v3170, %v3231
      %v3301 = vadd.f32 %v3171, %v3234
      %v3302 = vadd.f32 %v3172, %v3236
      %v3303 = vadd.f32 %v3173, %v3239
      %v3304 = vadd.f32 %v3174, %v3241
      %v3305 = vadd.f32 %v3175, %v3244
      %v3306 = vadd.f32 %v3176, %v3246
      %v3307 = vadd.f32 %v3177, %v3249
      %v3308 = vadd.f32 %v3178, %v3251
      %v3309 = vadd.f32 %v3179, %v3254
      %v3310 = vadd.f32 %v3180, %v3256
      %v3311 = vadd.f32 %v3181, %v3259
      %v3312 = vadd.f32 %v3182, %v3261
      %v3313 = vadd.f32 %v3183, %v3264
      %v3314 = vadd.f32 %v3184, %v3266
      %v3315 = vadd.f32 %v3185, %v3269
      %v3316 = vadd.f32 %v3186, %v3271
      %v3317 = vadd.f32 %v3187, %v3274
      %v3318 = vadd.f32 %v3188, %v3276
      %v3319 = vadd.f32 %v3189, %v3279
      %v3320 = vadd.f32 %v3190, %v3281
      %v3321 = vadd.f32 %v3191, %v3284
      %v3322 = vadd.f32 %v3192, %v3286
      %v3323 = vadd.f32 %v3193, %v3289
      %v3324 = vadd.f32 %v3194, %v3291
      %s3325 = scalar_lea.vmem %s3, 16
      %v3326 = vld [vmem:[%s3325] sm:$0xf]
      %v3327 = vld [vmem:[%s3325 + $0x4] sm:$0xf]
      %v3330 = vunpack.c.l.b16 %v3326
      %v3331 = vunpack.c.l.b16 %v3327
      %v3332 = vpack.c.b16 %v3331, %v3330
      %3334 = vmatpush.bf16.msra.mxu0 0
      %3335 = vmatpush.bf16.msra.mxu0 0
      %3336 = vmatpush.bf16.msra.mxu0 0
      %3337 = vmatpush.bf16.msra.mxu0 0
      %3338 = vmatpush.bf16.msra.mxu0 0
      %3339 = vmatpush.bf16.msra.mxu0 0
      %3340 = vmatpush.bf16.msra.mxu0 0
      %3341 = vmatpush.bf16.msra.mxu0 %v3332
      %3342 = vmatmul.bf16.gmra.mxu0 %v2963
      %v3343 = vpop.f32.mrf.mxu0
      %v3344 = vadd.f32 0.0, %v3343
      %v3345 = vpop.f32.mrf.mxu0
      %v3346 = vadd.f32 0.0, %v3345
      %3347 = vmatmul.bf16.gmra.mxu0 %v2966
      %v3348 = vpop.f32.mrf.mxu0
      %v3349 = vadd.f32 0.0, %v3348
      %v3350 = vpop.f32.mrf.mxu0
      %v3351 = vadd.f32 0.0, %v3350
      %3352 = vmatmul.bf16.gmra.mxu0 %v2969
      %v3353 = vpop.f32.mrf.mxu0
      %v3354 = vadd.f32 0.0, %v3353
      %v3355 = vpop.f32.mrf.mxu0
      %v3356 = vadd.f32 0.0, %v3355
      %3357 = vmatmul.bf16.gmra.mxu0 %v2972
      %v3358 = vpop.f32.mrf.mxu0
      %v3359 = vadd.f32 0.0, %v3358
      %v3360 = vpop.f32.mrf.mxu0
      %v3361 = vadd.f32 0.0, %v3360
      %3362 = vmatmul.bf16.gmra.mxu0 %v2975
      %v3363 = vpop.f32.mrf.mxu0
      %v3364 = vadd.f32 0.0, %v3363
      %v3365 = vpop.f32.mrf.mxu0
      %v3366 = vadd.f32 0.0, %v3365
      %3367 = vmatmul.bf16.gmra.mxu0 %v2978
      %v3368 = vpop.f32.mrf.mxu0
      %v3369 = vadd.f32 0.0, %v3368
      %v3370 = vpop.f32.mrf.mxu0
      %v3371 = vadd.f32 0.0, %v3370
      %3372 = vmatmul.bf16.gmra.mxu0 %v2981
      %v3373 = vpop.f32.mrf.mxu0
      %v3374 = vadd.f32 0.0, %v3373
      %v3375 = vpop.f32.mrf.mxu0
      %v3376 = vadd.f32 0.0, %v3375
      %3377 = vmatmul.bf16.gmra.mxu0 %v2984
      %v3378 = vpop.f32.mrf.mxu0
      %v3379 = vadd.f32 0.0, %v3378
      %v3380 = vpop.f32.mrf.mxu0
      %v3381 = vadd.f32 0.0, %v3380
      %3382 = vmatmul.bf16.gmra.mxu0 %v2987
      %v3383 = vpop.f32.mrf.mxu0
      %v3384 = vadd.f32 0.0, %v3383
      %v3385 = vpop.f32.mrf.mxu0
      %v3386 = vadd.f32 0.0, %v3385
      %3387 = vmatmul.bf16.gmra.mxu0 %v2990
      %v3388 = vpop.f32.mrf.mxu0
      %v3389 = vadd.f32 0.0, %v3388
      %v3390 = vpop.f32.mrf.mxu0
      %v3391 = vadd.f32 0.0, %v3390
      %3392 = vmatmul.bf16.gmra.mxu0 %v2993
      %v3393 = vpop.f32.mrf.mxu0
      %v3394 = vadd.f32 0.0, %v3393
      %v3395 = vpop.f32.mrf.mxu0
      %v3396 = vadd.f32 0.0, %v3395
      %3397 = vmatmul.bf16.gmra.mxu0 %v2996
      %v3398 = vpop.f32.mrf.mxu0
      %v3399 = vadd.f32 0.0, %v3398
      %v3400 = vpop.f32.mrf.mxu0
      %v3401 = vadd.f32 0.0, %v3400
      %3402 = vmatmul.bf16.gmra.mxu0 %v2999
      %v3403 = vpop.f32.mrf.mxu0
      %v3404 = vadd.f32 0.0, %v3403
      %v3405 = vpop.f32.mrf.mxu0
      %v3406 = vadd.f32 0.0, %v3405
      %3407 = vmatmul.bf16.gmra.mxu0 %v3002
      %v3408 = vpop.f32.mrf.mxu0
      %v3409 = vadd.f32 0.0, %v3408
      %v3410 = vpop.f32.mrf.mxu0
      %v3411 = vadd.f32 0.0, %v3410
      %3412 = vmatmul.bf16.gmra.mxu0 %v3005
      %v3413 = vpop.f32.mrf.mxu0
      %v3414 = vadd.f32 0.0, %v3413
      %v3415 = vpop.f32.mrf.mxu0
      %v3416 = vadd.f32 0.0, %v3415
      %3417 = vmatmul.bf16.gmra.mxu0 %v3008
      %v3418 = vpop.f32.mrf.mxu0
      %v3419 = vadd.f32 0.0, %v3418
      %v3420 = vpop.f32.mrf.mxu0
      %v3421 = vadd.f32 0.0, %v3420
      %3422 = vdwg.mxu0
      %v3423 = vrot.slane %v3344, 1
      %v3424 = vrot.slane %v3346, 1
      %v3425 = vrot.slane %v3349, 1
      %v3426 = vrot.slane %v3351, 1
      %v3427 = vrot.slane %v3354, 1
      %v3428 = vrot.slane %v3356, 1
      %v3429 = vrot.slane %v3359, 1
      %v3430 = vrot.slane %v3361, 1
      %v3431 = vrot.slane %v3364, 1
      %v3432 = vrot.slane %v3366, 1
      %v3433 = vrot.slane %v3369, 1
      %v3434 = vrot.slane %v3371, 1
      %v3435 = vrot.slane %v3374, 1
      %v3436 = vrot.slane %v3376, 1
      %v3437 = vrot.slane %v3379, 1
      %v3438 = vrot.slane %v3381, 1
      %v3439 = vrot.slane %v3384, 1
      %v3440 = vrot.slane %v3386, 1
      %v3441 = vrot.slane %v3389, 1
      %v3442 = vrot.slane %v3391, 1
      %v3443 = vrot.slane %v3394, 1
      %v3444 = vrot.slane %v3396, 1
      %v3445 = vrot.slane %v3399, 1
      %v3446 = vrot.slane %v3401, 1
      %v3447 = vrot.slane %v3404, 1
      %v3448 = vrot.slane %v3406, 1
      %v3449 = vrot.slane %v3409, 1
      %v3450 = vrot.slane %v3411, 1
      %v3451 = vrot.slane %v3414, 1
      %v3452 = vrot.slane %v3416, 1
      %v3453 = vrot.slane %v3419, 1
      %v3454 = vrot.slane %v3421, 1
      %v3455 = vsel %vm766, %v3453, %v3454
      %v3456 = vsel %vm766, %v3452, %v3453
      %v3457 = vsel %vm766, %v3451, %v3452
      %v3458 = vsel %vm766, %v3450, %v3451
      %v3459 = vsel %vm766, %v3449, %v3450
      %v3460 = vsel %vm766, %v3448, %v3449
      %v3461 = vsel %vm766, %v3447, %v3448
      %v3462 = vsel %vm766, %v3446, %v3447
      %v3463 = vsel %vm766, %v3445, %v3446
      %v3464 = vsel %vm766, %v3444, %v3445
      %v3465 = vsel %vm766, %v3443, %v3444
      %v3466 = vsel %vm766, %v3442, %v3443
      %v3467 = vsel %vm766, %v3441, %v3442
      %v3468 = vsel %vm766, %v3440, %v3441
      %v3469 = vsel %vm766, %v3439, %v3440
      %v3470 = vsel %vm766, %v3438, %v3439
      %v3471 = vsel %vm766, %v3437, %v3438
      %v3472 = vsel %vm766, %v3436, %v3437
      %v3473 = vsel %vm766, %v3435, %v3436
      %v3474 = vsel %vm766, %v3434, %v3435
      %v3475 = vsel %vm766, %v3433, %v3434
      %v3476 = vsel %vm766, %v3432, %v3433
      %v3477 = vsel %vm766, %v3431, %v3432
      %v3478 = vsel %vm766, %v3430, %v3431
      %v3479 = vsel %vm766, %v3429, %v3430
      %v3480 = vsel %vm766, %v3428, %v3429
      %v3481 = vsel %vm766, %v3427, %v3428
      %v3482 = vsel %vm766, %v3426, %v3427
      %v3483 = vsel %vm766, %v3425, %v3426
      %v3484 = vsel %vm766, %v3424, %v3425
      %v3485 = vsel %vm766, %v3423, %v3424
      %v3486 = vsel %vm766, %v3454, %v3423
      %v3487 = vadd.f32 %v3293, %v3485
      %v3488 = vadd.f32 %v3294, %v3484
      %v3489 = vadd.f32 %v3295, %v3483
      %v3490 = vadd.f32 %v3296, %v3482
      %v3491 = vadd.f32 %v3297, %v3481
      %v3492 = vadd.f32 %v3298, %v3480
      %v3493 = vadd.f32 %v3299, %v3479
      %v3494 = vadd.f32 %v3300, %v3478
      %v3495 = vadd.f32 %v3301, %v3477
      %v3496 = vadd.f32 %v3302, %v3476
      %v3497 = vadd.f32 %v3303, %v3475
      %v3498 = vadd.f32 %v3304, %v3474
      %v3499 = vadd.f32 %v3305, %v3473
      %v3500 = vadd.f32 %v3306, %v3472
      %v3501 = vadd.f32 %v3307, %v3471
      %v3502 = vadd.f32 %v3308, %v3470
      %v3503 = vadd.f32 %v3309, %v3469
      %v3504 = vadd.f32 %v3310, %v3468
      %v3505 = vadd.f32 %v3311, %v3467
      %v3506 = vadd.f32 %v3312, %v3466
      %v3507 = vadd.f32 %v3313, %v3465
      %v3508 = vadd.f32 %v3314, %v3464
      %v3509 = vadd.f32 %v3315, %v3463
      %v3510 = vadd.f32 %v3316, %v3462
      %v3511 = vadd.f32 %v3317, %v3461
      %v3512 = vadd.f32 %v3318, %v3460
      %v3513 = vadd.f32 %v3319, %v3459
      %v3514 = vadd.f32 %v3320, %v3458
      %v3515 = vadd.f32 %v3321, %v3457
      %v3516 = vadd.f32 %v3322, %v3456
      %v3517 = vadd.f32 %v3323, %v3455
      %v3518 = vadd.f32 %v3324, %v3486
      %s3519 = scalar_lea.vmem %s3, 24
      %v3520 = vld [vmem:[%s3519] sm:$0xf]
      %v3521 = vld [vmem:[%s3519 + $0x4] sm:$0xf]
      %v3526 = vunpack.c.l.b16 %v2862
      %v3527 = vunpack.c.l.b16 %v2863
      %v3528 = vunpack.c.l.b16 %v2864
      %v3529 = vunpack.c.l.b16 %v2865
      %v3530 = vpack.c.b16 %v3527, %v3526
      %v3531 = vpack.c.b16 %v3529, %v3528
      %v3534 = vunpack.c.l.b16 %v3520
      %v3535 = vunpack.c.l.b16 %v3521
      %v3536 = vpack.c.b16 %v3535, %v3534
      %v3539 = vsel %vm1235, %v3530, 0
      %v3542 = vsel %vm1235, %v3531, 0
      %3544 = vmatpush.bf16.msra.mxu0 0
      %3545 = vmatpush.bf16.msra.mxu0 0
      %3546 = vmatpush.bf16.msra.mxu0 0
      %3547 = vmatpush.bf16.msra.mxu0 0
      %3548 = vmatpush.bf16.msra.mxu0 0
      %3549 = vmatpush.bf16.msra.mxu0 0
      %3550 = vmatpush.bf16.msra.mxu0 0
      %3551 = vmatpush.bf16.msra.mxu0 %v3536
      %3552 = vmatmul.bf16.gmra.mxu0 %v2969
      %v3553 = vpop.f32.mrf.mxu0
      %v3554 = vadd.f32 0.0, %v3553
      %v3555 = vpop.f32.mrf.mxu0
      %v3556 = vadd.f32 0.0, %v3555
      %3557 = vmatmul.bf16.gmra.mxu0 %v2972
      %v3558 = vpop.f32.mrf.mxu0
      %v3559 = vadd.f32 0.0, %v3558
      %v3560 = vpop.f32.mrf.mxu0
      %v3561 = vadd.f32 0.0, %v3560
      %3562 = vmatmul.bf16.gmra.mxu0 %v2975
      %v3563 = vpop.f32.mrf.mxu0
      %v3564 = vadd.f32 0.0, %v3563
      %v3565 = vpop.f32.mrf.mxu0
      %v3566 = vadd.f32 0.0, %v3565
      %3567 = vmatmul.bf16.gmra.mxu0 %v2978
      %v3568 = vpop.f32.mrf.mxu0
      %v3569 = vadd.f32 0.0, %v3568
      %v3570 = vpop.f32.mrf.mxu0
      %v3571 = vadd.f32 0.0, %v3570
      %3572 = vmatmul.bf16.gmra.mxu0 %v2981
      %v3573 = vpop.f32.mrf.mxu0
      %v3574 = vadd.f32 0.0, %v3573
      %v3575 = vpop.f32.mrf.mxu0
      %v3576 = vadd.f32 0.0, %v3575
      %3577 = vmatmul.bf16.gmra.mxu0 %v2984
      %v3578 = vpop.f32.mrf.mxu0
      %v3579 = vadd.f32 0.0, %v3578
      %v3580 = vpop.f32.mrf.mxu0
      %v3581 = vadd.f32 0.0, %v3580
      %3582 = vmatmul.bf16.gmra.mxu0 %v2987
      %v3583 = vpop.f32.mrf.mxu0
      %v3584 = vadd.f32 0.0, %v3583
      %v3585 = vpop.f32.mrf.mxu0
      %v3586 = vadd.f32 0.0, %v3585
      %3587 = vmatmul.bf16.gmra.mxu0 %v2990
      %v3588 = vpop.f32.mrf.mxu0
      %v3589 = vadd.f32 0.0, %v3588
      %v3590 = vpop.f32.mrf.mxu0
      %v3591 = vadd.f32 0.0, %v3590
      %3592 = vmatmul.bf16.gmra.mxu0 %v2993
      %v3593 = vpop.f32.mrf.mxu0
      %v3594 = vadd.f32 0.0, %v3593
      %v3595 = vpop.f32.mrf.mxu0
      %v3596 = vadd.f32 0.0, %v3595
      %3597 = vmatmul.bf16.gmra.mxu0 %v2996
      %v3598 = vpop.f32.mrf.mxu0
      %v3599 = vadd.f32 0.0, %v3598
      %v3600 = vpop.f32.mrf.mxu0
      %v3601 = vadd.f32 0.0, %v3600
      %3602 = vmatmul.bf16.gmra.mxu0 %v2999
      %v3603 = vpop.f32.mrf.mxu0
      %v3604 = vadd.f32 0.0, %v3603
      %v3605 = vpop.f32.mrf.mxu0
      %v3606 = vadd.f32 0.0, %v3605
      %3607 = vmatmul.bf16.gmra.mxu0 %v3002
      %v3608 = vpop.f32.mrf.mxu0
      %v3609 = vadd.f32 0.0, %v3608
      %v3610 = vpop.f32.mrf.mxu0
      %v3611 = vadd.f32 0.0, %v3610
      %3612 = vmatmul.bf16.gmra.mxu0 %v3005
      %v3613 = vpop.f32.mrf.mxu0
      %v3614 = vadd.f32 0.0, %v3613
      %v3615 = vpop.f32.mrf.mxu0
      %v3616 = vadd.f32 0.0, %v3615
      %3617 = vmatmul.bf16.gmra.mxu0 %v3008
      %v3618 = vpop.f32.mrf.mxu0
      %v3619 = vadd.f32 0.0, %v3618
      %v3620 = vpop.f32.mrf.mxu0
      %v3621 = vadd.f32 0.0, %v3620
      %3622 = vmatmul.bf16.gmra.mxu0 %v3539
      %v3623 = vpop.f32.mrf.mxu0
      %v3624 = vadd.f32 0.0, %v3623
      %v3625 = vpop.f32.mrf.mxu0
      %v3626 = vadd.f32 0.0, %v3625
      %3627 = vmatmul.bf16.gmra.mxu0 %v3542
      %v3628 = vpop.f32.mrf.mxu0
      %v3629 = vadd.f32 0.0, %v3628
      %v3630 = vpop.f32.mrf.mxu0
      %v3631 = vadd.f32 0.0, %v3630
      %3632 = vdwg.mxu0
      %v3633 = vrot.slane %v3554, 7
      %v3634 = vrot.slane %v3556, 7
      %v3635 = vrot.slane %v3559, 7
      %v3636 = vrot.slane %v3561, 7
      %v3637 = vrot.slane %v3564, 7
      %v3638 = vrot.slane %v3566, 7
      %v3639 = vrot.slane %v3569, 7
      %v3640 = vrot.slane %v3571, 7
      %v3641 = vrot.slane %v3574, 7
      %v3642 = vrot.slane %v3576, 7
      %v3643 = vrot.slane %v3579, 7
      %v3644 = vrot.slane %v3581, 7
      %v3645 = vrot.slane %v3584, 7
      %v3646 = vrot.slane %v3586, 7
      %v3647 = vrot.slane %v3589, 7
      %v3648 = vrot.slane %v3591, 7
      %v3649 = vrot.slane %v3594, 7
      %v3650 = vrot.slane %v3596, 7
      %v3651 = vrot.slane %v3599, 7
      %v3652 = vrot.slane %v3601, 7
      %v3653 = vrot.slane %v3604, 7
      %v3654 = vrot.slane %v3606, 7
      %v3655 = vrot.slane %v3609, 7
      %v3656 = vrot.slane %v3611, 7
      %v3657 = vrot.slane %v3614, 7
      %v3658 = vrot.slane %v3616, 7
      %v3659 = vrot.slane %v3619, 7
      %v3660 = vrot.slane %v3621, 7
      %v3661 = vrot.slane %v3624, 7
      %v3662 = vrot.slane %v3626, 7
      %v3663 = vrot.slane %v3629, 7
      %v3664 = vrot.slane %v3631, 7
      %v3665 = vsel %vm557, %v3663, %v3664
      %v3666 = vsel %vm557, %v3662, %v3663
      %v3667 = vsel %vm557, %v3661, %v3662
      %v3668 = vsel %vm557, %v3660, %v3661
      %v3669 = vsel %vm557, %v3659, %v3660
      %v3670 = vsel %vm557, %v3658, %v3659
      %v3671 = vsel %vm557, %v3657, %v3658
      %v3672 = vsel %vm557, %v3656, %v3657
      %v3673 = vsel %vm557, %v3655, %v3656
      %v3674 = vsel %vm557, %v3654, %v3655
      %v3675 = vsel %vm557, %v3653, %v3654
      %v3676 = vsel %vm557, %v3652, %v3653
      %v3677 = vsel %vm557, %v3651, %v3652
      %v3678 = vsel %vm557, %v3650, %v3651
      %v3679 = vsel %vm557, %v3649, %v3650
      %v3680 = vsel %vm557, %v3648, %v3649
      %v3681 = vsel %vm557, %v3647, %v3648
      %v3682 = vsel %vm557, %v3646, %v3647
      %v3683 = vsel %vm557, %v3645, %v3646
      %v3684 = vsel %vm557, %v3644, %v3645
      %v3685 = vsel %vm557, %v3643, %v3644
      %v3686 = vsel %vm557, %v3642, %v3643
      %v3687 = vsel %vm557, %v3641, %v3642
      %v3688 = vsel %vm557, %v3640, %v3641
      %v3689 = vsel %vm557, %v3639, %v3640
      %v3690 = vsel %vm557, %v3638, %v3639
      %v3691 = vsel %vm557, %v3637, %v3638
      %v3692 = vsel %vm557, %v3636, %v3637
      %v3693 = vsel %vm557, %v3635, %v3636
      %v3694 = vsel %vm557, %v3634, %v3635
      %v3695 = vsel %vm557, %v3633, %v3634
      %v3696 = vsel %vm557, %v3664, %v3633
      %v3697 = vadd.f32 %v3487, %v3696
      %v3698 = vadd.f32 %v3488, %v3695
      %v3699 = vadd.f32 %v3489, %v3694
      %v3700 = vadd.f32 %v3490, %v3693
      %v3701 = vadd.f32 %v3491, %v3692
      %v3702 = vadd.f32 %v3492, %v3691
      %v3703 = vadd.f32 %v3493, %v3690
      %v3704 = vadd.f32 %v3494, %v3689
      %v3705 = vadd.f32 %v3495, %v3688
      %v3706 = vadd.f32 %v3496, %v3687
      %v3707 = vadd.f32 %v3497, %v3686
      %v3708 = vadd.f32 %v3498, %v3685
      %v3709 = vadd.f32 %v3499, %v3684
      %v3710 = vadd.f32 %v3500, %v3683
      %v3711 = vadd.f32 %v3501, %v3682
      %v3712 = vadd.f32 %v3502, %v3681
      %v3713 = vadd.f32 %v3503, %v3680
      %v3714 = vadd.f32 %v3504, %v3679
      %v3715 = vadd.f32 %v3505, %v3678
      %v3716 = vadd.f32 %v3506, %v3677
      %v3717 = vadd.f32 %v3507, %v3676
      %v3718 = vadd.f32 %v3508, %v3675
      %v3719 = vadd.f32 %v3509, %v3674
      %v3720 = vadd.f32 %v3510, %v3673
      %v3721 = vadd.f32 %v3511, %v3672
      %v3722 = vadd.f32 %v3512, %v3671
      %v3723 = vadd.f32 %v3513, %v3670
      %v3724 = vadd.f32 %v3514, %v3669
      %v3725 = vadd.f32 %v3515, %v3668
      %v3726 = vadd.f32 %v3516, %v3667
      %v3727 = vadd.f32 %v3517, %v3666
      %v3728 = vadd.f32 %v3518, %v3665
      %s3729 = scalar_lea.vmem %s3, 32
      %v3730 = vld [vmem:[%s3729] sm:$0xf]
      %v3731 = vld [vmem:[%s3729 + $0x4] sm:$0xf]
      %v3734 = vunpack.c.l.b16 %v3730
      %v3735 = vunpack.c.l.b16 %v3731
      %v3736 = vpack.c.b16 %v3735, %v3734
      %3738 = vmatpush.bf16.msra.mxu0 0
      %3739 = vmatpush.bf16.msra.mxu0 0
      %3740 = vmatpush.bf16.msra.mxu0 0
      %3741 = vmatpush.bf16.msra.mxu0 0
      %3742 = vmatpush.bf16.msra.mxu0 0
      %3743 = vmatpush.bf16.msra.mxu0 0
      %3744 = vmatpush.bf16.msra.mxu0 0
      %3745 = vmatpush.bf16.msra.mxu0 %v3736
      %3746 = vmatmul.bf16.gmra.mxu0 %v2969
      %v3747 = vpop.f32.mrf.mxu0
      %v3748 = vadd.f32 0.0, %v3747
      %v3749 = vpop.f32.mrf.mxu0
      %v3750 = vadd.f32 0.0, %v3749
      %3751 = vmatmul.bf16.gmra.mxu0 %v2972
      %v3752 = vpop.f32.mrf.mxu0
      %v3753 = vadd.f32 0.0, %v3752
      %v3754 = vpop.f32.mrf.mxu0
      %v3755 = vadd.f32 0.0, %v3754
      %3756 = vmatmul.bf16.gmra.mxu0 %v2975
      %v3757 = vpop.f32.mrf.mxu0
      %v3758 = vadd.f32 0.0, %v3757
      %v3759 = vpop.f32.mrf.mxu0
      %v3760 = vadd.f32 0.0, %v3759
      %3761 = vmatmul.bf16.gmra.mxu0 %v2978
      %v3762 = vpop.f32.mrf.mxu0
      %v3763 = vadd.f32 0.0, %v3762
      %v3764 = vpop.f32.mrf.mxu0
      %v3765 = vadd.f32 0.0, %v3764
      %3766 = vmatmul.bf16.gmra.mxu0 %v2981
      %v3767 = vpop.f32.mrf.mxu0
      %v3768 = vadd.f32 0.0, %v3767
      %v3769 = vpop.f32.mrf.mxu0
      %v3770 = vadd.f32 0.0, %v3769
      %3771 = vmatmul.bf16.gmra.mxu0 %v2984
      %v3772 = vpop.f32.mrf.mxu0
      %v3773 = vadd.f32 0.0, %v3772
      %v3774 = vpop.f32.mrf.mxu0
      %v3775 = vadd.f32 0.0, %v3774
      %3776 = vmatmul.bf16.gmra.mxu0 %v2987
      %v3777 = vpop.f32.mrf.mxu0
      %v3778 = vadd.f32 0.0, %v3777
      %v3779 = vpop.f32.mrf.mxu0
      %v3780 = vadd.f32 0.0, %v3779
      %3781 = vmatmul.bf16.gmra.mxu0 %v2990
      %v3782 = vpop.f32.mrf.mxu0
      %v3783 = vadd.f32 0.0, %v3782
      %v3784 = vpop.f32.mrf.mxu0
      %v3785 = vadd.f32 0.0, %v3784
      %3786 = vmatmul.bf16.gmra.mxu0 %v2993
      %v3787 = vpop.f32.mrf.mxu0
      %v3788 = vadd.f32 0.0, %v3787
      %v3789 = vpop.f32.mrf.mxu0
      %v3790 = vadd.f32 0.0, %v3789
      %3791 = vmatmul.bf16.gmra.mxu0 %v2996
      %v3792 = vpop.f32.mrf.mxu0
      %v3793 = vadd.f32 0.0, %v3792
      %v3794 = vpop.f32.mrf.mxu0
      %v3795 = vadd.f32 0.0, %v3794
      %3796 = vmatmul.bf16.gmra.mxu0 %v2999
      %v3797 = vpop.f32.mrf.mxu0
      %v3798 = vadd.f32 0.0, %v3797
      %v3799 = vpop.f32.mrf.mxu0
      %v3800 = vadd.f32 0.0, %v3799
      %3801 = vmatmul.bf16.gmra.mxu0 %v3002
      %v3802 = vpop.f32.mrf.mxu0
      %v3803 = vadd.f32 0.0, %v3802
      %v3804 = vpop.f32.mrf.mxu0
      %v3805 = vadd.f32 0.0, %v3804
      %3806 = vmatmul.bf16.gmra.mxu0 %v3005
      %v3807 = vpop.f32.mrf.mxu0
      %v3808 = vadd.f32 0.0, %v3807
      %v3809 = vpop.f32.mrf.mxu0
      %v3810 = vadd.f32 0.0, %v3809
      %3811 = vmatmul.bf16.gmra.mxu0 %v3008
      %v3812 = vpop.f32.mrf.mxu0
      %v3813 = vadd.f32 0.0, %v3812
      %v3814 = vpop.f32.mrf.mxu0
      %v3815 = vadd.f32 0.0, %v3814
      %3816 = vmatmul.bf16.gmra.mxu0 %v3539
      %v3817 = vpop.f32.mrf.mxu0
      %v3818 = vadd.f32 0.0, %v3817
      %v3819 = vpop.f32.mrf.mxu0
      %v3820 = vadd.f32 0.0, %v3819
      %3821 = vmatmul.bf16.gmra.mxu0 %v3542
      %v3822 = vpop.f32.mrf.mxu0
      %v3823 = vadd.f32 0.0, %v3822
      %v3824 = vpop.f32.mrf.mxu0
      %v3825 = vadd.f32 0.0, %v3824
      %3826 = vdwg.mxu0
      %v3827 = vadd.f32 %v3697, %v3748
      %v3828 = vadd.f32 %v3698, %v3750
      %v3829 = vadd.f32 %v3699, %v3753
      %v3830 = vadd.f32 %v3700, %v3755
      %v3831 = vadd.f32 %v3701, %v3758
      %v3832 = vadd.f32 %v3702, %v3760
      %v3833 = vadd.f32 %v3703, %v3763
      %v3834 = vadd.f32 %v3704, %v3765
      %v3835 = vadd.f32 %v3705, %v3768
      %v3836 = vadd.f32 %v3706, %v3770
      %v3837 = vadd.f32 %v3707, %v3773
      %v3838 = vadd.f32 %v3708, %v3775
      %v3839 = vadd.f32 %v3709, %v3778
      %v3840 = vadd.f32 %v3710, %v3780
      %v3841 = vadd.f32 %v3711, %v3783
      %v3842 = vadd.f32 %v3712, %v3785
      %v3843 = vadd.f32 %v3713, %v3788
      %v3844 = vadd.f32 %v3714, %v3790
      %v3845 = vadd.f32 %v3715, %v3793
      %v3846 = vadd.f32 %v3716, %v3795
      %v3847 = vadd.f32 %v3717, %v3798
      %v3848 = vadd.f32 %v3718, %v3800
      %v3849 = vadd.f32 %v3719, %v3803
      %v3850 = vadd.f32 %v3720, %v3805
      %v3851 = vadd.f32 %v3721, %v3808
      %v3852 = vadd.f32 %v3722, %v3810
      %v3853 = vadd.f32 %v3723, %v3813
      %v3854 = vadd.f32 %v3724, %v3815
      %v3855 = vadd.f32 %v3725, %v3818
      %v3856 = vadd.f32 %v3726, %v3820
      %v3857 = vadd.f32 %v3727, %v3823
      %v3858 = vadd.f32 %v3728, %v3825
      %s3859 = scalar_lea.vmem %s3, 40
      %v3860 = vld [vmem:[%s3859] sm:$0xf]
      %v3861 = vld [vmem:[%s3859 + $0x4] sm:$0xf]
      %v3864 = vunpack.c.l.b16 %v3860
      %v3865 = vunpack.c.l.b16 %v3861
      %v3866 = vpack.c.b16 %v3865, %v3864
      %3868 = vmatpush.bf16.msra.mxu0 0
      %3869 = vmatpush.bf16.msra.mxu0 0
      %3870 = vmatpush.bf16.msra.mxu0 0
      %3871 = vmatpush.bf16.msra.mxu0 0
      %3872 = vmatpush.bf16.msra.mxu0 0
      %3873 = vmatpush.bf16.msra.mxu0 0
      %3874 = vmatpush.bf16.msra.mxu0 0
      %3875 = vmatpush.bf16.msra.mxu0 %v3866
      %3876 = vmatmul.bf16.gmra.mxu0 %v2969
      %v3877 = vpop.f32.mrf.mxu0
      %v3878 = vadd.f32 0.0, %v3877
      %v3879 = vpop.f32.mrf.mxu0
      %v3880 = vadd.f32 0.0, %v3879
      %3881 = vmatmul.bf16.gmra.mxu0 %v2972
      %v3882 = vpop.f32.mrf.mxu0
      %v3883 = vadd.f32 0.0, %v3882
      %v3884 = vpop.f32.mrf.mxu0
      %v3885 = vadd.f32 0.0, %v3884
      %3886 = vmatmul.bf16.gmra.mxu0 %v2975
      %v3887 = vpop.f32.mrf.mxu0
      %v3888 = vadd.f32 0.0, %v3887
      %v3889 = vpop.f32.mrf.mxu0
      %v3890 = vadd.f32 0.0, %v3889
      %3891 = vmatmul.bf16.gmra.mxu0 %v2978
      %v3892 = vpop.f32.mrf.mxu0
      %v3893 = vadd.f32 0.0, %v3892
      %v3894 = vpop.f32.mrf.mxu0
      %v3895 = vadd.f32 0.0, %v3894
      %3896 = vmatmul.bf16.gmra.mxu0 %v2981
      %v3897 = vpop.f32.mrf.mxu0
      %v3898 = vadd.f32 0.0, %v3897
      %v3899 = vpop.f32.mrf.mxu0
      %v3900 = vadd.f32 0.0, %v3899
      %3901 = vmatmul.bf16.gmra.mxu0 %v2984
      %v3902 = vpop.f32.mrf.mxu0
      %v3903 = vadd.f32 0.0, %v3902
      %v3904 = vpop.f32.mrf.mxu0
      %v3905 = vadd.f32 0.0, %v3904
      %3906 = vmatmul.bf16.gmra.mxu0 %v2987
      %v3907 = vpop.f32.mrf.mxu0
      %v3908 = vadd.f32 0.0, %v3907
      %v3909 = vpop.f32.mrf.mxu0
      %v3910 = vadd.f32 0.0, %v3909
      %3911 = vmatmul.bf16.gmra.mxu0 %v2990
      %v3912 = vpop.f32.mrf.mxu0
      %v3913 = vadd.f32 0.0, %v3912
      %v3914 = vpop.f32.mrf.mxu0
      %v3915 = vadd.f32 0.0, %v3914
      %3916 = vmatmul.bf16.gmra.mxu0 %v2993
      %v3917 = vpop.f32.mrf.mxu0
      %v3918 = vadd.f32 0.0, %v3917
      %v3919 = vpop.f32.mrf.mxu0
      %v3920 = vadd.f32 0.0, %v3919
      %3921 = vmatmul.bf16.gmra.mxu0 %v2996
      %v3922 = vpop.f32.mrf.mxu0
      %v3923 = vadd.f32 0.0, %v3922
      %v3924 = vpop.f32.mrf.mxu0
      %v3925 = vadd.f32 0.0, %v3924
      %3926 = vmatmul.bf16.gmra.mxu0 %v2999
      %v3927 = vpop.f32.mrf.mxu0
      %v3928 = vadd.f32 0.0, %v3927
      %v3929 = vpop.f32.mrf.mxu0
      %v3930 = vadd.f32 0.0, %v3929
      %3931 = vmatmul.bf16.gmra.mxu0 %v3002
      %v3932 = vpop.f32.mrf.mxu0
      %v3933 = vadd.f32 0.0, %v3932
      %v3934 = vpop.f32.mrf.mxu0
      %v3935 = vadd.f32 0.0, %v3934
      %3936 = vmatmul.bf16.gmra.mxu0 %v3005
      %v3937 = vpop.f32.mrf.mxu0
      %v3938 = vadd.f32 0.0, %v3937
      %v3939 = vpop.f32.mrf.mxu0
      %v3940 = vadd.f32 0.0, %v3939
      %3941 = vmatmul.bf16.gmra.mxu0 %v3008
      %v3942 = vpop.f32.mrf.mxu0
      %v3943 = vadd.f32 0.0, %v3942
      %v3944 = vpop.f32.mrf.mxu0
      %v3945 = vadd.f32 0.0, %v3944
      %3946 = vmatmul.bf16.gmra.mxu0 %v3539
      %v3947 = vpop.f32.mrf.mxu0
      %v3948 = vadd.f32 0.0, %v3947
      %v3949 = vpop.f32.mrf.mxu0
      %v3950 = vadd.f32 0.0, %v3949
      %3951 = vmatmul.bf16.gmra.mxu0 %v3542
      %v3952 = vpop.f32.mrf.mxu0
      %v3953 = vadd.f32 0.0, %v3952
      %v3954 = vpop.f32.mrf.mxu0
      %v3955 = vadd.f32 0.0, %v3954
      %3956 = vdwg.mxu0
      %v3957 = vrot.slane %v3878, 1
      %v3958 = vrot.slane %v3880, 1
      %v3959 = vrot.slane %v3883, 1
      %v3960 = vrot.slane %v3885, 1
      %v3961 = vrot.slane %v3888, 1
      %v3962 = vrot.slane %v3890, 1
      %v3963 = vrot.slane %v3893, 1
      %v3964 = vrot.slane %v3895, 1
      %v3965 = vrot.slane %v3898, 1
      %v3966 = vrot.slane %v3900, 1
      %v3967 = vrot.slane %v3903, 1
      %v3968 = vrot.slane %v3905, 1
      %v3969 = vrot.slane %v3908, 1
      %v3970 = vrot.slane %v3910, 1
      %v3971 = vrot.slane %v3913, 1
      %v3972 = vrot.slane %v3915, 1
      %v3973 = vrot.slane %v3918, 1
      %v3974 = vrot.slane %v3920, 1
      %v3975 = vrot.slane %v3923, 1
      %v3976 = vrot.slane %v3925, 1
      %v3977 = vrot.slane %v3928, 1
      %v3978 = vrot.slane %v3930, 1
      %v3979 = vrot.slane %v3933, 1
      %v3980 = vrot.slane %v3935, 1
      %v3981 = vrot.slane %v3938, 1
      %v3982 = vrot.slane %v3940, 1
      %v3983 = vrot.slane %v3943, 1
      %v3984 = vrot.slane %v3945, 1
      %v3985 = vrot.slane %v3948, 1
      %v3986 = vrot.slane %v3950, 1
      %v3987 = vrot.slane %v3953, 1
      %v3988 = vrot.slane %v3955, 1
      %v3989 = vsel %vm766, %v3987, %v3988
      %v3990 = vsel %vm766, %v3986, %v3987
      %v3991 = vsel %vm766, %v3985, %v3986
      %v3992 = vsel %vm766, %v3984, %v3985
      %v3993 = vsel %vm766, %v3983, %v3984
      %v3994 = vsel %vm766, %v3982, %v3983
      %v3995 = vsel %vm766, %v3981, %v3982
      %v3996 = vsel %vm766, %v3980, %v3981
      %v3997 = vsel %vm766, %v3979, %v3980
      %v3998 = vsel %vm766, %v3978, %v3979
      %v3999 = vsel %vm766, %v3977, %v3978
      %v4000 = vsel %vm766, %v3976, %v3977
      %v4001 = vsel %vm766, %v3975, %v3976
      %v4002 = vsel %vm766, %v3974, %v3975
      %v4003 = vsel %vm766, %v3973, %v3974
      %v4004 = vsel %vm766, %v3972, %v3973
      %v4005 = vsel %vm766, %v3971, %v3972
      %v4006 = vsel %vm766, %v3970, %v3971
      %v4007 = vsel %vm766, %v3969, %v3970
      %v4008 = vsel %vm766, %v3968, %v3969
      %v4009 = vsel %vm766, %v3967, %v3968
      %v4010 = vsel %vm766, %v3966, %v3967
      %v4011 = vsel %vm766, %v3965, %v3966
      %v4012 = vsel %vm766, %v3964, %v3965
      %v4013 = vsel %vm766, %v3963, %v3964
      %v4014 = vsel %vm766, %v3962, %v3963
      %v4015 = vsel %vm766, %v3961, %v3962
      %v4016 = vsel %vm766, %v3960, %v3961
      %v4017 = vsel %vm766, %v3959, %v3960
      %v4018 = vsel %vm766, %v3958, %v3959
      %v4019 = vsel %vm766, %v3957, %v3958
      %v4020 = vsel %vm766, %v3988, %v3957
      %v4021 = vadd.f32 %v3827, %v4019
      %v4022 = vadd.f32 %v3828, %v4018
      %v4023 = vadd.f32 %v3829, %v4017
      %v4024 = vadd.f32 %v3830, %v4016
      %v4025 = vadd.f32 %v3831, %v4015
      %v4026 = vadd.f32 %v3832, %v4014
      %v4027 = vadd.f32 %v3833, %v4013
      %v4028 = vadd.f32 %v3834, %v4012
      %v4029 = vadd.f32 %v3835, %v4011
      %v4030 = vadd.f32 %v3836, %v4010
      %v4031 = vadd.f32 %v3837, %v4009
      %v4032 = vadd.f32 %v3838, %v4008
      %v4033 = vadd.f32 %v3839, %v4007
      %v4034 = vadd.f32 %v3840, %v4006
      %v4035 = vadd.f32 %v3841, %v4005
      %v4036 = vadd.f32 %v3842, %v4004
      %v4037 = vadd.f32 %v3843, %v4003
      %v4038 = vadd.f32 %v3844, %v4002
      %v4039 = vadd.f32 %v3845, %v4001
      %v4040 = vadd.f32 %v3846, %v4000
      %v4041 = vadd.f32 %v3847, %v3999
      %v4042 = vadd.f32 %v3848, %v3998
      %v4043 = vadd.f32 %v3849, %v3997
      %v4044 = vadd.f32 %v3850, %v3996
      %v4045 = vadd.f32 %v3851, %v3995
      %v4046 = vadd.f32 %v3852, %v3994
      %v4047 = vadd.f32 %v3853, %v3993
      %v4048 = vadd.f32 %v3854, %v3992
      %v4049 = vadd.f32 %v3855, %v3991
      %v4050 = vadd.f32 %v3856, %v3990
      %v4051 = vadd.f32 %v3857, %v3989
      %v4052 = vadd.f32 %v3858, %v4020
      %s4053 = scalar_lea.vmem %s3, 48
      %v4054 = vld [vmem:[%s4053] sm:$0xf]
      %v4055 = vld [vmem:[%s4053 + $0x4] sm:$0xf]
      %v4060 = vunpack.c.l.b16 %v2866
      %v4061 = vunpack.c.l.b16 %v2867
      %v4062 = vunpack.c.l.b16 %v2868
      %v4063 = vunpack.c.l.b16 %v2869
      %v4064 = vpack.c.b16 %v4061, %v4060
      %v4065 = vpack.c.b16 %v4063, %v4062
      %v4068 = vunpack.c.l.b16 %v4054
      %v4069 = vunpack.c.l.b16 %v4055
      %v4070 = vpack.c.b16 %v4069, %v4068
      %v4073 = vsel %vm1235, %v4064, 0
      %v4076 = vsel %vm1235, %v4065, 0
      %4078 = vmatpush.bf16.msra.mxu0 0
      %4079 = vmatpush.bf16.msra.mxu0 0
      %4080 = vmatpush.bf16.msra.mxu0 0
      %4081 = vmatpush.bf16.msra.mxu0 0
      %4082 = vmatpush.bf16.msra.mxu0 0
      %4083 = vmatpush.bf16.msra.mxu0 0
      %4084 = vmatpush.bf16.msra.mxu0 0
      %4085 = vmatpush.bf16.msra.mxu0 %v4070
      %4086 = vmatmul.bf16.gmra.mxu0 %v2975
      %v4087 = vpop.f32.mrf.mxu0
      %v4088 = vadd.f32 0.0, %v4087
      %v4089 = vpop.f32.mrf.mxu0
      %v4090 = vadd.f32 0.0, %v4089
      %4091 = vmatmul.bf16.gmra.mxu0 %v2978
      %v4092 = vpop.f32.mrf.mxu0
      %v4093 = vadd.f32 0.0, %v4092
      %v4094 = vpop.f32.mrf.mxu0
      %v4095 = vadd.f32 0.0, %v4094
      %4096 = vmatmul.bf16.gmra.mxu0 %v2981
      %v4097 = vpop.f32.mrf.mxu0
      %v4098 = vadd.f32 0.0, %v4097
      %v4099 = vpop.f32.mrf.mxu0
      %v4100 = vadd.f32 0.0, %v4099
      %4101 = vmatmul.bf16.gmra.mxu0 %v2984
      %v4102 = vpop.f32.mrf.mxu0
      %v4103 = vadd.f32 0.0, %v4102
      %v4104 = vpop.f32.mrf.mxu0
      %v4105 = vadd.f32 0.0, %v4104
      %4106 = vmatmul.bf16.gmra.mxu0 %v2987
      %v4107 = vpop.f32.mrf.mxu0
      %v4108 = vadd.f32 0.0, %v4107
      %v4109 = vpop.f32.mrf.mxu0
      %v4110 = vadd.f32 0.0, %v4109
      %4111 = vmatmul.bf16.gmra.mxu0 %v2990
      %v4112 = vpop.f32.mrf.mxu0
      %v4113 = vadd.f32 0.0, %v4112
      %v4114 = vpop.f32.mrf.mxu0
      %v4115 = vadd.f32 0.0, %v4114
      %4116 = vmatmul.bf16.gmra.mxu0 %v2993
      %v4117 = vpop.f32.mrf.mxu0
      %v4118 = vadd.f32 0.0, %v4117
      %v4119 = vpop.f32.mrf.mxu0
      %v4120 = vadd.f32 0.0, %v4119
      %4121 = vmatmul.bf16.gmra.mxu0 %v2996
      %v4122 = vpop.f32.mrf.mxu0
      %v4123 = vadd.f32 0.0, %v4122
      %v4124 = vpop.f32.mrf.mxu0
      %v4125 = vadd.f32 0.0, %v4124
      %4126 = vmatmul.bf16.gmra.mxu0 %v2999
      %v4127 = vpop.f32.mrf.mxu0
      %v4128 = vadd.f32 0.0, %v4127
      %v4129 = vpop.f32.mrf.mxu0
      %v4130 = vadd.f32 0.0, %v4129
      %4131 = vmatmul.bf16.gmra.mxu0 %v3002
      %v4132 = vpop.f32.mrf.mxu0
      %v4133 = vadd.f32 0.0, %v4132
      %v4134 = vpop.f32.mrf.mxu0
      %v4135 = vadd.f32 0.0, %v4134
      %4136 = vmatmul.bf16.gmra.mxu0 %v3005
      %v4137 = vpop.f32.mrf.mxu0
      %v4138 = vadd.f32 0.0, %v4137
      %v4139 = vpop.f32.mrf.mxu0
      %v4140 = vadd.f32 0.0, %v4139
      %4141 = vmatmul.bf16.gmra.mxu0 %v3008
      %v4142 = vpop.f32.mrf.mxu0
      %v4143 = vadd.f32 0.0, %v4142
      %v4144 = vpop.f32.mrf.mxu0
      %v4145 = vadd.f32 0.0, %v4144
      %4146 = vmatmul.bf16.gmra.mxu0 %v3539
      %v4147 = vpop.f32.mrf.mxu0
      %v4148 = vadd.f32 0.0, %v4147
      %v4149 = vpop.f32.mrf.mxu0
      %v4150 = vadd.f32 0.0, %v4149
      %4151 = vmatmul.bf16.gmra.mxu0 %v3542
      %v4152 = vpop.f32.mrf.mxu0
      %v4153 = vadd.f32 0.0, %v4152
      %v4154 = vpop.f32.mrf.mxu0
      %v4155 = vadd.f32 0.0, %v4154
      %4156 = vmatmul.bf16.gmra.mxu0 %v4073
      %v4157 = vpop.f32.mrf.mxu0
      %v4158 = vadd.f32 0.0, %v4157
      %v4159 = vpop.f32.mrf.mxu0
      %v4160 = vadd.f32 0.0, %v4159
      %4161 = vmatmul.bf16.gmra.mxu0 %v4076
      %v4162 = vpop.f32.mrf.mxu0
      %v4163 = vadd.f32 0.0, %v4162
      %v4164 = vpop.f32.mrf.mxu0
      %v4165 = vadd.f32 0.0, %v4164
      %4166 = vdwg.mxu0
      %v4167 = vrot.slane %v4088, 7
      %v4168 = vrot.slane %v4090, 7
      %v4169 = vrot.slane %v4093, 7
      %v4170 = vrot.slane %v4095, 7
      %v4171 = vrot.slane %v4098, 7
      %v4172 = vrot.slane %v4100, 7
      %v4173 = vrot.slane %v4103, 7
      %v4174 = vrot.slane %v4105, 7
      %v4175 = vrot.slane %v4108, 7
      %v4176 = vrot.slane %v4110, 7
      %v4177 = vrot.slane %v4113, 7
      %v4178 = vrot.slane %v4115, 7
      %v4179 = vrot.slane %v4118, 7
      %v4180 = vrot.slane %v4120, 7
      %v4181 = vrot.slane %v4123, 7
      %v4182 = vrot.slane %v4125, 7
      %v4183 = vrot.slane %v4128, 7
      %v4184 = vrot.slane %v4130, 7
      %v4185 = vrot.slane %v4133, 7
      %v4186 = vrot.slane %v4135, 7
      %v4187 = vrot.slane %v4138, 7
      %v4188 = vrot.slane %v4140, 7
      %v4189 = vrot.slane %v4143, 7
      %v4190 = vrot.slane %v4145, 7
      %v4191 = vrot.slane %v4148, 7
      %v4192 = vrot.slane %v4150, 7
      %v4193 = vrot.slane %v4153, 7
      %v4194 = vrot.slane %v4155, 7
      %v4195 = vrot.slane %v4158, 7
      %v4196 = vrot.slane %v4160, 7
      %v4197 = vrot.slane %v4163, 7
      %v4198 = vrot.slane %v4165, 7
      %v4199 = vsel %vm557, %v4197, %v4198
      %v4200 = vsel %vm557, %v4196, %v4197
      %v4201 = vsel %vm557, %v4195, %v4196
      %v4202 = vsel %vm557, %v4194, %v4195
      %v4203 = vsel %vm557, %v4193, %v4194
      %v4204 = vsel %vm557, %v4192, %v4193
      %v4205 = vsel %vm557, %v4191, %v4192
      %v4206 = vsel %vm557, %v4190, %v4191
      %v4207 = vsel %vm557, %v4189, %v4190
      %v4208 = vsel %vm557, %v4188, %v4189
      %v4209 = vsel %vm557, %v4187, %v4188
      %v4210 = vsel %vm557, %v4186, %v4187
      %v4211 = vsel %vm557, %v4185, %v4186
      %v4212 = vsel %vm557, %v4184, %v4185
      %v4213 = vsel %vm557, %v4183, %v4184
      %v4214 = vsel %vm557, %v4182, %v4183
      %v4215 = vsel %vm557, %v4181, %v4182
      %v4216 = vsel %vm557, %v4180, %v4181
      %v4217 = vsel %vm557, %v4179, %v4180
      %v4218 = vsel %vm557, %v4178, %v4179
      %v4219 = vsel %vm557, %v4177, %v4178
      %v4220 = vsel %vm557, %v4176, %v4177
      %v4221 = vsel %vm557, %v4175, %v4176
      %v4222 = vsel %vm557, %v4174, %v4175
      %v4223 = vsel %vm557, %v4173, %v4174
      %v4224 = vsel %vm557, %v4172, %v4173
      %v4225 = vsel %vm557, %v4171, %v4172
      %v4226 = vsel %vm557, %v4170, %v4171
      %v4227 = vsel %vm557, %v4169, %v4170
      %v4228 = vsel %vm557, %v4168, %v4169
      %v4229 = vsel %vm557, %v4167, %v4168
      %v4230 = vsel %vm557, %v4198, %v4167
      %v4231 = vadd.f32 %v4021, %v4230
      %v4232 = vadd.f32 %v4022, %v4229
      %v4233 = vadd.f32 %v4023, %v4228
      %v4234 = vadd.f32 %v4024, %v4227
      %v4235 = vadd.f32 %v4025, %v4226
      %v4236 = vadd.f32 %v4026, %v4225
      %v4237 = vadd.f32 %v4027, %v4224
      %v4238 = vadd.f32 %v4028, %v4223
      %v4239 = vadd.f32 %v4029, %v4222
      %v4240 = vadd.f32 %v4030, %v4221
      %v4241 = vadd.f32 %v4031, %v4220
      %v4242 = vadd.f32 %v4032, %v4219
      %v4243 = vadd.f32 %v4033, %v4218
      %v4244 = vadd.f32 %v4034, %v4217
      %v4245 = vadd.f32 %v4035, %v4216
      %v4246 = vadd.f32 %v4036, %v4215
      %v4247 = vadd.f32 %v4037, %v4214
      %v4248 = vadd.f32 %v4038, %v4213
      %v4249 = vadd.f32 %v4039, %v4212
      %v4250 = vadd.f32 %v4040, %v4211
      %v4251 = vadd.f32 %v4041, %v4210
      %v4252 = vadd.f32 %v4042, %v4209
      %v4253 = vadd.f32 %v4043, %v4208
      %v4254 = vadd.f32 %v4044, %v4207
      %v4255 = vadd.f32 %v4045, %v4206
      %v4256 = vadd.f32 %v4046, %v4205
      %v4257 = vadd.f32 %v4047, %v4204
      %v4258 = vadd.f32 %v4048, %v4203
      %v4259 = vadd.f32 %v4049, %v4202
      %v4260 = vadd.f32 %v4050, %v4201
      %v4261 = vadd.f32 %v4051, %v4200
      %v4262 = vadd.f32 %v4052, %v4199
      %s4263 = scalar_lea.vmem %s3, 56
      %v4264 = vld [vmem:[%s4263] sm:$0xf]
      %v4265 = vld [vmem:[%s4263 + $0x4] sm:$0xf]
      %v4268 = vunpack.c.l.b16 %v4264
      %v4269 = vunpack.c.l.b16 %v4265
      %v4270 = vpack.c.b16 %v4269, %v4268
      %4272 = vmatpush.bf16.msra.mxu0 0
      %4273 = vmatpush.bf16.msra.mxu0 0
      %4274 = vmatpush.bf16.msra.mxu0 0
      %4275 = vmatpush.bf16.msra.mxu0 0
      %4276 = vmatpush.bf16.msra.mxu0 0
      %4277 = vmatpush.bf16.msra.mxu0 0
      %4278 = vmatpush.bf16.msra.mxu0 0
      %4279 = vmatpush.bf16.msra.mxu0 %v4270
      %4280 = vmatmul.bf16.gmra.mxu0 %v2975
      %v4281 = vpop.f32.mrf.mxu0
      %v4282 = vadd.f32 0.0, %v4281
      %v4283 = vpop.f32.mrf.mxu0
      %v4284 = vadd.f32 0.0, %v4283
      %4285 = vmatmul.bf16.gmra.mxu0 %v2978
      %v4286 = vpop.f32.mrf.mxu0
      %v4287 = vadd.f32 0.0, %v4286
      %v4288 = vpop.f32.mrf.mxu0
      %v4289 = vadd.f32 0.0, %v4288
      %4290 = vmatmul.bf16.gmra.mxu0 %v2981
      %v4291 = vpop.f32.mrf.mxu0
      %v4292 = vadd.f32 0.0, %v4291
      %v4293 = vpop.f32.mrf.mxu0
      %v4294 = vadd.f32 0.0, %v4293
      %4295 = vmatmul.bf16.gmra.mxu0 %v2984
      %v4296 = vpop.f32.mrf.mxu0
      %v4297 = vadd.f32 0.0, %v4296
      %v4298 = vpop.f32.mrf.mxu0
      %v4299 = vadd.f32 0.0, %v4298
      %4300 = vmatmul.bf16.gmra.mxu0 %v2987
      %v4301 = vpop.f32.mrf.mxu0
      %v4302 = vadd.f32 0.0, %v4301
      %v4303 = vpop.f32.mrf.mxu0
      %v4304 = vadd.f32 0.0, %v4303
      %4305 = vmatmul.bf16.gmra.mxu0 %v2990
      %v4306 = vpop.f32.mrf.mxu0
      %v4307 = vadd.f32 0.0, %v4306
      %v4308 = vpop.f32.mrf.mxu0
      %v4309 = vadd.f32 0.0, %v4308
      %4310 = vmatmul.bf16.gmra.mxu0 %v2993
      %v4311 = vpop.f32.mrf.mxu0
      %v4312 = vadd.f32 0.0, %v4311
      %v4313 = vpop.f32.mrf.mxu0
      %v4314 = vadd.f32 0.0, %v4313
      %4315 = vmatmul.bf16.gmra.mxu0 %v2996
      %v4316 = vpop.f32.mrf.mxu0
      %v4317 = vadd.f32 0.0, %v4316
      %v4318 = vpop.f32.mrf.mxu0
      %v4319 = vadd.f32 0.0, %v4318
      %4320 = vmatmul.bf16.gmra.mxu0 %v2999
      %v4321 = vpop.f32.mrf.mxu0
      %v4322 = vadd.f32 0.0, %v4321
      %v4323 = vpop.f32.mrf.mxu0
      %v4324 = vadd.f32 0.0, %v4323
      %4325 = vmatmul.bf16.gmra.mxu0 %v3002
      %v4326 = vpop.f32.mrf.mxu0
      %v4327 = vadd.f32 0.0, %v4326
      %v4328 = vpop.f32.mrf.mxu0
      %v4329 = vadd.f32 0.0, %v4328
      %4330 = vmatmul.bf16.gmra.mxu0 %v3005
      %v4331 = vpop.f32.mrf.mxu0
      %v4332 = vadd.f32 0.0, %v4331
      %v4333 = vpop.f32.mrf.mxu0
      %v4334 = vadd.f32 0.0, %v4333
      %4335 = vmatmul.bf16.gmra.mxu0 %v3008
      %v4336 = vpop.f32.mrf.mxu0
      %v4337 = vadd.f32 0.0, %v4336
      %v4338 = vpop.f32.mrf.mxu0
      %v4339 = vadd.f32 0.0, %v4338
      %4340 = vmatmul.bf16.gmra.mxu0 %v3539
      %v4341 = vpop.f32.mrf.mxu0
      %v4342 = vadd.f32 0.0, %v4341
      %v4343 = vpop.f32.mrf.mxu0
      %v4344 = vadd.f32 0.0, %v4343
      %4345 = vmatmul.bf16.gmra.mxu0 %v3542
      %v4346 = vpop.f32.mrf.mxu0
      %v4347 = vadd.f32 0.0, %v4346
      %v4348 = vpop.f32.mrf.mxu0
      %v4349 = vadd.f32 0.0, %v4348
      %4350 = vmatmul.bf16.gmra.mxu0 %v4073
      %v4351 = vpop.f32.mrf.mxu0
      %v4352 = vadd.f32 0.0, %v4351
      %v4353 = vpop.f32.mrf.mxu0
      %v4354 = vadd.f32 0.0, %v4353
      %4355 = vmatmul.bf16.gmra.mxu0 %v4076
      %v4356 = vpop.f32.mrf.mxu0
      %v4357 = vadd.f32 0.0, %v4356
      %v4358 = vpop.f32.mrf.mxu0
      %v4359 = vadd.f32 0.0, %v4358
      %4360 = vdwg.mxu0
      %v4361 = vadd.f32 %v4231, %v4282
      %v4362 = vadd.f32 %v4232, %v4284
      %v4363 = vadd.f32 %v4233, %v4287
      %v4364 = vadd.f32 %v4234, %v4289
      %v4365 = vadd.f32 %v4235, %v4292
      %v4366 = vadd.f32 %v4236, %v4294
      %v4367 = vadd.f32 %v4237, %v4297
      %v4368 = vadd.f32 %v4238, %v4299
      %v4369 = vadd.f32 %v4239, %v4302
      %v4370 = vadd.f32 %v4240, %v4304
      %v4371 = vadd.f32 %v4241, %v4307
      %v4372 = vadd.f32 %v4242, %v4309
      %v4373 = vadd.f32 %v4243, %v4312
      %v4374 = vadd.f32 %v4244, %v4314
      %v4375 = vadd.f32 %v4245, %v4317
      %v4376 = vadd.f32 %v4246, %v4319
      %v4377 = vadd.f32 %v4247, %v4322
      %v4378 = vadd.f32 %v4248, %v4324
      %v4379 = vadd.f32 %v4249, %v4327
      %v4380 = vadd.f32 %v4250, %v4329
      %v4381 = vadd.f32 %v4251, %v4332
      %v4382 = vadd.f32 %v4252, %v4334
      %v4383 = vadd.f32 %v4253, %v4337
      %v4384 = vadd.f32 %v4254, %v4339
      %v4385 = vadd.f32 %v4255, %v4342
      %v4386 = vadd.f32 %v4256, %v4344
      %v4387 = vadd.f32 %v4257, %v4347
      %v4388 = vadd.f32 %v4258, %v4349
      %v4389 = vadd.f32 %v4259, %v4352
      %v4390 = vadd.f32 %v4260, %v4354
      %v4391 = vadd.f32 %v4261, %v4357
      %v4392 = vadd.f32 %v4262, %v4359
      %s4393 = scalar_lea.vmem %s3, 64
      %v4394 = vld [vmem:[%s4393] sm:$0xf]
      %v4395 = vld [vmem:[%s4393 + $0x4] sm:$0xf]
      %v4398 = vunpack.c.l.b16 %v4394
      %v4399 = vunpack.c.l.b16 %v4395
      %v4400 = vpack.c.b16 %v4399, %v4398
      %4402 = vmatpush.bf16.msra.mxu0 0
      %4403 = vmatpush.bf16.msra.mxu0 0
      %4404 = vmatpush.bf16.msra.mxu0 0
      %4405 = vmatpush.bf16.msra.mxu0 0
      %4406 = vmatpush.bf16.msra.mxu0 0
      %4407 = vmatpush.bf16.msra.mxu0 0
      %4408 = vmatpush.bf16.msra.mxu0 0
      %4409 = vmatpush.bf16.msra.mxu0 %v4400
      %4410 = vmatmul.bf16.gmra.mxu0 %v2975
      %v4411 = vpop.f32.mrf.mxu0
      %v4412 = vadd.f32 0.0, %v4411
      %v4413 = vpop.f32.mrf.mxu0
      %v4414 = vadd.f32 0.0, %v4413
      %4415 = vmatmul.bf16.gmra.mxu0 %v2978
      %v4416 = vpop.f32.mrf.mxu0
      %v4417 = vadd.f32 0.0, %v4416
      %v4418 = vpop.f32.mrf.mxu0
      %v4419 = vadd.f32 0.0, %v4418
      %4420 = vmatmul.bf16.gmra.mxu0 %v2981
      %v4421 = vpop.f32.mrf.mxu0
      %v4422 = vadd.f32 0.0, %v4421
      %v4423 = vpop.f32.mrf.mxu0
      %v4424 = vadd.f32 0.0, %v4423
      %4425 = vmatmul.bf16.gmra.mxu0 %v2984
      %v4426 = vpop.f32.mrf.mxu0
      %v4427 = vadd.f32 0.0, %v4426
      %v4428 = vpop.f32.mrf.mxu0
      %v4429 = vadd.f32 0.0, %v4428
      %4430 = vmatmul.bf16.gmra.mxu0 %v2987
      %v4431 = vpop.f32.mrf.mxu0
      %v4432 = vadd.f32 0.0, %v4431
      %v4433 = vpop.f32.mrf.mxu0
      %v4434 = vadd.f32 0.0, %v4433
      %4435 = vmatmul.bf16.gmra.mxu0 %v2990
      %v4436 = vpop.f32.mrf.mxu0
      %v4437 = vadd.f32 0.0, %v4436
      %v4438 = vpop.f32.mrf.mxu0
      %v4439 = vadd.f32 0.0, %v4438
      %4440 = vmatmul.bf16.gmra.mxu0 %v2993
      %v4441 = vpop.f32.mrf.mxu0
      %v4442 = vadd.f32 0.0, %v4441
      %v4443 = vpop.f32.mrf.mxu0
      %v4444 = vadd.f32 0.0, %v4443
      %4445 = vmatmul.bf16.gmra.mxu0 %v2996
      %v4446 = vpop.f32.mrf.mxu0
      %v4447 = vadd.f32 0.0, %v4446
      %v4448 = vpop.f32.mrf.mxu0
      %v4449 = vadd.f32 0.0, %v4448
      %4450 = vmatmul.bf16.gmra.mxu0 %v2999
      %v4451 = vpop.f32.mrf.mxu0
      %v4452 = vadd.f32 0.0, %v4451
      %v4453 = vpop.f32.mrf.mxu0
      %v4454 = vadd.f32 0.0, %v4453
      %4455 = vmatmul.bf16.gmra.mxu0 %v3002
      %v4456 = vpop.f32.mrf.mxu0
      %v4457 = vadd.f32 0.0, %v4456
      %v4458 = vpop.f32.mrf.mxu0
      %v4459 = vadd.f32 0.0, %v4458
      %4460 = vmatmul.bf16.gmra.mxu0 %v3005
      %v4461 = vpop.f32.mrf.mxu0
      %v4462 = vadd.f32 0.0, %v4461
      %v4463 = vpop.f32.mrf.mxu0
      %v4464 = vadd.f32 0.0, %v4463
      %4465 = vmatmul.bf16.gmra.mxu0 %v3008
      %v4466 = vpop.f32.mrf.mxu0
      %v4467 = vadd.f32 0.0, %v4466
      %v4468 = vpop.f32.mrf.mxu0
      %v4469 = vadd.f32 0.0, %v4468
      %4470 = vmatmul.bf16.gmra.mxu0 %v3539
      %v4471 = vpop.f32.mrf.mxu0
      %v4472 = vadd.f32 0.0, %v4471
      %v4473 = vpop.f32.mrf.mxu0
      %v4474 = vadd.f32 0.0, %v4473
      %4475 = vmatmul.bf16.gmra.mxu0 %v3542
      %v4476 = vpop.f32.mrf.mxu0
      %v4477 = vadd.f32 0.0, %v4476
      %v4478 = vpop.f32.mrf.mxu0
      %v4479 = vadd.f32 0.0, %v4478
      %4480 = vmatmul.bf16.gmra.mxu0 %v4073
      %v4481 = vpop.f32.mrf.mxu0
      %v4482 = vadd.f32 0.0, %v4481
      %v4483 = vpop.f32.mrf.mxu0
      %v4484 = vadd.f32 0.0, %v4483
      %4485 = vmatmul.bf16.gmra.mxu0 %v4076
      %v4486 = vpop.f32.mrf.mxu0
      %v4487 = vadd.f32 0.0, %v4486
      %v4488 = vpop.f32.mrf.mxu0
      %v4489 = vadd.f32 0.0, %v4488
      %4490 = vdwg.mxu0
      %v4491 = vrot.slane %v4412, 1
      %v4492 = vrot.slane %v4414, 1
      %v4493 = vrot.slane %v4417, 1
      %v4494 = vrot.slane %v4419, 1
      %v4495 = vrot.slane %v4422, 1
      %v4496 = vrot.slane %v4424, 1
      %v4497 = vrot.slane %v4427, 1
      %v4498 = vrot.slane %v4429, 1
      %v4499 = vrot.slane %v4432, 1
      %v4500 = vrot.slane %v4434, 1
      %v4501 = vrot.slane %v4437, 1
      %v4502 = vrot.slane %v4439, 1
      %v4503 = vrot.slane %v4442, 1
      %v4504 = vrot.slane %v4444, 1
      %v4505 = vrot.slane %v4447, 1
      %v4506 = vrot.slane %v4449, 1
      %v4507 = vrot.slane %v4452, 1
      %v4508 = vrot.slane %v4454, 1
      %v4509 = vrot.slane %v4457, 1
      %v4510 = vrot.slane %v4459, 1
      %v4511 = vrot.slane %v4462, 1
      %v4512 = vrot.slane %v4464, 1
      %v4513 = vrot.slane %v4467, 1
      %v4514 = vrot.slane %v4469, 1
      %v4515 = vrot.slane %v4472, 1
      %v4516 = vrot.slane %v4474, 1
      %v4517 = vrot.slane %v4477, 1
      %v4518 = vrot.slane %v4479, 1
      %v4519 = vrot.slane %v4482, 1
      %v4520 = vrot.slane %v4484, 1
      %v4521 = vrot.slane %v4487, 1
      %v4522 = vrot.slane %v4489, 1
      %v4523 = vsel %vm766, %v4521, %v4522
      %v4524 = vsel %vm766, %v4520, %v4521
      %v4525 = vsel %vm766, %v4519, %v4520
      %v4526 = vsel %vm766, %v4518, %v4519
      %v4527 = vsel %vm766, %v4517, %v4518
      %v4528 = vsel %vm766, %v4516, %v4517
      %v4529 = vsel %vm766, %v4515, %v4516
      %v4530 = vsel %vm766, %v4514, %v4515
      %v4531 = vsel %vm766, %v4513, %v4514
      %v4532 = vsel %vm766, %v4512, %v4513
      %v4533 = vsel %vm766, %v4511, %v4512
      %v4534 = vsel %vm766, %v4510, %v4511
      %v4535 = vsel %vm766, %v4509, %v4510
      %v4536 = vsel %vm766, %v4508, %v4509
      %v4537 = vsel %vm766, %v4507, %v4508
      %v4538 = vsel %vm766, %v4506, %v4507
      %v4539 = vsel %vm766, %v4505, %v4506
      %v4540 = vsel %vm766, %v4504, %v4505
      %v4541 = vsel %vm766, %v4503, %v4504
      %v4542 = vsel %vm766, %v4502, %v4503
      %v4543 = vsel %vm766, %v4501, %v4502
      %v4544 = vsel %vm766, %v4500, %v4501
      %v4545 = vsel %vm766, %v4499, %v4500
      %v4546 = vsel %vm766, %v4498, %v4499
      %v4547 = vsel %vm766, %v4497, %v4498
      %v4548 = vsel %vm766, %v4496, %v4497
      %v4549 = vsel %vm766, %v4495, %v4496
      %v4550 = vsel %vm766, %v4494, %v4495
      %v4551 = vsel %vm766, %v4493, %v4494
      %v4552 = vsel %vm766, %v4492, %v4493
      %v4553 = vsel %vm766, %v4491, %v4492
      %v4554 = vsel %vm766, %v4522, %v4491
      %v4555 = vadd.f32 %v4361, %v4553
      %v4556 = vadd.f32 %v4362, %v4552
      %v4557 = vadd.f32 %v4363, %v4551
      %v4558 = vadd.f32 %v4364, %v4550
      %v4559 = vadd.f32 %v4365, %v4549
      %v4560 = vadd.f32 %v4366, %v4548
      %v4561 = vadd.f32 %v4367, %v4547
      %v4562 = vadd.f32 %v4368, %v4546
      %v4563 = vadd.f32 %v4369, %v4545
      %v4564 = vadd.f32 %v4370, %v4544
      %v4565 = vadd.f32 %v4371, %v4543
      %v4566 = vadd.f32 %v4372, %v4542
      %v4567 = vadd.f32 %v4373, %v4541
      %v4568 = vadd.f32 %v4374, %v4540
      %v4569 = vadd.f32 %v4375, %v4539
      %v4570 = vadd.f32 %v4376, %v4538
      %v4571 = vadd.f32 %v4377, %v4537
      %v4572 = vadd.f32 %v4378, %v4536
      %v4573 = vadd.f32 %v4379, %v4535
      %v4574 = vadd.f32 %v4380, %v4534
      %v4575 = vadd.f32 %v4381, %v4533
      %v4576 = vadd.f32 %v4382, %v4532
      %v4577 = vadd.f32 %v4383, %v4531
      %v4578 = vadd.f32 %v4384, %v4530
      %v4579 = vadd.f32 %v4385, %v4529
      %v4580 = vadd.f32 %v4386, %v4528
      %v4581 = vadd.f32 %v4387, %v4527
      %v4582 = vadd.f32 %v4388, %v4526
      %v4583 = vadd.f32 %v4389, %v4525
      %v4584 = vadd.f32 %v4390, %v4524
      %v4585 = vadd.f32 %v4391, %v4523
      %v4586 = vadd.f32 %v4392, %v4554
      %vm4587 = vcmp.gt.f32.partialorder %v4555, 0.0
      %vm4588 = vcmp.gt.f32.partialorder %v4556, 0.0
      %vm4589 = vcmp.gt.f32.partialorder %v4557, 0.0
      %vm4590 = vcmp.gt.f32.partialorder %v4558, 0.0
      %vm4591 = vcmp.gt.f32.partialorder %v4559, 0.0
      %vm4592 = vcmp.gt.f32.partialorder %v4560, 0.0
      %vm4593 = vcmp.gt.f32.partialorder %v4561, 0.0
      %vm4594 = vcmp.gt.f32.partialorder %v4562, 0.0
      %vm4595 = vcmp.gt.f32.partialorder %v4563, 0.0
      %vm4596 = vcmp.gt.f32.partialorder %v4564, 0.0
      %vm4597 = vcmp.gt.f32.partialorder %v4565, 0.0
      %vm4598 = vcmp.gt.f32.partialorder %v4566, 0.0
      %vm4599 = vcmp.gt.f32.partialorder %v4567, 0.0
      %vm4600 = vcmp.gt.f32.partialorder %v4568, 0.0
      %vm4601 = vcmp.gt.f32.partialorder %v4569, 0.0
      %vm4602 = vcmp.gt.f32.partialorder %v4570, 0.0
      %vm4603 = vcmp.gt.f32.partialorder %v4571, 0.0
      %vm4604 = vcmp.gt.f32.partialorder %v4572, 0.0
      %vm4605 = vcmp.gt.f32.partialorder %v4573, 0.0
      %vm4606 = vcmp.gt.f32.partialorder %v4574, 0.0
      %vm4607 = vcmp.gt.f32.partialorder %v4575, 0.0
      %vm4608 = vcmp.gt.f32.partialorder %v4576, 0.0
      %vm4609 = vcmp.gt.f32.partialorder %v4577, 0.0
      %vm4610 = vcmp.gt.f32.partialorder %v4578, 0.0
      %vm4611 = vcmp.gt.f32.partialorder %v4579, 0.0
      %vm4612 = vcmp.gt.f32.partialorder %v4580, 0.0
      %vm4613 = vcmp.gt.f32.partialorder %v4581, 0.0
      %vm4614 = vcmp.gt.f32.partialorder %v4582, 0.0
      %vm4615 = vcmp.gt.f32.partialorder %v4583, 0.0
      %vm4616 = vcmp.gt.f32.partialorder %v4584, 0.0
      %vm4617 = vcmp.gt.f32.partialorder %v4585, 0.0
      %vm4618 = vcmp.gt.f32.partialorder %v4586, 0.0
      %v4619 = vmul.f32 %v4555, 0.2
      %v4620 = vmul.f32 %v4556, 0.2
      %v4621 = vmul.f32 %v4557, 0.2
      %v4622 = vmul.f32 %v4558, 0.2
      %v4623 = vmul.f32 %v4559, 0.2
      %v4624 = vmul.f32 %v4560, 0.2
      %v4625 = vmul.f32 %v4561, 0.2
      %v4626 = vmul.f32 %v4562, 0.2
      %v4627 = vmul.f32 %v4563, 0.2
      %v4628 = vmul.f32 %v4564, 0.2
      %v4629 = vmul.f32 %v4565, 0.2
      %v4630 = vmul.f32 %v4566, 0.2
      %v4631 = vmul.f32 %v4567, 0.2
      %v4632 = vmul.f32 %v4568, 0.2
      %v4633 = vmul.f32 %v4569, 0.2
      %v4634 = vmul.f32 %v4570, 0.2
      %v4635 = vmul.f32 %v4571, 0.2
      %v4636 = vmul.f32 %v4572, 0.2
      %v4637 = vmul.f32 %v4573, 0.2
      %v4638 = vmul.f32 %v4574, 0.2
      %v4639 = vmul.f32 %v4575, 0.2
      %v4640 = vmul.f32 %v4576, 0.2
      %v4641 = vmul.f32 %v4577, 0.2
      %v4642 = vmul.f32 %v4578, 0.2
      %v4643 = vmul.f32 %v4579, 0.2
      %v4644 = vmul.f32 %v4580, 0.2
      %v4645 = vmul.f32 %v4581, 0.2
      %v4646 = vmul.f32 %v4582, 0.2
      %v4647 = vmul.f32 %v4583, 0.2
      %v4648 = vmul.f32 %v4584, 0.2
      %v4649 = vmul.f32 %v4585, 0.2
      %v4650 = vmul.f32 %v4586, 0.2
      %v4651 = vsel %vm4587, %v4555, %v4619
      %v4652 = vsel %vm4588, %v4556, %v4620
      %v4653 = vsel %vm4589, %v4557, %v4621
      %v4654 = vsel %vm4590, %v4558, %v4622
      %v4655 = vsel %vm4591, %v4559, %v4623
      %v4656 = vsel %vm4592, %v4560, %v4624
      %v4657 = vsel %vm4593, %v4561, %v4625
      %v4658 = vsel %vm4594, %v4562, %v4626
      %v4659 = vsel %vm4595, %v4563, %v4627
      %v4660 = vsel %vm4596, %v4564, %v4628
      %v4661 = vsel %vm4597, %v4565, %v4629
      %v4662 = vsel %vm4598, %v4566, %v4630
      %v4663 = vsel %vm4599, %v4567, %v4631
      %v4664 = vsel %vm4600, %v4568, %v4632
      %v4665 = vsel %vm4601, %v4569, %v4633
      %v4666 = vsel %vm4602, %v4570, %v4634
      %v4667 = vsel %vm4603, %v4571, %v4635
      %v4668 = vsel %vm4604, %v4572, %v4636
      %v4669 = vsel %vm4605, %v4573, %v4637
      %v4670 = vsel %vm4606, %v4574, %v4638
      %v4671 = vsel %vm4607, %v4575, %v4639
      %v4672 = vsel %vm4608, %v4576, %v4640
      %v4673 = vsel %vm4609, %v4577, %v4641
      %v4674 = vsel %vm4610, %v4578, %v4642
      %v4675 = vsel %vm4611, %v4579, %v4643
      %v4676 = vsel %vm4612, %v4580, %v4644
      %v4677 = vsel %vm4613, %v4581, %v4645
      %v4678 = vsel %vm4614, %v4582, %v4646
      %v4679 = vsel %vm4615, %v4583, %v4647
      %v4680 = vsel %vm4616, %v4584, %v4648
      %v4681 = vsel %vm4617, %v4585, %v4649
      %v4682 = vsel %vm4618, %v4586, %v4650
      %v4683 = vmul.f32 %v4651, %v4651
      %v4684 = vmul.f32 %v4652, %v4652
      %v4685 = vmul.f32 %v4653, %v4653
      %v4686 = vmul.f32 %v4654, %v4654
      %v4687 = vmul.f32 %v4655, %v4655
      %v4688 = vmul.f32 %v4656, %v4656
      %v4689 = vmul.f32 %v4657, %v4657
      %v4690 = vmul.f32 %v4658, %v4658
      %v4691 = vmul.f32 %v4659, %v4659
      %v4692 = vmul.f32 %v4660, %v4660
      %v4693 = vmul.f32 %v4661, %v4661
      %v4694 = vmul.f32 %v4662, %v4662
      %v4695 = vmul.f32 %v4663, %v4663
      %v4696 = vmul.f32 %v4664, %v4664
      %v4697 = vmul.f32 %v4665, %v4665
      %v4698 = vmul.f32 %v4666, %v4666
      %v4699 = vmul.f32 %v4667, %v4667
      %v4700 = vmul.f32 %v4668, %v4668
      %v4701 = vmul.f32 %v4669, %v4669
      %v4702 = vmul.f32 %v4670, %v4670
      %v4703 = vmul.f32 %v4671, %v4671
      %v4704 = vmul.f32 %v4672, %v4672
      %v4705 = vmul.f32 %v4673, %v4673
      %v4706 = vmul.f32 %v4674, %v4674
      %v4707 = vmul.f32 %v4675, %v4675
      %v4708 = vmul.f32 %v4676, %v4676
      %v4709 = vmul.f32 %v4677, %v4677
      %v4710 = vmul.f32 %v4678, %v4678
      %v4711 = vmul.f32 %v4679, %v4679
      %v4712 = vmul.f32 %v4680, %v4680
      %v4713 = vmul.f32 %v4681, %v4681
      %v4714 = vmul.f32 %v4682, %v4682
      %v4715 = vsel %vm1235, %v4683, 0.0
      %4716 = vadd.xlane.f32.xlu0 %v4715
      %v4717 = vpop.xlane.xlu0 %4716
      %v4718 = vsel %vm1235, %v4684, 0.0
      %4719 = vadd.xlane.f32.xlu0 %v4718
      %v4720 = vpop.xlane.xlu0 %4719
      %v4721 = vsel %vm1235, %v4685, 0.0
      %4722 = vadd.xlane.f32.xlu0 %v4721
      %v4723 = vpop.xlane.xlu0 %4722
      %v4724 = vsel %vm1235, %v4686, 0.0
      %4725 = vadd.xlane.f32.xlu0 %v4724
      %v4726 = vpop.xlane.xlu0 %4725
      %v4727 = vsel %vm1235, %v4687, 0.0
      %4728 = vadd.xlane.f32.xlu0 %v4727
      %v4729 = vpop.xlane.xlu0 %4728
      %v4730 = vsel %vm1235, %v4688, 0.0
      %4731 = vadd.xlane.f32.xlu0 %v4730
      %v4732 = vpop.xlane.xlu0 %4731
      %v4733 = vsel %vm1235, %v4689, 0.0
      %4734 = vadd.xlane.f32.xlu0 %v4733
      %v4735 = vpop.xlane.xlu0 %4734
      %v4736 = vsel %vm1235, %v4690, 0.0
      %4737 = vadd.xlane.f32.xlu0 %v4736
      %v4738 = vpop.xlane.xlu0 %4737
      %v4739 = vsel %vm1235, %v4691, 0.0
      %4740 = vadd.xlane.f32.xlu0 %v4739
      %v4741 = vpop.xlane.xlu0 %4740
      %v4742 = vsel %vm1235, %v4692, 0.0
      %4743 = vadd.xlane.f32.xlu0 %v4742
      %v4744 = vpop.xlane.xlu0 %4743
      %v4745 = vsel %vm1235, %v4693, 0.0
      %4746 = vadd.xlane.f32.xlu0 %v4745
      %v4747 = vpop.xlane.xlu0 %4746
      %v4748 = vsel %vm1235, %v4694, 0.0
      %4749 = vadd.xlane.f32.xlu0 %v4748
      %v4750 = vpop.xlane.xlu0 %4749
      %v4751 = vsel %vm1235, %v4695, 0.0
      %4752 = vadd.xlane.f32.xlu0 %v4751
      %v4753 = vpop.xlane.xlu0 %4752
      %v4754 = vsel %vm1235, %v4696, 0.0
      %4755 = vadd.xlane.f32.xlu0 %v4754
      %v4756 = vpop.xlane.xlu0 %4755
      %v4757 = vsel %vm1235, %v4697, 0.0
      %4758 = vadd.xlane.f32.xlu0 %v4757
      %v4759 = vpop.xlane.xlu0 %4758
      %v4760 = vsel %vm1235, %v4698, 0.0
      %4761 = vadd.xlane.f32.xlu0 %v4760
      %v4762 = vpop.xlane.xlu0 %4761
      %v4763 = vsel %vm1235, %v4699, 0.0
      %4764 = vadd.xlane.f32.xlu0 %v4763
      %v4765 = vpop.xlane.xlu0 %4764
      %v4766 = vsel %vm1235, %v4700, 0.0
      %4767 = vadd.xlane.f32.xlu0 %v4766
      %v4768 = vpop.xlane.xlu0 %4767
      %v4769 = vsel %vm1235, %v4701, 0.0
      %4770 = vadd.xlane.f32.xlu0 %v4769
      %v4771 = vpop.xlane.xlu0 %4770
      %v4772 = vsel %vm1235, %v4702, 0.0
      %4773 = vadd.xlane.f32.xlu0 %v4772
      %v4774 = vpop.xlane.xlu0 %4773
      %v4775 = vsel %vm1235, %v4703, 0.0
      %4776 = vadd.xlane.f32.xlu0 %v4775
      %v4777 = vpop.xlane.xlu0 %4776
      %v4778 = vsel %vm1235, %v4704, 0.0
      %4779 = vadd.xlane.f32.xlu0 %v4778
      %v4780 = vpop.xlane.xlu0 %4779
      %v4781 = vsel %vm1235, %v4705, 0.0
      %4782 = vadd.xlane.f32.xlu0 %v4781
      %v4783 = vpop.xlane.xlu0 %4782
      %v4784 = vsel %vm1235, %v4706, 0.0
      %4785 = vadd.xlane.f32.xlu0 %v4784
      %v4786 = vpop.xlane.xlu0 %4785
      %v4787 = vsel %vm1235, %v4707, 0.0
      %4788 = vadd.xlane.f32.xlu0 %v4787
      %v4789 = vpop.xlane.xlu0 %4788
      %v4790 = vsel %vm1235, %v4708, 0.0
      %4791 = vadd.xlane.f32.xlu0 %v4790
      %v4792 = vpop.xlane.xlu0 %4791
      %v4793 = vsel %vm1235, %v4709, 0.0
      %4794 = vadd.xlane.f32.xlu0 %v4793
      %v4795 = vpop.xlane.xlu0 %4794
      %v4796 = vsel %vm1235, %v4710, 0.0
      %4797 = vadd.xlane.f32.xlu0 %v4796
      %v4798 = vpop.xlane.xlu0 %4797
      %v4799 = vsel %vm1235, %v4711, 0.0
      %4800 = vadd.xlane.f32.xlu0 %v4799
      %v4801 = vpop.xlane.xlu0 %4800
      %v4802 = vsel %vm1235, %v4712, 0.0
      %4803 = vadd.xlane.f32.xlu0 %v4802
      %v4804 = vpop.xlane.xlu0 %4803
      %v4805 = vsel %vm1235, %v4713, 0.0
      %4806 = vadd.xlane.f32.xlu0 %v4805
      %v4807 = vpop.xlane.xlu0 %4806
      %v4808 = vsel %vm1235, %v4714, 0.0
      %4809 = vadd.xlane.f32.xlu0 %v4808
      %v4810 = vpop.xlane.xlu0 %4809
      %v4811 = vmul.f32 %v4717, %v1302
      %v4812 = vmul.f32 %v4720, %v1302
      %v4813 = vmul.f32 %v4723, %v1302
      %v4814 = vmul.f32 %v4726, %v1302
      %v4815 = vmul.f32 %v4729, %v1302
      %v4816 = vmul.f32 %v4732, %v1302
      %v4817 = vmul.f32 %v4735, %v1302
      %v4818 = vmul.f32 %v4738, %v1302
      %v4819 = vmul.f32 %v4741, %v1302
      %v4820 = vmul.f32 %v4744, %v1302
      %v4821 = vmul.f32 %v4747, %v1302
      %v4822 = vmul.f32 %v4750, %v1302
      %v4823 = vmul.f32 %v4753, %v1302
      %v4824 = vmul.f32 %v4756, %v1302
      %v4825 = vmul.f32 %v4759, %v1302
      %v4826 = vmul.f32 %v4762, %v1302
      %v4827 = vmul.f32 %v4765, %v1302
      %v4828 = vmul.f32 %v4768, %v1302
      %v4829 = vmul.f32 %v4771, %v1302
      %v4830 = vmul.f32 %v4774, %v1302
      %v4831 = vmul.f32 %v4777, %v1302
      %v4832 = vmul.f32 %v4780, %v1302
      %v4833 = vmul.f32 %v4783, %v1302
      %v4834 = vmul.f32 %v4786, %v1302
      %v4835 = vmul.f32 %v4789, %v1302
      %v4836 = vmul.f32 %v4792, %v1302
      %v4837 = vmul.f32 %v4795, %v1302
      %v4838 = vmul.f32 %v4798, %v1302
      %v4839 = vmul.f32 %v4801, %v1302
      %v4840 = vmul.f32 %v4804, %v1302
      %v4841 = vmul.f32 %v4807, %v1302
      %v4842 = vmul.f32 %v4810, %v1302
      %v4843 = vadd.f32 %v4811, 1e-08
      %v4844 = vadd.f32 %v4812, 1e-08
      %v4845 = vadd.f32 %v4813, 1e-08
      %v4846 = vadd.f32 %v4814, 1e-08
      %v4847 = vadd.f32 %v4815, 1e-08
      %v4848 = vadd.f32 %v4816, 1e-08
      %v4849 = vadd.f32 %v4817, 1e-08
      %v4850 = vadd.f32 %v4818, 1e-08
      %v4851 = vadd.f32 %v4819, 1e-08
      %v4852 = vadd.f32 %v4820, 1e-08
      %v4853 = vadd.f32 %v4821, 1e-08
      %v4854 = vadd.f32 %v4822, 1e-08
      %v4855 = vadd.f32 %v4823, 1e-08
      %v4856 = vadd.f32 %v4824, 1e-08
      %v4857 = vadd.f32 %v4825, 1e-08
      %v4858 = vadd.f32 %v4826, 1e-08
      %v4859 = vadd.f32 %v4827, 1e-08
      %v4860 = vadd.f32 %v4828, 1e-08
      %v4861 = vadd.f32 %v4829, 1e-08
      %v4862 = vadd.f32 %v4830, 1e-08
      %v4863 = vadd.f32 %v4831, 1e-08
      %v4864 = vadd.f32 %v4832, 1e-08
      %v4865 = vadd.f32 %v4833, 1e-08
      %v4866 = vadd.f32 %v4834, 1e-08
      %v4867 = vadd.f32 %v4835, 1e-08
      %v4868 = vadd.f32 %v4836, 1e-08
      %v4869 = vadd.f32 %v4837, 1e-08
      %v4870 = vadd.f32 %v4838, 1e-08
      %v4871 = vadd.f32 %v4839, 1e-08
      %v4872 = vadd.f32 %v4840, 1e-08
      %v4873 = vadd.f32 %v4841, 1e-08
      %v4874 = vadd.f32 %v4842, 1e-08
      %v4875 = vrsqrt.pop %v4843
      %v4876 = vmul.f32 %v4875, %v4843
      %v4877 = vmul.f32 %v4876, %v4875
      %v4878 = vmul.f32 0.5, %v4877
      %v4879 = vsub.f32 1.5, %v4878
      %v4880 = vmul.f32 %v4875, %v4879
      %vm4881 = vweird.f32 %v4843
      %vm4882 = vweird.f32 %v4875
      %vm4883 = vmor %vm4881, %vm4882
      %v4884 = vsel %vm4883, %v4875, %v4880
      %v4885 = vrsqrt.pop %v4844
      %v4886 = vmul.f32 %v4885, %v4844
      %v4887 = vmul.f32 %v4886, %v4885
      %v4888 = vmul.f32 0.5, %v4887
      %v4889 = vsub.f32 1.5, %v4888
      %v4890 = vmul.f32 %v4885, %v4889
      %vm4891 = vweird.f32 %v4844
      %vm4892 = vweird.f32 %v4885
      %vm4893 = vmor %vm4891, %vm4892
      %v4894 = vsel %vm4893, %v4885, %v4890
      %v4895 = vrsqrt.pop %v4845
      %v4896 = vmul.f32 %v4895, %v4845
      %v4897 = vmul.f32 %v4896, %v4895
      %v4898 = vmul.f32 0.5, %v4897
      %v4899 = vsub.f32 1.5, %v4898
      %v4900 = vmul.f32 %v4895, %v4899
      %vm4901 = vweird.f32 %v4845
      %vm4902 = vweird.f32 %v4895
      %vm4903 = vmor %vm4901, %vm4902
      %v4904 = vsel %vm4903, %v4895, %v4900
      %v4905 = vrsqrt.pop %v4846
      %v4906 = vmul.f32 %v4905, %v4846
      %v4907 = vmul.f32 %v4906, %v4905
      %v4908 = vmul.f32 0.5, %v4907
      %v4909 = vsub.f32 1.5, %v4908
      %v4910 = vmul.f32 %v4905, %v4909
      %vm4911 = vweird.f32 %v4846
      %vm4912 = vweird.f32 %v4905
      %vm4913 = vmor %vm4911, %vm4912
      %v4914 = vsel %vm4913, %v4905, %v4910
      %v4915 = vrsqrt.pop %v4847
      %v4916 = vmul.f32 %v4915, %v4847
      %v4917 = vmul.f32 %v4916, %v4915
      %v4918 = vmul.f32 0.5, %v4917
      %v4919 = vsub.f32 1.5, %v4918
      %v4920 = vmul.f32 %v4915, %v4919
      %vm4921 = vweird.f32 %v4847
      %vm4922 = vweird.f32 %v4915
      %vm4923 = vmor %vm4921, %vm4922
      %v4924 = vsel %vm4923, %v4915, %v4920
      %v4925 = vrsqrt.pop %v4848
      %v4926 = vmul.f32 %v4925, %v4848
      %v4927 = vmul.f32 %v4926, %v4925
      %v4928 = vmul.f32 0.5, %v4927
      %v4929 = vsub.f32 1.5, %v4928
      %v4930 = vmul.f32 %v4925, %v4929
      %vm4931 = vweird.f32 %v4848
      %vm4932 = vweird.f32 %v4925
      %vm4933 = vmor %vm4931, %vm4932
      %v4934 = vsel %vm4933, %v4925, %v4930
      %v4935 = vrsqrt.pop %v4849
      %v4936 = vmul.f32 %v4935, %v4849
      %v4937 = vmul.f32 %v4936, %v4935
      %v4938 = vmul.f32 0.5, %v4937
      %v4939 = vsub.f32 1.5, %v4938
      %v4940 = vmul.f32 %v4935, %v4939
      %vm4941 = vweird.f32 %v4849
      %vm4942 = vweird.f32 %v4935
      %vm4943 = vmor %vm4941, %vm4942
      %v4944 = vsel %vm4943, %v4935, %v4940
      %v4945 = vrsqrt.pop %v4850
      %v4946 = vmul.f32 %v4945, %v4850
      %v4947 = vmul.f32 %v4946, %v4945
      %v4948 = vmul.f32 0.5, %v4947
      %v4949 = vsub.f32 1.5, %v4948
      %v4950 = vmul.f32 %v4945, %v4949
      %vm4951 = vweird.f32 %v4850
      %vm4952 = vweird.f32 %v4945
      %vm4953 = vmor %vm4951, %vm4952
      %v4954 = vsel %vm4953, %v4945, %v4950
      %v4955 = vrsqrt.pop %v4851
      %v4956 = vmul.f32 %v4955, %v4851
      %v4957 = vmul.f32 %v4956, %v4955
      %v4958 = vmul.f32 0.5, %v4957
      %v4959 = vsub.f32 1.5, %v4958
      %v4960 = vmul.f32 %v4955, %v4959
      %vm4961 = vweird.f32 %v4851
      %vm4962 = vweird.f32 %v4955
      %vm4963 = vmor %vm4961, %vm4962
      %v4964 = vsel %vm4963, %v4955, %v4960
      %v4965 = vrsqrt.pop %v4852
      %v4966 = vmul.f32 %v4965, %v4852
      %v4967 = vmul.f32 %v4966, %v4965
      %v4968 = vmul.f32 0.5, %v4967
      %v4969 = vsub.f32 1.5, %v4968
      %v4970 = vmul.f32 %v4965, %v4969
      %vm4971 = vweird.f32 %v4852
      %vm4972 = vweird.f32 %v4965
      %vm4973 = vmor %vm4971, %vm4972
      %v4974 = vsel %vm4973, %v4965, %v4970
      %v4975 = vrsqrt.pop %v4853
      %v4976 = vmul.f32 %v4975, %v4853
      %v4977 = vmul.f32 %v4976, %v4975
      %v4978 = vmul.f32 0.5, %v4977
      %v4979 = vsub.f32 1.5, %v4978
      %v4980 = vmul.f32 %v4975, %v4979
      %vm4981 = vweird.f32 %v4853
      %vm4982 = vweird.f32 %v4975
      %vm4983 = vmor %vm4981, %vm4982
      %v4984 = vsel %vm4983, %v4975, %v4980
      %v4985 = vrsqrt.pop %v4854
      %v4986 = vmul.f32 %v4985, %v4854
      %v4987 = vmul.f32 %v4986, %v4985
      %v4988 = vmul.f32 0.5, %v4987
      %v4989 = vsub.f32 1.5, %v4988
      %v4990 = vmul.f32 %v4985, %v4989
      %vm4991 = vweird.f32 %v4854
      %vm4992 = vweird.f32 %v4985
      %vm4993 = vmor %vm4991, %vm4992
      %v4994 = vsel %vm4993, %v4985, %v4990
      %v4995 = vrsqrt.pop %v4855
      %v4996 = vmul.f32 %v4995, %v4855
      %v4997 = vmul.f32 %v4996, %v4995
      %v4998 = vmul.f32 0.5, %v4997
      %v4999 = vsub.f32 1.5, %v4998
      %v5000 = vmul.f32 %v4995, %v4999
      %vm5001 = vweird.f32 %v4855
      %vm5002 = vweird.f32 %v4995
      %vm5003 = vmor %vm5001, %vm5002
      %v5004 = vsel %vm5003, %v4995, %v5000
      %v5005 = vrsqrt.pop %v4856
      %v5006 = vmul.f32 %v5005, %v4856
      %v5007 = vmul.f32 %v5006, %v5005
      %v5008 = vmul.f32 0.5, %v5007
      %v5009 = vsub.f32 1.5, %v5008
      %v5010 = vmul.f32 %v5005, %v5009
      %vm5011 = vweird.f32 %v4856
      %vm5012 = vweird.f32 %v5005
      %vm5013 = vmor %vm5011, %vm5012
      %v5014 = vsel %vm5013, %v5005, %v5010
      %v5015 = vrsqrt.pop %v4857
      %v5016 = vmul.f32 %v5015, %v4857
      %v5017 = vmul.f32 %v5016, %v5015
      %v5018 = vmul.f32 0.5, %v5017
      %v5019 = vsub.f32 1.5, %v5018
      %v5020 = vmul.f32 %v5015, %v5019
      %vm5021 = vweird.f32 %v4857
      %vm5022 = vweird.f32 %v5015
      %vm5023 = vmor %vm5021, %vm5022
      %v5024 = vsel %vm5023, %v5015, %v5020
      %v5025 = vrsqrt.pop %v4858
      %v5026 = vmul.f32 %v5025, %v4858
      %v5027 = vmul.f32 %v5026, %v5025
      %v5028 = vmul.f32 0.5, %v5027
      %v5029 = vsub.f32 1.5, %v5028
      %v5030 = vmul.f32 %v5025, %v5029
      %vm5031 = vweird.f32 %v4858
      %vm5032 = vweird.f32 %v5025
      %vm5033 = vmor %vm5031, %vm5032
      %v5034 = vsel %vm5033, %v5025, %v5030
      %v5035 = vrsqrt.pop %v4859
      %v5036 = vmul.f32 %v5035, %v4859
      %v5037 = vmul.f32 %v5036, %v5035
      %v5038 = vmul.f32 0.5, %v5037
      %v5039 = vsub.f32 1.5, %v5038
      %v5040 = vmul.f32 %v5035, %v5039
      %vm5041 = vweird.f32 %v4859
      %vm5042 = vweird.f32 %v5035
      %vm5043 = vmor %vm5041, %vm5042
      %v5044 = vsel %vm5043, %v5035, %v5040
      %v5045 = vrsqrt.pop %v4860
      %v5046 = vmul.f32 %v5045, %v4860
      %v5047 = vmul.f32 %v5046, %v5045
      %v5048 = vmul.f32 0.5, %v5047
      %v5049 = vsub.f32 1.5, %v5048
      %v5050 = vmul.f32 %v5045, %v5049
      %vm5051 = vweird.f32 %v4860
      %vm5052 = vweird.f32 %v5045
      %vm5053 = vmor %vm5051, %vm5052
      %v5054 = vsel %vm5053, %v5045, %v5050
      %v5055 = vrsqrt.pop %v4861
      %v5056 = vmul.f32 %v5055, %v4861
      %v5057 = vmul.f32 %v5056, %v5055
      %v5058 = vmul.f32 0.5, %v5057
      %v5059 = vsub.f32 1.5, %v5058
      %v5060 = vmul.f32 %v5055, %v5059
      %vm5061 = vweird.f32 %v4861
      %vm5062 = vweird.f32 %v5055
      %vm5063 = vmor %vm5061, %vm5062
      %v5064 = vsel %vm5063, %v5055, %v5060
      %v5065 = vrsqrt.pop %v4862
      %v5066 = vmul.f32 %v5065, %v4862
      %v5067 = vmul.f32 %v5066, %v5065
      %v5068 = vmul.f32 0.5, %v5067
      %v5069 = vsub.f32 1.5, %v5068
      %v5070 = vmul.f32 %v5065, %v5069
      %vm5071 = vweird.f32 %v4862
      %vm5072 = vweird.f32 %v5065
      %vm5073 = vmor %vm5071, %vm5072
      %v5074 = vsel %vm5073, %v5065, %v5070
      %v5075 = vrsqrt.pop %v4863
      %v5076 = vmul.f32 %v5075, %v4863
      %v5077 = vmul.f32 %v5076, %v5075
      %v5078 = vmul.f32 0.5, %v5077
      %v5079 = vsub.f32 1.5, %v5078
      %v5080 = vmul.f32 %v5075, %v5079
      %vm5081 = vweird.f32 %v4863
      %vm5082 = vweird.f32 %v5075
      %vm5083 = vmor %vm5081, %vm5082
      %v5084 = vsel %vm5083, %v5075, %v5080
      %v5085 = vrsqrt.pop %v4864
      %v5086 = vmul.f32 %v5085, %v4864
      %v5087 = vmul.f32 %v5086, %v5085
      %v5088 = vmul.f32 0.5, %v5087
      %v5089 = vsub.f32 1.5, %v5088
      %v5090 = vmul.f32 %v5085, %v5089
      %vm5091 = vweird.f32 %v4864
      %vm5092 = vweird.f32 %v5085
      %vm5093 = vmor %vm5091, %vm5092
      %v5094 = vsel %vm5093, %v5085, %v5090
      %v5095 = vrsqrt.pop %v4865
      %v5096 = vmul.f32 %v5095, %v4865
      %v5097 = vmul.f32 %v5096, %v5095
      %v5098 = vmul.f32 0.5, %v5097
      %v5099 = vsub.f32 1.5, %v5098
      %v5100 = vmul.f32 %v5095, %v5099
      %vm5101 = vweird.f32 %v4865
      %vm5102 = vweird.f32 %v5095
      %vm5103 = vmor %vm5101, %vm5102
      %v5104 = vsel %vm5103, %v5095, %v5100
      %v5105 = vrsqrt.pop %v4866
      %v5106 = vmul.f32 %v5105, %v4866
      %v5107 = vmul.f32 %v5106, %v5105
      %v5108 = vmul.f32 0.5, %v5107
      %v5109 = vsub.f32 1.5, %v5108
      %v5110 = vmul.f32 %v5105, %v5109
      %vm5111 = vweird.f32 %v4866
      %vm5112 = vweird.f32 %v5105
      %vm5113 = vmor %vm5111, %vm5112
      %v5114 = vsel %vm5113, %v5105, %v5110
      %v5115 = vrsqrt.pop %v4867
      %v5116 = vmul.f32 %v5115, %v4867
      %v5117 = vmul.f32 %v5116, %v5115
      %v5118 = vmul.f32 0.5, %v5117
      %v5119 = vsub.f32 1.5, %v5118
      %v5120 = vmul.f32 %v5115, %v5119
      %vm5121 = vweird.f32 %v4867
      %vm5122 = vweird.f32 %v5115
      %vm5123 = vmor %vm5121, %vm5122
      %v5124 = vsel %vm5123, %v5115, %v5120
      %v5125 = vrsqrt.pop %v4868
      %v5126 = vmul.f32 %v5125, %v4868
      %v5127 = vmul.f32 %v5126, %v5125
      %v5128 = vmul.f32 0.5, %v5127
      %v5129 = vsub.f32 1.5, %v5128
      %v5130 = vmul.f32 %v5125, %v5129
      %vm5131 = vweird.f32 %v4868
      %vm5132 = vweird.f32 %v5125
      %vm5133 = vmor %vm5131, %vm5132
      %v5134 = vsel %vm5133, %v5125, %v5130
      %v5135 = vrsqrt.pop %v4869
      %v5136 = vmul.f32 %v5135, %v4869
      %v5137 = vmul.f32 %v5136, %v5135
      %v5138 = vmul.f32 0.5, %v5137
      %v5139 = vsub.f32 1.5, %v5138
      %v5140 = vmul.f32 %v5135, %v5139
      %vm5141 = vweird.f32 %v4869
      %vm5142 = vweird.f32 %v5135
      %vm5143 = vmor %vm5141, %vm5142
      %v5144 = vsel %vm5143, %v5135, %v5140
      %v5145 = vrsqrt.pop %v4870
      %v5146 = vmul.f32 %v5145, %v4870
      %v5147 = vmul.f32 %v5146, %v5145
      %v5148 = vmul.f32 0.5, %v5147
      %v5149 = vsub.f32 1.5, %v5148
      %v5150 = vmul.f32 %v5145, %v5149
      %vm5151 = vweird.f32 %v4870
      %vm5152 = vweird.f32 %v5145
      %vm5153 = vmor %vm5151, %vm5152
      %v5154 = vsel %vm5153, %v5145, %v5150
      %v5155 = vrsqrt.pop %v4871
      %v5156 = vmul.f32 %v5155, %v4871
      %v5157 = vmul.f32 %v5156, %v5155
      %v5158 = vmul.f32 0.5, %v5157
      %v5159 = vsub.f32 1.5, %v5158
      %v5160 = vmul.f32 %v5155, %v5159
      %vm5161 = vweird.f32 %v4871
      %vm5162 = vweird.f32 %v5155
      %vm5163 = vmor %vm5161, %vm5162
      %v5164 = vsel %vm5163, %v5155, %v5160
      %v5165 = vrsqrt.pop %v4872
      %v5166 = vmul.f32 %v5165, %v4872
      %v5167 = vmul.f32 %v5166, %v5165
      %v5168 = vmul.f32 0.5, %v5167
      %v5169 = vsub.f32 1.5, %v5168
      %v5170 = vmul.f32 %v5165, %v5169
      %vm5171 = vweird.f32 %v4872
      %vm5172 = vweird.f32 %v5165
      %vm5173 = vmor %vm5171, %vm5172
      %v5174 = vsel %vm5173, %v5165, %v5170
      %v5175 = vrsqrt.pop %v4873
      %v5176 = vmul.f32 %v5175, %v4873
      %v5177 = vmul.f32 %v5176, %v5175
      %v5178 = vmul.f32 0.5, %v5177
      %v5179 = vsub.f32 1.5, %v5178
      %v5180 = vmul.f32 %v5175, %v5179
      %vm5181 = vweird.f32 %v4873
      %vm5182 = vweird.f32 %v5175
      %vm5183 = vmor %vm5181, %vm5182
      %v5184 = vsel %vm5183, %v5175, %v5180
      %v5185 = vrsqrt.pop %v4874
      %v5186 = vmul.f32 %v5185, %v4874
      %v5187 = vmul.f32 %v5186, %v5185
      %v5188 = vmul.f32 0.5, %v5187
      %v5189 = vsub.f32 1.5, %v5188
      %v5190 = vmul.f32 %v5185, %v5189
      %vm5191 = vweird.f32 %v4874
      %vm5192 = vweird.f32 %v5185
      %vm5193 = vmor %vm5191, %vm5192
      %v5194 = vsel %vm5193, %v5185, %v5190
      %v5195 = vmul.f32 %v4651, %v4884
      %v5196 = vmul.f32 %v4652, %v4894
      %v5197 = vmul.f32 %v4653, %v4904
      %v5198 = vmul.f32 %v4654, %v4914
      %v5199 = vmul.f32 %v4655, %v4924
      %v5200 = vmul.f32 %v4656, %v4934
      %v5201 = vmul.f32 %v4657, %v4944
      %v5202 = vmul.f32 %v4658, %v4954
      %v5203 = vmul.f32 %v4659, %v4964
      %v5204 = vmul.f32 %v4660, %v4974
      %v5205 = vmul.f32 %v4661, %v4984
      %v5206 = vmul.f32 %v4662, %v4994
      %v5207 = vmul.f32 %v4663, %v5004
      %v5208 = vmul.f32 %v4664, %v5014
      %v5209 = vmul.f32 %v4665, %v5024
      %v5210 = vmul.f32 %v4666, %v5034
      %v5211 = vmul.f32 %v4667, %v5044
      %v5212 = vmul.f32 %v4668, %v5054
      %v5213 = vmul.f32 %v4669, %v5064
      %v5214 = vmul.f32 %v4670, %v5074
      %v5215 = vmul.f32 %v4671, %v5084
      %v5216 = vmul.f32 %v4672, %v5094
      %v5217 = vmul.f32 %v4673, %v5104
      %v5218 = vmul.f32 %v4674, %v5114
      %v5219 = vmul.f32 %v4675, %v5124
      %v5220 = vmul.f32 %v4676, %v5134
      %v5221 = vmul.f32 %v4677, %v5144
      %v5222 = vmul.f32 %v4678, %v5154
      %v5223 = vmul.f32 %v4679, %v5164
      %v5224 = vmul.f32 %v4680, %v5174
      %v5225 = vmul.f32 %v4681, %v5184
      %v5226 = vmul.f32 %v4682, %v5194
      %5227 = vst.msk [vmem:[%s344] sm:$0xff] %vm1235, %v5195
      %5228 = vst.msk [vmem:[%s344 + $0x8] sm:$0xff] %vm1235, %v5196
      %5229 = vst.msk [vmem:[%s344 + $0x10] sm:$0xff] %vm1235, %v5199
      %5230 = vst.msk [vmem:[%s344 + $0x18] sm:$0xff] %vm1235, %v5200
      %5231 = vst.msk [vmem:[%s344 + $0x20] sm:$0xff] %vm1235, %v5203
      %5232 = vst.msk [vmem:[%s344 + $0x28] sm:$0xff] %vm1235, %v5204
      %5233 = vst.msk [vmem:[%s344 + $0x30] sm:$0xff] %vm1235, %v5207
      %5234 = vst.msk [vmem:[%s344 + $0x38] sm:$0xff] %vm1235, %v5208
      %5235 = vst.msk [vmem:[%s344 + $0x40] sm:$0xff] %vm1235, %v5211
      %5236 = vst.msk [vmem:[%s344 + $0x48] sm:$0xff] %vm1235, %v5212
      %5237 = vst.msk [vmem:[%s344 + $0x50] sm:$0xff] %vm1235, %v5215
      %5238 = vst.msk [vmem:[%s344 + $0x58] sm:$0xff] %vm1235, %v5216
      %5239 = vst.msk [vmem:[%s344 + $0x60] sm:$0xff] %vm1235, %v5219
      %5240 = vst.msk [vmem:[%s344 + $0x68] sm:$0xff] %vm1235, %v5220
      %5241 = vst.msk [vmem:[%s344 + $0x70] sm:$0xff] %vm1235, %v5223
      %5242 = vst.msk [vmem:[%s344 + $0x78] sm:$0xff] %vm1235, %v5224
      %v5243 = vpack.c.bf16 %v5196, %v5195
      %v5244 = vpack.c.bf16 %v5198, %v5197
      %v5245 = vpack.c.bf16 %v5200, %v5199
      %v5246 = vpack.c.bf16 %v5202, %v5201
      %v5247 = vpack.c.bf16 %v5204, %v5203
      %v5248 = vpack.c.bf16 %v5206, %v5205
      %v5249 = vpack.c.bf16 %v5208, %v5207
      %v5250 = vpack.c.bf16 %v5210, %v5209
      %v5251 = vpack.c.bf16 %v5212, %v5211
      %v5252 = vpack.c.bf16 %v5214, %v5213
      %v5253 = vpack.c.bf16 %v5216, %v5215
      %v5254 = vpack.c.bf16 %v5218, %v5217
      %v5255 = vpack.c.bf16 %v5220, %v5219
      %v5256 = vpack.c.bf16 %v5222, %v5221
      %v5257 = vpack.c.bf16 %v5224, %v5223
      %v5258 = vpack.c.bf16 %v5226, %v5225
      %v5259 = vld [vmem:[%s5] sm:$0xf]
      %v5260 = vld [vmem:[%s5 + $0x4] sm:$0xf]
      %v5261 = vld [vmem:[%s6] sm:$0x1]
      %v5263 = vperm.slane %v5261, 0
      %v5267 = vunpack.c.l.b16 %v5259
      %v5268 = vunpack.c.l.b16 %v5260
      %v5269 = vpack.c.b16 %v5268, %v5267
      %v5272 = vsel %vm1235, %v5243, 0
      %v5275 = vsel %vm1235, %v5244, 0
      %v5278 = vsel %vm1235, %v5245, 0
      %v5281 = vsel %vm1235, %v5246, 0
      %v5284 = vsel %vm1235, %v5247, 0
      %v5287 = vsel %vm1235, %v5248, 0
      %v5290 = vsel %vm1235, %v5249, 0
      %v5293 = vsel %vm1235, %v5250, 0
      %v5296 = vsel %vm1235, %v5251, 0
      %v5299 = vsel %vm1235, %v5252, 0
      %v5302 = vsel %vm1235, %v5253, 0
      %v5305 = vsel %vm1235, %v5254, 0
      %v5308 = vsel %vm1235, %v5255, 0
      %v5311 = vsel %vm1235, %v5256, 0
      %v5314 = vsel %vm1235, %v5257, 0
      %v5317 = vsel %vm1235, %v5258, 0
      %5319 = vmatpush.bf16.msra.mxu0 0
      %5320 = vmatpush.bf16.msra.mxu0 0
      %5321 = vmatpush.bf16.msra.mxu0 0
      %5322 = vmatpush.bf16.msra.mxu0 0
      %5323 = vmatpush.bf16.msra.mxu0 0
      %5324 = vmatpush.bf16.msra.mxu0 0
      %5325 = vmatpush.bf16.msra.mxu0 0
      %5326 = vmatpush.bf16.msra.mxu0 %v5269
      %5327 = vmatmul.bf16.gmra.mxu0 %v5272
      %v5328 = vpop.f32.mrf.mxu0
      %v5329 = vadd.f32 %v5263, %v5328
      %v5330 = vpop.f32.mrf.mxu0
      %v5331 = vadd.f32 %v5263, %v5330
      %5332 = vmatmul.bf16.gmra.mxu0 %v5275
      %v5333 = vpop.f32.mrf.mxu0
      %v5334 = vpop.f32.mrf.mxu0
      %5335 = vmatmul.bf16.gmra.mxu0 %v5278
      %v5336 = vpop.f32.mrf.mxu0
      %v5337 = vadd.f32 %v5263, %v5336
      %v5338 = vpop.f32.mrf.mxu0
      %v5339 = vadd.f32 %v5263, %v5338
      %5340 = vmatmul.bf16.gmra.mxu0 %v5281
      %v5341 = vpop.f32.mrf.mxu0
      %v5342 = vpop.f32.mrf.mxu0
      %5343 = vmatmul.bf16.gmra.mxu0 %v5284
      %v5344 = vpop.f32.mrf.mxu0
      %v5345 = vadd.f32 %v5263, %v5344
      %v5346 = vpop.f32.mrf.mxu0
      %v5347 = vadd.f32 %v5263, %v5346
      %5348 = vmatmul.bf16.gmra.mxu0 %v5287
      %v5349 = vpop.f32.mrf.mxu0
      %v5350 = vpop.f32.mrf.mxu0
      %5351 = vmatmul.bf16.gmra.mxu0 %v5290
      %v5352 = vpop.f32.mrf.mxu0
      %v5353 = vadd.f32 %v5263, %v5352
      %v5354 = vpop.f32.mrf.mxu0
      %v5355 = vadd.f32 %v5263, %v5354
      %5356 = vmatmul.bf16.gmra.mxu0 %v5293
      %v5357 = vpop.f32.mrf.mxu0
      %v5358 = vpop.f32.mrf.mxu0
      %5359 = vmatmul.bf16.gmra.mxu0 %v5296
      %v5360 = vpop.f32.mrf.mxu0
      %v5361 = vadd.f32 %v5263, %v5360
      %v5362 = vpop.f32.mrf.mxu0
      %v5363 = vadd.f32 %v5263, %v5362
      %5364 = vmatmul.bf16.gmra.mxu0 %v5299
      %v5365 = vpop.f32.mrf.mxu0
      %v5366 = vpop.f32.mrf.mxu0
      %5367 = vmatmul.bf16.gmra.mxu0 %v5302
      %v5368 = vpop.f32.mrf.mxu0
      %v5369 = vadd.f32 %v5263, %v5368
      %v5370 = vpop.f32.mrf.mxu0
      %v5371 = vadd.f32 %v5263, %v5370
      %5372 = vmatmul.bf16.gmra.mxu0 %v5305
      %v5373 = vpop.f32.mrf.mxu0
      %v5374 = vpop.f32.mrf.mxu0
      %5375 = vmatmul.bf16.gmra.mxu0 %v5308
      %v5376 = vpop.f32.mrf.mxu0
      %v5377 = vadd.f32 %v5263, %v5376
      %v5378 = vpop.f32.mrf.mxu0
      %v5379 = vadd.f32 %v5263, %v5378
      %5380 = vmatmul.bf16.gmra.mxu0 %v5311
      %v5381 = vpop.f32.mrf.mxu0
      %v5382 = vpop.f32.mrf.mxu0
      %5383 = vmatmul.bf16.gmra.mxu0 %v5314
      %v5384 = vpop.f32.mrf.mxu0
      %v5385 = vadd.f32 %v5263, %v5384
      %v5386 = vpop.f32.mrf.mxu0
      %v5387 = vadd.f32 %v5263, %v5386
      %5388 = vmatmul.bf16.gmra.mxu0 %v5317
      %v5389 = vpop.f32.mrf.mxu0
      %v5390 = vpop.f32.mrf.mxu0
      %5391 = vdwg.mxu0
      %vm5392 = vcmask 23552
      %5393 = vst.msk [vmem:[%s355] sm:$0xff] %vm5392, %v5329
      %5394 = vst.msk [vmem:[%s355 + $0x8] sm:$0xff] %vm5392, %v5331
      %5395 = vst.msk [vmem:[%s355 + $0x10] sm:$0xff] %vm5392, %v5337
      %5396 = vst.msk [vmem:[%s355 + $0x18] sm:$0xff] %vm5392, %v5339
      %5397 = vst.msk [vmem:[%s355 + $0x20] sm:$0xff] %vm5392, %v5345
      %5398 = vst.msk [vmem:[%s355 + $0x28] sm:$0xff] %vm5392, %v5347
      %5399 = vst.msk [vmem:[%s355 + $0x30] sm:$0xff] %vm5392, %v5353
      %5400 = vst.msk [vmem:[%s355 + $0x38] sm:$0xff] %vm5392, %v5355
      %5401 = vst.msk [vmem:[%s355 + $0x40] sm:$0xff] %vm5392, %v5361
      %5402 = vst.msk [vmem:[%s355 + $0x48] sm:$0xff] %vm5392, %v5363
      %5403 = vst.msk [vmem:[%s355 + $0x50] sm:$0xff] %vm5392, %v5369
      %5404 = vst.msk [vmem:[%s355 + $0x58] sm:$0xff] %vm5392, %v5371
      %5405 = vst.msk [vmem:[%s355 + $0x60] sm:$0xff] %vm5392, %v5377
      %5406 = vst.msk [vmem:[%s355 + $0x68] sm:$0xff] %vm5392, %v5379
      %5407 = vst.msk [vmem:[%s355 + $0x70] sm:$0xff] %vm5392, %v5385
      %5408 = vst.msk [vmem:[%s355 + $0x78] sm:$0xff] %vm5392, %v5387
      %s5409 = smul.u32 8, %s25
      %p5410 = scmp.lt.s32.totalorder %s24, 1
      %s5411 = scalar_select %p5410, %s24, 1
      %p5412 = scmp.lt.s32.totalorder %s5409, 15
      %s5413 = scalar_select %p5412, %s5409, 15
      %s5414 = smul.addr %s5413, 2
      %s5415 = smul.addr %s5411, 32
      %s5416 = sadd.s32 %s5414, %s5415
      %s5417 = smul.addr %s5416, 8
      %s5418 = scalar_lea.vmem %s7, %s5417
      %s5419 = smul.u32 8, %s25
      %p5420 = scmp.lt.s32.totalorder %s24, 1
      %s5421 = scalar_select %p5420, %s24, 1
      %p5422 = scmp.lt.s32.totalorder %s5419, 15
      %s5423 = scalar_select %p5422, %s5419, 15
      %s5424 = smul.addr %s5423, 2
      %s5425 = smul.addr %s5421, 32
      %s5426 = sadd.s32 %s5424, %s5425
      %s5427 = smul.addr %s5426, 8
      %s5428 = scalar_lea.vmem %s8, %s5427
      // Predicated region
      $region49: #{gen_block_forward.1} parent=47 // pred_check
        %p5429 = pneg %p204
      $region50: #{gen_block_forward.1} parent=47 // pred_check_branch
        %5431 = sbr.rel (%p5429) target = $region52
      $region51: #{gen_block_forward.1} parent=47 // pred_region
        %s5432 = smul.u32 8, %s25
      $region52: #{gen_block_forward.1} parent=47 // pred_fallthru
        _
      // Predicated region
      $region53: #{gen_block_forward.1} parent=47 // pred_check
        %p5433 = pneg %p232
      $region54: #{gen_block_forward.1} parent=47 // pred_check_branch
        %5435 = sbr.rel (%p5433) target = $region56
      $region55: #{gen_block_forward.1} parent=47 // pred_region
        %s5436 = smul.u32 8, %s25
      $region56: #{gen_block_forward.1} parent=47 // pred_fallthru
        _
    $region48: #{gen_block_forward.1} parent=5 // pred_fallthru
      _
    %p5437 = scmp.le.s32.totalorder 2, %s15
    // Predicated region
    $region57: #{gen_block_forward.1} parent=5 // pred_check
      %p5438 = pneg %p5437
    $region58: #{gen_block_forward.1} parent=5 // pred_check_branch
      %5440 = sbr.rel (%p5438) target = $region60
    $region59: #{gen_block_forward.1} parent=5 // pred_region
      %s5441 = ssub.s32 %s15, 2
      // Predicated region
      $region61: #{gen_block_forward.1} parent=59 // pred_check
        %p5442 = pneg %p210
      $region62: #{gen_block_forward.1} parent=59 // pred_check_branch
        %5444 = sbr.rel (%p5442) target = $region64
      $region63: #{gen_block_forward.1} parent=59 // pred_region
        %s5445 = smul.u32 8, %s27
        %p5446 = scmp.lt.s32.totalorder %s26, 1
        %s5447 = scalar_select %p5446, %s26, 1
        %p5448 = scmp.lt.s32.totalorder %s5445, 15
        %s5449 = scalar_select %p5448, %s5445, 15
        %s5450 = smul.addr %s5449, 2
        %s5451 = smul.addr %s5447, 32
        %s5452 = sadd.s32 %s5450, %s5451
        %s5453 = smul.addr %s5452, 8
        %s5454 = scalar_lea.vmem %s7, %s5453
      $region64: #{gen_block_forward.1} parent=59 // pred_fallthru
        _
      // Predicated region
      $region65: #{gen_block_forward.1} parent=59 // pred_check
        %p5455 = pneg %p238
      $region66: #{gen_block_forward.1} parent=59 // pred_check_branch
        %5457 = sbr.rel (%p5455) target = $region68
      $region67: #{gen_block_forward.1} parent=59 // pred_region
        %s5458 = smul.u32 8, %s27
        %p5459 = scmp.lt.s32.totalorder %s26, 1
        %s5460 = scalar_select %p5459, %s26, 1
        %p5461 = scmp.lt.s32.totalorder %s5458, 15
        %s5462 = scalar_select %p5461, %s5458, 15
        %s5463 = smul.addr %s5462, 2
        %s5464 = smul.addr %s5460, 32
        %s5465 = sadd.s32 %s5463, %s5464
        %s5466 = smul.addr %s5465, 8
        %s5467 = scalar_lea.vmem %s8, %s5466
      $region68: #{gen_block_forward.1} parent=59 // pred_fallthru
        _
    $region60: #{gen_block_forward.1} parent=5 // pred_fallthru
      _
  $region6: #{gen_block_forward.1} parent=0 // loop_footer
    %s19 = sadd.s32 1, %s15
  $region7: #{gen_block_forward.1} parent=0 // loop_footer_branch
    %14 = sbr.rel target = $region3
  $region8: #{gen_block_forward.1} parent=0 // loop_exit
    _

</llo_original>
